<compile_context>
chip_gen: v7x
topology: tpu7x:2x2x1
jax: 0.10.0
libtpu: 0.0.40
codegen_flags: <defaults>
</compile_context>

<pallas_src>
import math
from functools import partial

import jax
import jax.numpy as jnp
from jax import lax
from jax.experimental import pallas as pl
from jax.experimental.pallas import tpu as pltpu


_INV_SQRT2 = 1.0 / math.sqrt(2.0)
_VMEM_LIMIT = 64 * 1024 * 1024  # explicit scoped-VMEM cap (fits v5e/v6e/v7x budgets)


def _gelu_exact(x):
    # ESM exact (erf) GELU
    return 0.5 * x * (1.0 + lax.erf(x * _INV_SQRT2))


def _round_up(x, m):
    return ((x + m - 1) // m) * m


def _pick_tile(dim, cap, aligns):
    """Largest tile <= cap that is a multiple of one of `aligns` and divides `dim`.
    Falls back to the full dim (full-extent blocks are always legal)."""
    if dim <= cap:
        return dim
    for a in aligns:
        t = (cap // a) * a
        while t >= a:
            if dim % t == 0:
                return t
            t -= a
    return dim


def _cp(*semantics):
    return pltpu.CompilerParams(dimension_semantics=semantics,
                                vmem_limit_bytes=_VMEM_LIMIT)


# --------------------------- tiled matmul kernels ----------------------------

def _mm_kernel(a_ref, b_ref, o_ref, acc_ref, *, act):
    @pl.when(pl.program_id(2) == 0)
    def _():
        acc_ref[...] = jnp.zeros_like(acc_ref)

    acc_ref[...] += jnp.dot(a_ref[...].astype(jnp.bfloat16), b_ref[...],
                            preferred_element_type=jnp.float32)

    @pl.when(pl.program_id(2) == pl.num_programs(2) - 1)
    def _():
        r = acc_ref[...]
        if act is not None:
            r = act(r)
        o_ref[...] = r.astype(o_ref.dtype)


def _mm_bias_kernel(a_ref, b_ref, bias_ref, o_ref, acc_ref, *, act):
    @pl.when(pl.program_id(2) == 0)
    def _():
        acc_ref[...] = jnp.zeros_like(acc_ref)

    acc_ref[...] += jnp.dot(a_ref[...].astype(jnp.bfloat16), b_ref[...],
                            preferred_element_type=jnp.float32)

    @pl.when(pl.program_id(2) == pl.num_programs(2) - 1)
    def _():
        r = acc_ref[...] + bias_ref[...]
        if act is not None:
            r = act(r)
        o_ref[...] = r.astype(o_ref.dtype)


def matmul(a, b, bias=None, act=None, out_dtype=jnp.float32):
    """Tiled matmul on the MXU: bf16 operands, f32 VMEM accumulator, optional bias/act.
    N/K tiles prefer 256-multiples (v6e/v7x 256x256 MXU), 128 fallback (v5e)."""
    M, K = a.shape
    N = b.shape[1]
    tm = _pick_tile(M, 256, (8,))
    tn = _pick_tile(N, 512, (256, 128))
    tk = _pick_tile(K, 512, (256, 128))
    grid = (M // tm, N // tn, K // tk)

    in_specs = [
        pl.BlockSpec((tm, tk), lambda i, j, k: (i, k)),
        pl.BlockSpec((tk, tn), lambda i, j, k: (k, j)),
    ]
    args = [a, b]
    if bias is not None:
        in_specs.append(pl.BlockSpec((1, tn), lambda i, j, k: (0, j)))
        args.append(bias)
        kernel = partial(_mm_bias_kernel, act=act)
    else:
        kernel = partial(_mm_kernel, act=act)

    return pl.pallas_call(
        kernel,
        grid=grid,
        in_specs=in_specs,
        out_specs=pl.BlockSpec((tm, tn), lambda i, j, k: (i, j)),
        out_shape=jax.ShapeDtypeStruct((M, N), out_dtype),
        scratch_shapes=[pltpu.VMEM((tm, tn), jnp.float32)],
        compiler_params=_cp("parallel", "parallel", "arbitrary"),
    )(*args)


# -------------------- fused LayerNorm -> matmul kernels ----------------------
# LN of the row tile is computed once at j == 0 into a VMEM scratch and reused for all
# output-column tiles j (the x block stays resident across j; j is marked "arbitrary").

def _ln_prologue(x_ref, g_ref, b_ref, xn_ref, eps):
    x = x_ref[...].astype(jnp.float32)
    mu = jnp.mean(x, axis=-1, keepdims=True)
    xc = x - mu
    var = jnp.mean(xc * xc, axis=-1, keepdims=True)
    xn = xc * lax.rsqrt(var + eps) * g_ref[...] + b_ref[...]
    xn_ref[...] = xn.astype(jnp.bfloat16)


def _ln_mm_kernel(x_ref, g_ref, b_ref, w_ref, o_ref, xn_ref, *, eps, act):
    @pl.when(pl.program_id(1) == 0)
    def _():
        _ln_prologue(x_ref, g_ref, b_ref, xn_ref, eps)
    h = jnp.dot(xn_ref[...], w_ref[...], preferred_element_type=jnp.float32)
    if act is not None:
        h = act(h)
    o_ref[...] = h.astype(o_ref.dtype)


def _ln_mm_bias_kernel(x_ref, g_ref, b_ref, w_ref, bias_ref, o_ref, xn_ref, *, eps, act):
    @pl.when(pl.program_id(1) == 0)
    def _():
        _ln_prologue(x_ref, g_ref, b_ref, xn_ref, eps)
    h = jnp.dot(xn_ref[...], w_ref[...], preferred_element_type=jnp.float32) + bias_ref[...]
    if act is not None:
        h = act(h)
    o_ref[...] = h.astype(o_ref.dtype)


def _ln_mm_split_kernel(x_ref, g_ref, b_ref, wx_ref, wz_ref, ox_ref, oz_ref, xn_ref, *, eps):
    @pl.when(pl.program_id(1) == 0)
    def _():
        _ln_prologue(x_ref, g_ref, b_ref, xn_ref, eps)
    xn = xn_ref[...]
    ox_ref[...] = jnp.dot(xn, wx_ref[...],
                          preferred_element_type=jnp.float32).astype(ox_ref.dtype)
    oz_ref[...] = jnp.dot(xn, wz_ref[...],
                          preferred_element_type=jnp.float32).astype(oz_ref.dtype)


def ln_matmul(x, gamma, beta, w, *, eps, bias=None, act=None, out_dtype=jnp.float32):
    """LayerNorm(x) @ w (+bias, +act); the contraction axis is kept whole per tile."""
    M, K = x.shape
    N = w.shape[1]
    tm = _pick_tile(M, 256, (8,))
    tn = _pick_tile(N, 512, (256, 128))
    grid = (M // tm, N // tn)

    in_specs = [
        pl.BlockSpec((tm, K), lambda i, j: (i, 0)),
        pl.BlockSpec((1, K), lambda i, j: (0, 0)),
        pl.BlockSpec((1, K), lambda i, j: (0, 0)),
        pl.BlockSpec((K, tn), lambda i, j: (0, j)),
    ]
    args = [x, gamma, beta, w]
    if bias is not None:
        in_specs.append(pl.BlockSpec((1, tn), lambda i, j: (0, j)))
        args.append(bias)
        kernel = partial(_ln_mm_bias_kernel, eps=eps, act=act)
    else:
        kernel = partial(_ln_mm_kernel, eps=eps, act=act)

    return pl.pallas_call(
        kernel,
        grid=grid,
        in_specs=in_specs,
        out_specs=pl.BlockSpec((tm, tn), lambda i, j: (i, j)),
        out_shape=jax.ShapeDtypeStruct((M, N), out_dtype),
        scratch_shapes=[pltpu.VMEM((tm, K), jnp.bfloat16)],
        compiler_params=_cp("parallel", "arbitrary"),
    )(*args)


def ln_matmul_split(x, gamma, beta, wx, wz, *, eps, out_dtype=jnp.bfloat16):
    """LayerNorm(x) @ [wx | wz] emitted as two separate lane-dense outputs (x / z gates)."""
    M, K = x.shape
    N = wx.shape[1]
    tm = _pick_tile(M, 256, (8,))
    tn = _pick_tile(N, 512, (256, 128))
    grid = (M // tm, N // tn)

    b_x = pl.BlockSpec((tm, K), lambda i, j: (i, 0))
    b_v = pl.BlockSpec((1, K), lambda i, j: (0, 0))
    b_w = pl.BlockSpec((K, tn), lambda i, j: (0, j))
    b_o = pl.BlockSpec((tm, tn), lambda i, j: (i, j))

    return pl.pallas_call(
        partial(_ln_mm_split_kernel, eps=eps),
        grid=grid,
        in_specs=[b_x, b_v, b_v, b_w, b_w],
        out_specs=(b_o, b_o),
        out_shape=(jax.ShapeDtypeStruct((M, N), out_dtype),
                   jax.ShapeDtypeStruct((M, N), out_dtype)),
        scratch_shapes=[pltpu.VMEM((tm, K), jnp.bfloat16)],
        compiler_params=_cp("parallel", "arbitrary"),
    )(x, gamma, beta, wx, wz)


# ----------------------- depthwise causal conv + SiLU ------------------------
# The conv runs over the *leading* axis (the Mamba scan axis), so the K taps are
# whole-tile shifted reads; the causal left-pad is built in VMEM (no HBM pad pass).

def _conv1d_silu_kernel(x_ref, w_ref, b_ref, o_ref, *, K):
    x = x_ref[...].astype(jnp.float32)                 # (Bt, tl, d)
    Bt, tl, d = x.shape
    xp = jnp.concatenate([jnp.zeros((K - 1, tl, d), jnp.float32), x], axis=0)
    acc = jnp.zeros((Bt, tl, d), jnp.float32) + b_ref[...]
    for k in range(K):
        acc = acc + xp[k:k + Bt] * w_ref[k]            # w_ref[k]: (1, d) broadcasts
    o_ref[...] = (acc * jax.nn.sigmoid(acc)).astype(o_ref.dtype)   # SiLU


def conv1d_silu(x, conv_w, conv_b):
    Bt, Lb, d = x.shape
    K = conv_w.shape[0]
    tl = _pick_tile(Lb, 128, (8,))
    return pl.pallas_call(
        partial(_conv1d_silu_kernel, K=K),
        grid=(Lb // tl,),
        in_specs=[
            pl.BlockSpec((Bt, tl, d), lambda i: (0, i, 0)),
            pl.BlockSpec((K, 1, d), lambda i: (0, 0, 0)),
            pl.BlockSpec((1, 1, d), lambda i: (0, 0, 0)),
        ],
        out_specs=pl.BlockSpec((Bt, tl, d), lambda i: (0, i, 0)),
        out_shape=jax.ShapeDtypeStruct((Bt, Lb, d), jnp.bfloat16),
        compiler_params=_cp("parallel"),
    )(x, conv_w, conv_b)


# ------------------------------ selective scan -------------------------------
# Blocks are (Bt, tl, .) with the scan axis (Bt = true batch after the layout fold)
# leading: per-step loads/stores are whole-tile `ref[t]` accesses, and the pseudo-batch
# (tl >= 8 rows) fills sublanes.  dA / dBu are precomputed as whole slabs into VMEM
# scratch; only the h recurrence is serial; the C-readout is a batched reduce after it.

def _selective_scan_kernel(u_ref, dbl_ref, z_ref, A_ref, D_ref, o_ref,
                           dA_ref, dBu_ref, hs_ref, *, d_pad, n):
    Bt, tl, _ = u_ref.shape
    u = u_ref[...].astype(jnp.float32)                 # (Bt, tl, d)
    z = z_ref[...].astype(jnp.float32)
    dbl = dbl_ref[...]                                 # (Bt, tl, d + 2n) f32
    delta = jax.nn.softplus(dbl[:, :, :d_pad])         # delta_bias folded in upstream
    Brow = dbl[:, :, d_pad:d_pad + n]                  # (Bt, tl, n)
    Crow = dbl[:, :, d_pad + n:d_pad + 2 * n]          # (Bt, tl, n)
    A = A_ref[...]                                     # (n, d) = A^T (precomputed)

    # Whole-slab precompute, off the serial h-chain.
    dA_ref[...] = jnp.exp(delta[:, :, None, :] * A[None, None, :, :])       # (Bt, tl, n, d)
    dBu_ref[...] = (delta * u)[:, :, None, :] * Brow[:, :, :, None]         # (Bt, tl, n, d)

    # True recurrence: only h carries a loop dependence; states go to scratch.
    def body(t, h):
        h = dA_ref[t] * h + dBu_ref[t]
        hs_ref[t] = h
        return h

    lax.fori_loop(0, Bt, body, jnp.zeros((tl, n, d_pad), jnp.float32),
                  unroll=Bt <= 16)

    # Batched readout (off the chain): y[b,t,d] = sum_n h[b,t,n,d] * C[b,t,n]
    y = jnp.sum(hs_ref[...] * Crow[:, :, :, None], axis=2)                  # (Bt, tl, d)
    y = y + u * D_ref[...]                             # skip connection
    y = y * (z * jax.nn.sigmoid(z))                    # SiLU(z) gate
    o_ref[...] = y.astype(o_ref.dtype)                 # single lane-dense store


def selective_scan(u, dbl, z, A_t, D, cfg):
    Bt, Lb, d = u.shape
    n = cfg["d_state"]
    tl = _pick_tile(Lb, 16, (8,))      # keep scratch (3 * Bt*tl*n*d f32) within VMEM
    grid = (Lb // tl,)
    return pl.pallas_call(
        partial(_selective_scan_kernel, d_pad=d, n=n),
        grid=grid,
        in_specs=[
            pl.BlockSpec((Bt, tl, d), lambda i: (0, i, 0)),            # u (conv output)
            pl.BlockSpec((Bt, tl, d + 2 * n), lambda i: (0, i, 0)),    # [delta|B|C]
            pl.BlockSpec((Bt, tl, d), lambda i: (0, i, 0)),            # z (gate)
            pl.BlockSpec((n, d), lambda i: (0, 0)),                    # A^T
            pl.BlockSpec((1, 1, d), lambda i: (0, 0, 0)),              # D
        ],
        out_specs=pl.BlockSpec((Bt, tl, d), lambda i: (0, i, 0)),
        out_shape=jax.ShapeDtypeStruct((Bt, Lb, d), jnp.bfloat16),
        scratch_shapes=[
            pltpu.VMEM((Bt, tl, n, d), jnp.float32),
            pltpu.VMEM((Bt, tl, n, d), jnp.float32),
            pltpu.VMEM((Bt, tl, n, d), jnp.float32),
        ],
        compiler_params=_cp("parallel"),
    )(u, dbl, z, A_t, D)


# ------------------------------ model forward --------------------------------

def mamba_block_forward(p, hidden, residual, cfg):
    # Block (fused_add_norm=False, residual_in_fp32=False)
    residual = hidden if residual is None else hidden + residual   # (Bt, Lb, E) f32
    Bt, Lb, E = residual.shape
    M = Bt * Lb
    d_pad, n = cfg["d_pad"], cfg["d_state"]

    # Fused LayerNorm + in_proj (no bias), x and z emitted as separate lane-dense outputs.
    x_part, z_part = ln_matmul_split(residual.reshape(M, E), p["norm_w"], p["norm_b"],
                                     p["w_in_x"], p["w_in_z"], eps=1e-5)
    x_part = x_part.reshape(Bt, Lb, d_pad)
    z_part = z_part.reshape(Bt, Lb, d_pad)

    # Causal depthwise conv + SiLU (pad handled in VMEM).
    u = conv1d_silu(x_part, p["conv_w"], p["conv_b"])              # (Bt, Lb, d_pad) bf16

    # x_proj with dt_proj pre-folded (done once at param prep): one matmul emits
    # [delta_pre | B | C]; delta_bias folded into the bias, softplus done in the scan.
    dbl = matmul(u.reshape(M, d_pad), p["w_xdbc"], bias=p["b_xdbc"],
                 out_dtype=jnp.float32).reshape(Bt, Lb, d_pad + 2 * n)

    y = selective_scan(u, dbl, z_part, p["A_t"], p["D"], cfg)      # (Bt, Lb, d_pad) bf16

    out = matmul(y.reshape(M, d_pad), p["w_out"], out_dtype=jnp.float32)   # no bias
    return out.reshape(Bt, Lb, E), residual


def esm2_forward(params, tokens, cfg):
    B, L = tokens.shape
    E, V = cfg["embed_dim"], cfg["alphabet_size"]
    padding_mask = tokens == cfg["padding_idx"]
    x = params["embed_tokens"][tokens]                 # (B, L, E); embed_scale = 1

    # token dropout rescaling (ESM2)
    mask_tok = tokens == cfg["mask_idx"]
    x = jnp.where(mask_tok[..., None], 0.0, x)
    mask_ratio_train = 0.15 * 0.8
    src_lengths = jnp.maximum(jnp.sum(~padding_mask, axis=-1), 1)  # guard all-pad rows
    mask_ratio_observed = jnp.sum(mask_tok, axis=-1).astype(x.dtype) / src_lengths
    x = x * (1 - mask_ratio_train) / (1 - mask_ratio_observed)[:, None, None]
    x = x * (1 - padding_mask[..., None].astype(x.dtype))

    # Reference transposes to (L, B, E); we keep (B, L, E) and scan over axis 0 instead
    # (identical math, no HBM transpose passes).
    res = None
    for lp in params["layers"]:
        x, res = mamba_block_forward(lp, x, res, cfg)

    # emb_layer_norm_after + RobertaLMHead as two fused LN+matmuls (dense store: the
    # decoder was padded to a multiple of 128 output lanes at param prep).
    x2d = x.reshape(B * L, E)
    h = ln_matmul(x2d, params["ln_after_w"], params["ln_after_b"],
                  params["lm_dense_w"], eps=1e-12, bias=params["lm_dense_b"],
                  act=_gelu_exact, out_dtype=jnp.bfloat16)
    logits = ln_matmul(h, params["lm_ln_w"], params["lm_ln_b"], params["dec_w"],
                       eps=1e-12, bias=params["dec_b"], out_dtype=jnp.float32)[:, :V]
    return {"logits": logits.reshape(B, L, V), "representations": {}}


# --------------------------- parameter preparation ---------------------------

def prepare_params(params, cfg):
    """One-time derived-weight precompute: dt_proj folded into x_proj (HIGHEST precision),
    A^T = -exp(A_log)^T, bf16 weight copies, d_inner padded to a 128 multiple (zero pads,
    provably inert), decoder padded to 128 output lanes."""
    d_inner, n, dt_rank = cfg["d_inner"], cfg["d_state"], cfg["dt_rank"]
    d_pad, Vp = cfg["d_pad"], cfg["vocab_pad"]

    def pad_last(w, new):
        pads = [(0, 0)] * w.ndim
        pads[-1] = (0, new - w.shape[-1])
        return jnp.pad(w, pads)

    layers = []
    for p in params["layers"]:
        w_in = p["in_proj_w"]                                               # (2*d_inner, E)
        w_in_x = pad_last(w_in[:d_inner].T, d_pad).astype(jnp.bfloat16)     # (E, d_pad)
        w_in_z = pad_last(w_in[d_inner:].T, d_pad).astype(jnp.bfloat16)
        conv_w = pad_last(p["conv_w"].T[:, None, :], d_pad)                 # (K, 1, d_pad)
        conv_b = pad_last(p["conv_b"][None, None, :], d_pad)                # (1, 1, d_pad)

        # dt_proj o x_proj[:dt_rank] folded exactly (HIGHEST precision, f32).
        w_delta = jnp.dot(p["dt_proj_w"], p["x_proj_w"][:dt_rank],
                          precision=lax.Precision.HIGHEST)                  # (d_inner, d_inner)
        w_dbc = jnp.concatenate(
            [jnp.pad(w_delta, ((0, d_pad - d_inner), (0, 0))),
             p["x_proj_w"][dt_rank:]], axis=0)                              # (d_pad+2n, d_inner)
        w_xdbc = pad_last(w_dbc, d_pad).T.astype(jnp.bfloat16)              # (d_pad, d_pad+2n)
        b_xdbc = jnp.concatenate(
            [jnp.pad(p["dt_proj_b"], (0, d_pad - d_inner)),
             jnp.zeros((2 * n,), jnp.float32)])[None, :]                    # (1, d_pad+2n)

        A_t = pad_last((-jnp.exp(p["A_log"])).T, d_pad)                     # (n, d_pad)
        D_pad = pad_last(p["D"][None, None, :], d_pad)                      # (1, 1, d_pad)
        w_out = jnp.pad(p["out_proj_w"].T,
                        ((0, d_pad - d_inner), (0, 0))).astype(jnp.bfloat16)  # (d_pad, E)

        layers.append(dict(
            norm_w=p["norm_w"][None, :].astype(jnp.float32),
            norm_b=p["norm_b"][None, :].astype(jnp.float32),
            w_in_x=w_in_x, w_in_z=w_in_z,
            conv_w=conv_w, conv_b=conv_b,
            w_xdbc=w_xdbc, b_xdbc=b_xdbc,
            A_t=A_t, D=D_pad, w_out=w_out,
        ))

    return dict(
        embed_tokens=params["embed_tokens"],
        layers=layers,
        ln_after_w=params["ln_after_w"][None, :],
        ln_after_b=params["ln_after_b"][None, :],
        lm_dense_w=params["lm_dense_w"].T.astype(jnp.bfloat16),
        lm_dense_b=params["lm_dense_b"][None, :],
        lm_ln_w=params["lm_ln_w"][None, :],
        lm_ln_b=params["lm_ln_b"][None, :],
        dec_w=pad_last(params["embed_tokens"].T, Vp).astype(jnp.bfloat16),  # (E, Vp)
        dec_b=pad_last(params["lm_bias"][None, :], Vp),                     # (1, Vp)
    )


# ------------------------------- init & main ---------------------------------

def init_params(key, cfg):
    E, V = cfg["embed_dim"], cfg["alphabet_size"]
    d_inner, n, dt_rank, K = cfg["d_inner"], cfg["d_state"], cfg["dt_rank"], cfg["d_conv"]
    keys = iter(jax.random.split(key, 64))

    def nrm(shape, scale):
        return (scale * jax.random.normal(next(keys), shape)).astype(jnp.float32)

    embed = nrm((V, E), 0.1).at[cfg["padding_idx"]].set(0.0)   # nn.Embedding padding row = 0

    layers = []
    for _ in range(cfg["num_layers"]):
        layers.append(dict(
            norm_w=jnp.ones((E,), jnp.float32) + nrm((E,), 0.02),
            norm_b=nrm((E,), 0.02),
            in_proj_w=nrm((2 * d_inner, E), E ** -0.5),
            conv_w=nrm((d_inner, K), K ** -0.5),
            conv_b=nrm((d_inner,), 0.02),
            x_proj_w=nrm((dt_rank + 2 * n, d_inner), d_inner ** -0.5),
            dt_proj_w=nrm((d_inner, dt_rank), dt_rank ** -0.5),
            dt_proj_b=jnp.log(jnp.expm1(
                0.001 + 0.099 * jax.random.uniform(next(keys), (d_inner,)))).astype(jnp.float32),
            A_log=jnp.log(jnp.broadcast_to(
                jnp.arange(1, n + 1, dtype=jnp.float32), (d_inner, n))),
            D=jnp.ones((d_inner,), jnp.float32),
            out_proj_w=nrm((E, d_inner), d_inner ** -0.5),
        ))

    return dict(
        embed_tokens=embed,
        layers=layers,
        ln_after_w=jnp.ones((E,), jnp.float32) + nrm((E,), 0.02),
        ln_after_b=nrm((E,), 0.02),
        lm_dense_w=nrm((E, E), E ** -0.5),
        lm_dense_b=nrm((E,), 0.02),
        lm_ln_w=jnp.ones((E,), jnp.float32) + nrm((E,), 0.02),
        lm_ln_b=nrm((E,), 0.02),
        lm_bias=nrm((V,), 0.02),
    )


if __name__ == "__main__":
    cfg = dict(
        num_layers=2,
        embed_dim=32,
        alphabet_size=33,      # ESM-1b alphabet
        padding_idx=1,
        mask_idx=32,
        cls_idx=0,
        eos_idx=2,
        d_inner=64,            # expand=2
        d_state=16,
        d_conv=4,
        dt_rank=math.ceil(32 / 16),
    )
    cfg["d_pad"] = _round_up(cfg["d_inner"], 128)      # lane-dense conv/scan tiles
    cfg["vocab_pad"] = _round_up(cfg["alphabet_size"], 128)

    key = jax.random.PRNGKey(0)
    k_params, k_tok = jax.random.split(key)
    raw_params = init_params(k_params, cfg)
    params = prepare_params(raw_params, cfg)           # one-time derived-weight precompute

    B, L = 2, 8
    tokens = jax.random.randint(k_tok, (B, L), 4, 24)
    tokens = tokens.at[:, 0].set(cfg["cls_idx"])
    tokens = tokens.at[0, L - 1].set(cfg["eos_idx"])
    tokens = tokens.at[0, 3].set(cfg["mask_idx"])          # one <mask> token
    tokens = tokens.at[1, L - 2].set(cfg["eos_idx"])
    tokens = tokens.at[1, L - 1].set(cfg["padding_idx"])   # one padding position
    tokens = tokens.astype(jnp.int32)

    fwd = jax.jit(lambda p, t: esm2_forward(p, t, cfg))
    result = fwd(params, tokens)
    logits = jax.block_until_ready(result["logits"])

    assert logits.shape == (B, L, cfg["alphabet_size"])
    assert bool(jnp.all(jnp.isfinite(logits)))
    print("KERNEL_OK")
</pallas_src>

<mosaic_0001>
module attributes {stable_mosaic.version = 11 : i64} {
  func.func @_conv1d_silu_kernel(%arg0: i32, %arg1: memref<2x8x128xbf16, #tpu.memory_space<vmem>>, %arg2: memref<4x1x128xf32, #tpu.memory_space<vmem>>, %arg3: memref<1x1x128xf32, #tpu.memory_space<vmem>>, %arg4: memref<2x8x128xbf16, #tpu.memory_space<vmem>>) attributes {dimension_semantics = [#tpu.dimension_semantics<parallel>], iteration_bounds = array<i64: 1>, scalar_prefetch = 0 : i64, scratch_operands = 0 : i64, tpu.core_type = #tpu.core_type<tc>, window_params = [{transform_indices = @transform_0, window_bounds = array<i64: 2, 8, 128>}, {pipeline_mode = #tpu.pipeline_mode<synchronous>, transform_indices = @transform_1, window_bounds = array<i64: 4, 1, 128>}, {pipeline_mode = #tpu.pipeline_mode<synchronous>, transform_indices = @transform_2, window_bounds = array<i64: 1, 1, 128>}, {transform_indices = @transform_3, window_bounds = array<i64: 2, 8, 128>}]} {
    %c0 = arith.constant 0 : index
    %c0_0 = arith.constant 0 : index
    %c0_1 = arith.constant 0 : index
    %0 = vector.load %arg1[%c0, %c0_0, %c0_1] : memref<2x8x128xbf16, #tpu.memory_space<vmem>>, vector<2x8x128xbf16>
    %1 = arith.extf %0 : vector<2x8x128xbf16> to vector<2x8x128xf32>
    %cst = arith.constant 0.000000e+00 : f32
    %2 = vector.broadcast %cst : f32 to vector<3x8x128xf32>
    %3 = tpu.concatenate %2, %1 in 0 : vector<3x8x128xf32>, vector<2x8x128xf32> -> vector<5x8x128xf32>
    %cst_2 = arith.constant 0.000000e+00 : f32
    %4 = vector.broadcast %cst_2 : f32 to vector<2x8x128xf32>
    %c0_3 = arith.constant 0 : index
    %c0_4 = arith.constant 0 : index
    %c0_5 = arith.constant 0 : index
    %5 = vector.load %arg3[%c0_3, %c0_4, %c0_5] : memref<1x1x128xf32, #tpu.memory_space<vmem>>, vector<1x1x128xf32>
    %6 = vector.broadcast %5 : vector<1x1x128xf32> to vector<2x8x128xf32>
    %7 = arith.addf %4, %6 : vector<2x8x128xf32>
    %8 = vector.extract_strided_slice %3 {offsets = [0, 0, 0], sizes = [2, 8, 128], strides = [1, 1, 1]} : vector<5x8x128xf32> to vector<2x8x128xf32>
    %c0_6 = arith.constant 0 : index
    %c0_7 = arith.constant 0 : index
    %c0_8 = arith.constant 0 : index
    %9 = vector.load %arg2[%c0_6, %c0_7, %c0_8] : memref<4x1x128xf32, #tpu.memory_space<vmem>>, vector<1x1x128xf32>
    %10 = vector.shape_cast %9 : vector<1x1x128xf32> to vector<1x128xf32>
    %11 = vector.shape_cast %10 : vector<1x128xf32> to vector<1x1x128xf32>
    %12 = vector.broadcast %11 : vector<1x1x128xf32> to vector<2x8x128xf32>
    %13 = arith.mulf %8, %12 : vector<2x8x128xf32>
    %14 = arith.addf %7, %13 : vector<2x8x128xf32>
    %15 = vector.extract_strided_slice %3 {offsets = [1, 0, 0], sizes = [2, 8, 128], strides = [1, 1, 1]} : vector<5x8x128xf32> to vector<2x8x128xf32>
    %c1 = arith.constant 1 : index
    %c0_9 = arith.constant 0 : index
    %c0_10 = arith.constant 0 : index
    %16 = vector.load %arg2[%c1, %c0_9, %c0_10] : memref<4x1x128xf32, #tpu.memory_space<vmem>>, vector<1x1x128xf32>
    %17 = vector.shape_cast %16 : vector<1x1x128xf32> to vector<1x128xf32>
    %18 = vector.shape_cast %17 : vector<1x128xf32> to vector<1x1x128xf32>
    %19 = vector.broadcast %18 : vector<1x1x128xf32> to vector<2x8x128xf32>
    %20 = arith.mulf %15, %19 : vector<2x8x128xf32>
    %21 = arith.addf %14, %20 : vector<2x8x128xf32>
    %22 = vector.extract_strided_slice %3 {offsets = [2, 0, 0], sizes = [2, 8, 128], strides = [1, 1, 1]} : vector<5x8x128xf32> to vector<2x8x128xf32>
    %c2 = arith.constant 2 : index
    %c0_11 = arith.constant 0 : index
    %c0_12 = arith.constant 0 : index
    %23 = vector.load %arg2[%c2, %c0_11, %c0_12] : memref<4x1x128xf32, #tpu.memory_space<vmem>>, vector<1x1x128xf32>
    %24 = vector.shape_cast %23 : vector<1x1x128xf32> to vector<1x128xf32>
    %25 = vector.shape_cast %24 : vector<1x128xf32> to vector<1x1x128xf32>
    %26 = vector.broadcast %25 : vector<1x1x128xf32> to vector<2x8x128xf32>
    %27 = arith.mulf %22, %26 : vector<2x8x128xf32>
    %28 = arith.addf %21, %27 : vector<2x8x128xf32>
    %29 = vector.extract_strided_slice %3 {offsets = [3, 0, 0], sizes = [2, 8, 128], strides = [1, 1, 1]} : vector<5x8x128xf32> to vector<2x8x128xf32>
    %c3 = arith.constant 3 : index
    %c0_13 = arith.constant 0 : index
    %c0_14 = arith.constant 0 : index
    %30 = vector.load %arg2[%c3, %c0_13, %c0_14] : memref<4x1x128xf32, #tpu.memory_space<vmem>>, vector<1x1x128xf32>
    %31 = vector.shape_cast %30 : vector<1x1x128xf32> to vector<1x128xf32>
    %32 = vector.shape_cast %31 : vector<1x128xf32> to vector<1x1x128xf32>
    %33 = vector.broadcast %32 : vector<1x1x128xf32> to vector<2x8x128xf32>
    %34 = arith.mulf %29, %33 : vector<2x8x128xf32>
    %35 = arith.addf %28, %34 : vector<2x8x128xf32>
    %36 = arith.negf %35 : vector<2x8x128xf32>
    %37 = math.exp %36 : vector<2x8x128xf32>
    %cst_15 = arith.constant 1.000000e+00 : f32
    %38 = vector.broadcast %cst_15 : f32 to vector<2x8x128xf32>
    %39 = arith.addf %38, %37 : vector<2x8x128xf32>
    %40 = arith.divf %38, %39 : vector<2x8x128xf32>
    %41 = arith.mulf %35, %40 : vector<2x8x128xf32>
    %42 = arith.truncf %41 : vector<2x8x128xf32> to vector<2x8x128xbf16>
    %c0_16 = arith.constant 0 : index
    %c0_17 = arith.constant 0 : index
    %c0_18 = arith.constant 0 : index
    %43 = vector.load %arg4[%c0_16, %c0_17, %c0_18] : memref<2x8x128xbf16, #tpu.memory_space<vmem>>, vector<2x8x128xbf16>
    tpu.vector_store %arg4[%c0_16, %c0_17, %c0_18], %42 {strides = array<i32>} : memref<2x8x128xbf16, #tpu.memory_space<vmem>>, vector<2x8x128xbf16>,
    return
  }
  func.func @transform_0(%arg0: i32) -> (i32, i32, i32) {
    %c0_i32 = arith.constant 0 : i32
    %c0_i32_0 = arith.constant 0 : i32
    %c0_i32_1 = arith.constant 0 : i32
    return %c0_i32, %arg0, %c0_i32_0 : i32, i32, i32
  }
  func.func @transform_1(%arg0: i32) -> (i32, i32, i32) {
    %c0_i32 = arith.constant 0 : i32
    %c0_i32_0 = arith.constant 0 : i32
    %c0_i32_1 = arith.constant 0 : i32
    %c0_i32_2 = arith.constant 0 : i32
    return %c0_i32, %c0_i32_0, %c0_i32_1 : i32, i32, i32
  }
  func.func @transform_2(%arg0: i32) -> (i32, i32, i32) {
    %c0_i32 = arith.constant 0 : i32
    %c0_i32_0 = arith.constant 0 : i32
    %c0_i32_1 = arith.constant 0 : i32
    %c0_i32_2 = arith.constant 0 : i32
    return %c0_i32, %c0_i32_0, %c0_i32_1 : i32, i32, i32
  }
  func.func @transform_3(%arg0: i32) -> (i32, i32, i32) {
    %c0_i32 = arith.constant 0 : i32
    %c0_i32_0 = arith.constant 0 : i32
    %c0_i32_1 = arith.constant 0 : i32
    return %c0_i32, %arg0, %c0_i32_0 : i32, i32, i32
  }
}

module attributes {stable_mosaic.version = 11 : i64} {
  func.func @_mm_bias_kernel(%arg0: i32, %arg1: i32, %arg2: i32, %arg3: memref<16x128xbf16, #tpu.memory_space<vmem>>, %arg4: memref<128x160xbf16, #tpu.memory_space<vmem>>, %arg5: memref<1x160xf32, #tpu.memory_space<vmem>>, %arg6: memref<16x160xf32, #tpu.memory_space<vmem>>, %arg7: memref<16x160xf32, #tpu.memory_space<vmem>>) attributes {dimension_semantics = [#tpu.dimension_semantics<parallel>, #tpu.dimension_semantics<parallel>, #tpu.dimension_semantics<arbitrary>], iteration_bounds = array<i64: 1, 1, 1>, scalar_prefetch = 0 : i64, scratch_operands = 1 : i64, tpu.core_type = #tpu.core_type<tc>, window_params = [{transform_indices = @transform_0, window_bounds = array<i64: 16, 128>}, {transform_indices = @transform_1, window_bounds = array<i64: 128, 160>}, {transform_indices = @transform_2, window_bounds = array<i64: 1, 160>}, {transform_indices = @transform_3, window_bounds = array<i64: 16, 160>}]} {
    %c0_i32 = arith.constant 0 : i32
    %0 = arith.cmpi eq, %arg2, %c0_i32 : i32
    %1 = arith.extui %0 : i1 to i32
    %c0_i32_0 = arith.constant 0 : i32
    %2 = arith.cmpi ne, %1, %c0_i32_0 : i32
    scf.if %2 {
      %cst_10 = arith.constant 0.000000e+00 : f32
      %12 = vector.broadcast %cst_10 : f32 to vector<16x160xf32>
      %c0_11 = arith.constant 0 : index
      %c0_12 = arith.constant 0 : index
      %13 = vector.load %arg7[%c0_11, %c0_12] : memref<16x160xf32, #tpu.memory_space<vmem>>, vector<16x160xf32>
      tpu.vector_store %arg7[%c0_11, %c0_12], %12 {strides = array<i32>} : memref<16x160xf32, #tpu.memory_space<vmem>>, vector<16x160xf32>,
    } else {
    }
    %c0 = arith.constant 0 : index
    %c0_1 = arith.constant 0 : index
    %3 = vector.load %arg7[%c0, %c0_1] : memref<16x160xf32, #tpu.memory_space<vmem>>, vector<16x160xf32>
    %c0_2 = arith.constant 0 : index
    %c0_3 = arith.constant 0 : index
    %4 = vector.load %arg3[%c0_2, %c0_3] : memref<16x128xbf16, #tpu.memory_space<vmem>>, vector<16x128xbf16>
    %c0_4 = arith.constant 0 : index
    %c0_5 = arith.constant 0 : index
    %5 = vector.load %arg4[%c0_4, %c0_5] : memref<128x160xbf16, #tpu.memory_space<vmem>>, vector<128x160xbf16>
    %cst = arith.constant dense<0.000000e+00> : vector<16x160xf32>
    %6 = tpu.matmul %4, %5, %cst {dimension_numbers = #tpu.dot_dimension_numbers<[1], [0], [0], [1], [0, 0, 1, 1], [], []>} : vector<16x128xbf16>, vector<128x160xbf16>, vector<16x160xf32> -> vector<16x160xf32>
    %7 = arith.addf %3, %6 : vector<16x160xf32>
    %c0_6 = arith.constant 0 : index
    %c0_7 = arith.constant 0 : index
    %8 = vector.load %arg7[%c0_6, %c0_7] : memref<16x160xf32, #tpu.memory_space<vmem>>, vector<16x160xf32>
    tpu.vector_store %arg7[%c0_6, %c0_7], %7 {strides = array<i32>} : memref<16x160xf32, #tpu.memory_space<vmem>>, vector<16x160xf32>,
    %c0_i32_8 = arith.constant 0 : i32
    %9 = arith.cmpi eq, %arg2, %c0_i32_8 : i32
    %10 = arith.extui %9 : i1 to i32
    %c0_i32_9 = arith.constant 0 : i32
    %11 = arith.cmpi ne, %10, %c0_i32_9 : i32
    scf.if %11 {
      %c0_10 = arith.constant 0 : index
      %c0_11 = arith.constant 0 : index
      %12 = vector.load %arg7[%c0_10, %c0_11] : memref<16x160xf32, #tpu.memory_space<vmem>>, vector<16x160xf32>
      %c0_12 = arith.constant 0 : index
      %c0_13 = arith.constant 0 : index
      %13 = vector.load %arg5[%c0_12, %c0_13] : memref<1x160xf32, #tpu.memory_space<vmem>>, vector<1x160xf32>
      %14 = vector.broadcast %13 : vector<1x160xf32> to vector<16x160xf32>
      %15 = arith.addf %12, %14 : vector<16x160xf32>
      %c0_14 = arith.constant 0 : index
      %c0_15 = arith.constant 0 : index
      %16 = vector.load %arg6[%c0_14, %c0_15] : memref<16x160xf32, #tpu.memory_space<vmem>>, vector<16x160xf32>
      tpu.vector_store %arg6[%c0_14, %c0_15], %15 {strides = array<i32>} : memref<16x160xf32, #tpu.memory_space<vmem>>, vector<16x160xf32>,
    } else {
    }
    return
  }
  func.func @transform_0(%arg0: i32, %arg1: i32, %arg2: i32) -> (i32, i32) {
    %c0_i32 = arith.constant 0 : i32
    return %arg0, %arg2 : i32, i32
  }
  func.func @transform_1(%arg0: i32, %arg1: i32, %arg2: i32) -> (i32, i32) {
    %c0_i32 = arith.constant 0 : i32
    return %arg2, %arg1 : i32, i32
  }
  func.func @transform_2(%arg0: i32, %arg1: i32, %arg2: i32) -> (i32, i32) {
    %c0_i32 = arith.constant 0 : i32
    %c0_i32_0 = arith.constant 0 : i32
    return %c0_i32, %arg1 : i32, i32
  }
  func.func @transform_3(%arg0: i32, %arg1: i32, %arg2: i32) -> (i32, i32) {
    %c0_i32 = arith.constant 0 : i32
    return %arg0, %arg1 : i32, i32
  }
}

module attributes {stable_mosaic.version = 11 : i64} {
  func.func @_ln_mm_split_kernel(%arg0: i32, %arg1: i32, %arg2: memref<16x32xf32, #tpu.memory_space<vmem>>, %arg3: memref<1x32xf32, #tpu.memory_space<vmem>>, %arg4: memref<1x32xf32, #tpu.memory_space<vmem>>, %arg5: memref<32x128xbf16, #tpu.memory_space<vmem>>, %arg6: memref<32x128xbf16, #tpu.memory_space<vmem>>, %arg7: memref<16x128xbf16, #tpu.memory_space<vmem>>, %arg8: memref<16x128xbf16, #tpu.memory_space<vmem>>, %arg9: memref<16x32xbf16, #tpu.memory_space<vmem>>) attributes {dimension_semantics = [#tpu.dimension_semantics<parallel>, #tpu.dimension_semantics<arbitrary>], iteration_bounds = array<i64: 1, 1>, scalar_prefetch = 0 : i64, scratch_operands = 1 : i64, tpu.core_type = #tpu.core_type<tc>, window_params = [{transform_indices = @transform_0, window_bounds = array<i64: 16, 32>}, {pipeline_mode = #tpu.pipeline_mode<synchronous>, transform_indices = @transform_1, window_bounds = array<i64: 1, 32>}, {pipeline_mode = #tpu.pipeline_mode<synchronous>, transform_indices = @transform_2, window_bounds = array<i64: 1, 32>}, {transform_indices = @transform_3, window_bounds = array<i64: 32, 128>}, {transform_indices = @transform_4, window_bounds = array<i64: 32, 128>}, {transform_indices = @transform_5, window_bounds = array<i64: 16, 128>}, {transform_indices = @transform_6, window_bounds = array<i64: 16, 128>}]} {
    %c0_i32 = arith.constant 0 : i32
    %0 = arith.cmpi eq, %arg1, %c0_i32 : i32
    %1 = arith.extui %0 : i1 to i32
    %c0_i32_0 = arith.constant 0 : i32
    %2 = arith.cmpi ne, %1, %c0_i32_0 : i32
    scf.if %2 {
      %c0_11 = arith.constant 0 : index
      %c0_12 = arith.constant 0 : index
      %12 = vector.load %arg2[%c0_11, %c0_12] : memref<16x32xf32, #tpu.memory_space<vmem>>, vector<16x32xf32>
      %cst_13 = arith.constant dense<0.000000e+00> : vector<16xf32>
      %13 = vector.multi_reduction <add>, %12, %cst_13 [1] : vector<16x32xf32> to vector<16xf32>
      %14 = vector.shape_cast %13 : vector<16xf32> to vector<16x1xf32>
      %cst_14 = arith.constant 3.200000e+01 : f32
      %15 = vector.broadcast %cst_14 : f32 to vector<16x1xf32>
      %16 = arith.divf %14, %15 : vector<16x1xf32>
      %17 = vector.broadcast %16 : vector<16x1xf32> to vector<16x32xf32>
      %18 = arith.subf %12, %17 : vector<16x32xf32>
      %19 = arith.mulf %18, %18 : vector<16x32xf32>
      %cst_15 = arith.constant dense<0.000000e+00> : vector<16xf32>
      %20 = vector.multi_reduction <add>, %19, %cst_15 [1] : vector<16x32xf32> to vector<16xf32>
      %21 = vector.shape_cast %20 : vector<16xf32> to vector<16x1xf32>
      %cst_16 = arith.constant 3.200000e+01 : f32
      %22 = vector.broadcast %cst_16 : f32 to vector<16x1xf32>
      %23 = arith.divf %21, %22 : vector<16x1xf32>
      %cst_17 = arith.constant 9.99999974E-6 : f32
      %24 = vector.broadcast %cst_17 : f32 to vector<16x1xf32>
      %25 = arith.addf %23, %24 : vector<16x1xf32>
      %26 = math.rsqrt %25 : vector<16x1xf32>
      %27 = vector.broadcast %26 : vector<16x1xf32> to vector<16x32xf32>
      %28 = arith.mulf %18, %27 : vector<16x32xf32>
      %c0_18 = arith.constant 0 : index
      %c0_19 = arith.constant 0 : index
      %29 = vector.load %arg3[%c0_18, %c0_19] : memref<1x32xf32, #tpu.memory_space<vmem>>, vector<1x32xf32>
      %30 = vector.broadcast %29 : vector<1x32xf32> to vector<16x32xf32>
      %31 = arith.mulf %28, %30 : vector<16x32xf32>
      %c0_20 = arith.constant 0 : index
      %c0_21 = arith.constant 0 : index
      %32 = vector.load %arg4[%c0_20, %c0_21] : memref<1x32xf32, #tpu.memory_space<vmem>>, vector<1x32xf32>
      %33 = vector.broadcast %32 : vector<1x32xf32> to vector<16x32xf32>
      %34 = arith.addf %31, %33 : vector<16x32xf32>
      %35 = arith.truncf %34 : vector<16x32xf32> to vector<16x32xbf16>
      %c0_22 = arith.constant 0 : index
      %c0_23 = arith.constant 0 : index
      %36 = vector.load %arg9[%c0_22, %c0_23] : memref<16x32xbf16, #tpu.memory_space<vmem>>, vector<16x32xbf16>
      tpu.vector_store %arg9[%c0_22, %c0_23], %35 {strides = array<i32>} : memref<16x32xbf16, #tpu.memory_space<vmem>>, vector<16x32xbf16>,
    } else {
    }
    %c0 = arith.constant 0 : index
    %c0_1 = arith.constant 0 : index
    %3 = vector.load %arg9[%c0, %c0_1] : memref<16x32xbf16, #tpu.memory_space<vmem>>, vector<16x32xbf16>
    %c0_2 = arith.constant 0 : index
    %c0_3 = arith.constant 0 : index
    %4 = vector.load %arg5[%c0_2, %c0_3] : memref<32x128xbf16, #tpu.memory_space<vmem>>, vector<32x128xbf16>
    %cst = arith.constant dense<0.000000e+00> : vector<16x128xf32>
    %5 = tpu.matmul %3, %4, %cst {dimension_numbers = #tpu.dot_dimension_numbers<[1], [0], [0], [1], [0, 0, 1, 1], [], []>} : vector<16x32xbf16>, vector<32x128xbf16>, vector<16x128xf32> -> vector<16x128xf32>
    %6 = arith.truncf %5 : vector<16x128xf32> to vector<16x128xbf16>
    %c0_4 = arith.constant 0 : index
    %c0_5 = arith.constant 0 : index
    %7 = vector.load %arg7[%c0_4, %c0_5] : memref<16x128xbf16, #tpu.memory_space<vmem>>, vector<16x128xbf16>
    tpu.vector_store %arg7[%c0_4, %c0_5], %6 {strides = array<i32>} : memref<16x128xbf16, #tpu.memory_space<vmem>>, vector<16x128xbf16>,
    %c0_6 = arith.constant 0 : index
    %c0_7 = arith.constant 0 : index
    %8 = vector.load %arg6[%c0_6, %c0_7] : memref<32x128xbf16, #tpu.memory_space<vmem>>, vector<32x128xbf16>
    %cst_8 = arith.constant dense<0.000000e+00> : vector<16x128xf32>
    %9 = tpu.matmul %3, %8, %cst_8 {dimension_numbers = #tpu.dot_dimension_numbers<[1], [0], [0], [1], [0, 0, 1, 1], [], []>} : vector<16x32xbf16>, vector<32x128xbf16>, vector<16x128xf32> -> vector<16x128xf32>
    %10 = arith.truncf %9 : vector<16x128xf32> to vector<16x128xbf16>
    %c0_9 = arith.constant 0 : index
    %c0_10 = arith.constant 0 : index
    %11 = vector.load %arg8[%c0_9, %c0_10] : memref<16x128xbf16, #tpu.memory_space<vmem>>, vector<16x128xbf16>
    tpu.vector_store %arg8[%c0_9, %c0_10], %10 {strides = array<i32>} : memref<16x128xbf16, #tpu.memory_space<vmem>>, vector<16x128xbf16>,
    return
  }
  func.func @transform_0(%arg0: i32, %arg1: i32) -> (i32, i32) {
    %c0_i32 = arith.constant 0 : i32
    %c0_i32_0 = arith.constant 0 : i32
    return %arg0, %c0_i32 : i32, i32
  }
  func.func @transform_1(%arg0: i32, %arg1: i32) -> (i32, i32) {
    %c0_i32 = arith.constant 0 : i32
    %c0_i32_0 = arith.constant 0 : i32
    %c0_i32_1 = arith.constant 0 : i32
    return %c0_i32, %c0_i32_0 : i32, i32
  }
  func.func @transform_2(%arg0: i32, %arg1: i32) -> (i32, i32) {
    %c0_i32 = arith.constant 0 : i32
    %c0_i32_0 = arith.constant 0 : i32
    %c0_i32_1 = arith.constant 0 : i32
    return %c0_i32, %c0_i32_0 : i32, i32
  }
  func.func @transform_3(%arg0: i32, %arg1: i32) -> (i32, i32) {
    %c0_i32 = arith.constant 0 : i32
    %c0_i32_0 = arith.constant 0 : i32
    return %c0_i32, %arg1 : i32, i32
  }
  func.func @transform_4(%arg0: i32, %arg1: i32) -> (i32, i32) {
    %c0_i32 = arith.constant 0 : i32
    %c0_i32_0 = arith.constant 0 : i32
    return %c0_i32, %arg1 : i32, i32
  }
  func.func @transform_5(%arg0: i32, %arg1: i32) -> (i32, i32) {
    %c0_i32 = arith.constant 0 : i32
    return %arg0, %arg1 : i32, i32
  }
  func.func @transform_6(%arg0: i32, %arg1: i32) -> (i32, i32) {
    %c0_i32 = arith.constant 0 : i32
    return %arg0, %arg1 : i32, i32
  }
}

module attributes {stable_mosaic.version = 11 : i64} {
  func.func @_selective_scan_kernel(%arg0: i32, %arg1: memref<2x8x128xbf16, #tpu.memory_space<vmem>>, %arg2: memref<2x8x160xf32, #tpu.memory_space<vmem>>, %arg3: memref<2x8x128xbf16, #tpu.memory_space<vmem>>, %arg4: memref<16x128xf32, #tpu.memory_space<vmem>>, %arg5: memref<1x1x128xf32, #tpu.memory_space<vmem>>, %arg6: memref<2x8x128xbf16, #tpu.memory_space<vmem>>, %arg7: memref<2x8x16x128xf32, #tpu.memory_space<vmem>>, %arg8: memref<2x8x16x128xf32, #tpu.memory_space<vmem>>, %arg9: memref<2x8x16x128xf32, #tpu.memory_space<vmem>>) attributes {dimension_semantics = [#tpu.dimension_semantics<parallel>], iteration_bounds = array<i64: 1>, scalar_prefetch = 0 : i64, scratch_operands = 3 : i64, tpu.core_type = #tpu.core_type<tc>, window_params = [{transform_indices = @transform_0, window_bounds = array<i64: 2, 8, 128>}, {transform_indices = @transform_1, window_bounds = array<i64: 2, 8, 160>}, {transform_indices = @transform_2, window_bounds = array<i64: 2, 8, 128>}, {pipeline_mode = #tpu.pipeline_mode<synchronous>, transform_indices = @transform_3, window_bounds = array<i64: 16, 128>}, {pipeline_mode = #tpu.pipeline_mode<synchronous>, transform_indices = @transform_4, window_bounds = array<i64: 1, 1, 128>}, {transform_indices = @transform_5, window_bounds = array<i64: 2, 8, 128>}]} {
    %c0 = arith.constant 0 : index
    %c0_0 = arith.constant 0 : index
    %c0_1 = arith.constant 0 : index
    %0 = vector.load %arg1[%c0, %c0_0, %c0_1] : memref<2x8x128xbf16, #tpu.memory_space<vmem>>, vector<2x8x128xbf16>
    %1 = arith.extf %0 : vector<2x8x128xbf16> to vector<2x8x128xf32>
    %c0_2 = arith.constant 0 : index
    %c0_3 = arith.constant 0 : index
    %c0_4 = arith.constant 0 : index
    %2 = vector.load %arg3[%c0_2, %c0_3, %c0_4] : memref<2x8x128xbf16, #tpu.memory_space<vmem>>, vector<2x8x128xbf16>
    %3 = arith.extf %2 : vector<2x8x128xbf16> to vector<2x8x128xf32>
    %c0_5 = arith.constant 0 : index
    %c0_6 = arith.constant 0 : index
    %c0_7 = arith.constant 0 : index
    %4 = vector.load %arg2[%c0_5, %c0_6, %c0_7] : memref<2x8x160xf32, #tpu.memory_space<vmem>>, vector<2x8x160xf32>
    %5 = vector.extract_strided_slice %4 {offsets = [0, 0, 0], sizes = [2, 8, 128], strides = [1, 1, 1]} : vector<2x8x160xf32> to vector<2x8x128xf32>
    %cst = arith.constant 0.000000e+00 : f32
    %6 = vector.broadcast %cst : f32 to vector<2x8x128xf32>
    %7 = arith.maximumf %5, %6 : vector<2x8x128xf32>
    %8 = vector.broadcast %cst : f32 to vector<2x8x128xf32>
    %9 = arith.subf %5, %8 : vector<2x8x128xf32>
    %10 = arith.cmpf one, %9, %9 : vector<2x8x128xf32>
    %11 = vector.broadcast %cst : f32 to vector<2x8x128xf32>
    %12 = arith.addf %5, %11 : vector<2x8x128xf32>
    %13 = math.absf %9 : vector<2x8x128xf32>
    %cst_8 = arith.constant 0.000000e+00 : f32
    %14 = vector.broadcast %cst_8 : f32 to vector<2x8x128xf32>
    %15 = arith.subf %14, %13 : vector<2x8x128xf32>
    %16 = math.exp %15 : vector<2x8x128xf32>
    %17 = math.log1p %16 : vector<2x8x128xf32>
    %18 = arith.addf %7, %17 : vector<2x8x128xf32>
    %19 = arith.select %10, %12, %18 : vector<2x8x128xi1>, vector<2x8x128xf32>
    %20 = vector.extract_strided_slice %4 {offsets = [0, 0, 128], sizes = [2, 8, 16], strides = [1, 1, 1]} : vector<2x8x160xf32> to vector<2x8x16xf32>
    %21 = vector.extract_strided_slice %4 {offsets = [0, 0, 144], sizes = [2, 8, 16], strides = [1, 1, 1]} : vector<2x8x160xf32> to vector<2x8x16xf32>
    %c0_9 = arith.constant 0 : index
    %c0_10 = arith.constant 0 : index
    %22 = vector.load %arg4[%c0_9, %c0_10] : memref<16x128xf32, #tpu.memory_space<vmem>>, vector<16x128xf32>
    %23 = vector.shape_cast %19 : vector<2x8x128xf32> to vector<2x8x1x128xf32>
    %24 = vector.shape_cast %22 : vector<16x128xf32> to vector<1x1x16x128xf32>
    %25 = vector.broadcast %23 : vector<2x8x1x128xf32> to vector<2x8x16x128xf32>
    %26 = vector.broadcast %24 : vector<1x1x16x128xf32> to vector<2x8x16x128xf32>
    %27 = arith.mulf %25, %26 : vector<2x8x16x128xf32>
    %28 = math.exp %27 : vector<2x8x16x128xf32>
    %c0_11 = arith.constant 0 : index
    %c0_12 = arith.constant 0 : index
    %c0_13 = arith.constant 0 : index
    %c0_14 = arith.constant 0 : index
    %29 = vector.load %arg7[%c0_11, %c0_12, %c0_13, %c0_14] : memref<2x8x16x128xf32, #tpu.memory_space<vmem>>, vector<2x8x16x128xf32>
    tpu.vector_store %arg7[%c0_11, %c0_12, %c0_13, %c0_14], %28 {strides = array<i32>} : memref<2x8x16x128xf32, #tpu.memory_space<vmem>>, vector<2x8x16x128xf32>,
    %30 = arith.mulf %19, %1 : vector<2x8x128xf32>
    %31 = vector.shape_cast %30 : vector<2x8x128xf32> to vector<2x8x1x128xf32>
    %32 = vector.shape_cast %20 : vector<2x8x16xf32> to vector<2x8x16x1xf32>
    %33 = vector.broadcast %31 : vector<2x8x1x128xf32> to vector<2x8x16x128xf32>
    %34 = vector.broadcast %32 : vector<2x8x16x1xf32> to vector<2x8x16x128xf32>
    %35 = arith.mulf %33, %34 : vector<2x8x16x128xf32>
    %c0_15 = arith.constant 0 : index
    %c0_16 = arith.constant 0 : index
    %c0_17 = arith.constant 0 : index
    %c0_18 = arith.constant 0 : index
    %36 = vector.load %arg8[%c0_15, %c0_16, %c0_17, %c0_18] : memref<2x8x16x128xf32, #tpu.memory_space<vmem>>, vector<2x8x16x128xf32>
    tpu.vector_store %arg8[%c0_15, %c0_16, %c0_17, %c0_18], %35 {strides = array<i32>} : memref<2x8x16x128xf32, #tpu.memory_space<vmem>>, vector<2x8x16x128xf32>,
    %cst_19 = arith.constant 0.000000e+00 : f32
    %37 = vector.broadcast %cst_19 : f32 to vector<8x16x128xf32>
    %c0_i32 = arith.constant 0 : i32
    %38 = arith.index_cast %c0_i32 : i32 to index
    %c0_20 = arith.constant 0 : index
    %c0_21 = arith.constant 0 : index
    %c0_22 = arith.constant 0 : index
    %39 = vector.load %arg7[%38, %c0_20, %c0_21, %c0_22] : memref<2x8x16x128xf32, #tpu.memory_space<vmem>>, vector<1x8x16x128xf32>
    %40 = vector.shape_cast %39 : vector<1x8x16x128xf32> to vector<8x16x128xf32>
    %41 = arith.mulf %40, %37 : vector<8x16x128xf32>
    %42 = arith.index_cast %c0_i32 : i32 to index
    %c0_23 = arith.constant 0 : index
    %c0_24 = arith.constant 0 : index
    %c0_25 = arith.constant 0 : index
    %43 = vector.load %arg8[%42, %c0_23, %c0_24, %c0_25] : memref<2x8x16x128xf32, #tpu.memory_space<vmem>>, vector<1x8x16x128xf32>
    %44 = vector.shape_cast %43 : vector<1x8x16x128xf32> to vector<8x16x128xf32>
    %45 = arith.addf %41, %44 : vector<8x16x128xf32>
    %46 = arith.index_cast %c0_i32 : i32 to index
    %c0_26 = arith.constant 0 : index
    %c0_27 = arith.constant 0 : index
    %c0_28 = arith.constant 0 : index
    %47 = vector.load %arg9[%46, %c0_26, %c0_27, %c0_28] : memref<2x8x16x128xf32, #tpu.memory_space<vmem>>, vector<1x8x16x128xf32>
    %48 = vector.shape_cast %47 : vector<1x8x16x128xf32> to vector<8x16x128xf32>
    %49 = vector.shape_cast %45 : vector<8x16x128xf32> to vector<1x8x16x128xf32>
    tpu.vector_store %arg9[%46, %c0_26, %c0_27, %c0_28], %49 {strides = array<i32>} : memref<2x8x16x128xf32, #tpu.memory_space<vmem>>, vector<1x8x16x128xf32>,
    %c1_i32 = arith.constant 1 : i32
    %50 = arith.index_cast %c1_i32 : i32 to index
    %c0_29 = arith.constant 0 : index
    %c0_30 = arith.constant 0 : index
    %c0_31 = arith.constant 0 : index
    %51 = vector.load %arg7[%50, %c0_29, %c0_30, %c0_31] : memref<2x8x16x128xf32, #tpu.memory_space<vmem>>, vector<1x8x16x128xf32>
    %52 = vector.shape_cast %51 : vector<1x8x16x128xf32> to vector<8x16x128xf32>
    %53 = arith.mulf %52, %45 : vector<8x16x128xf32>
    %54 = arith.index_cast %c1_i32 : i32 to index
    %c0_32 = arith.constant 0 : index
    %c0_33 = arith.constant 0 : index
    %c0_34 = arith.constant 0 : index
    %55 = vector.load %arg8[%54, %c0_32, %c0_33, %c0_34] : memref<2x8x16x128xf32, #tpu.memory_space<vmem>>, vector<1x8x16x128xf32>
    %56 = vector.shape_cast %55 : vector<1x8x16x128xf32> to vector<8x16x128xf32>
    %57 = arith.addf %53, %56 : vector<8x16x128xf32>
    %58 = arith.index_cast %c1_i32 : i32 to index
    %c0_35 = arith.constant 0 : index
    %c0_36 = arith.constant 0 : index
    %c0_37 = arith.constant 0 : index
    %59 = vector.load %arg9[%58, %c0_35, %c0_36, %c0_37] : memref<2x8x16x128xf32, #tpu.memory_space<vmem>>, vector<1x8x16x128xf32>
    %60 = vector.shape_cast %59 : vector<1x8x16x128xf32> to vector<8x16x128xf32>
    %61 = vector.shape_cast %57 : vector<8x16x128xf32> to vector<1x8x16x128xf32>
    tpu.vector_store %arg9[%58, %c0_35, %c0_36, %c0_37], %61 {strides = array<i32>} : memref<2x8x16x128xf32, #tpu.memory_space<vmem>>, vector<1x8x16x128xf32>,
    %c2_i32 = arith.constant 2 : i32
    %c0_38 = arith.constant 0 : index
    %c0_39 = arith.constant 0 : index
    %c0_40 = arith.constant 0 : index
    %c0_41 = arith.constant 0 : index
    %62 = vector.load %arg9[%c0_38, %c0_39, %c0_40, %c0_41] : memref<2x8x16x128xf32, #tpu.memory_space<vmem>>, vector<2x8x16x128xf32>
    %63 = vector.shape_cast %21 : vector<2x8x16xf32> to vector<2x8x16x1xf32>
    %64 = vector.broadcast %63 : vector<2x8x16x1xf32> to vector<2x8x16x128xf32>
    %65 = arith.mulf %62, %64 : vector<2x8x16x128xf32>
    %cst_42 = arith.constant dense<0.000000e+00> : vector<2x8x128xf32>
    %66 = vector.multi_reduction <add>, %65, %cst_42 [2] : vector<2x8x16x128xf32> to vector<2x8x128xf32>
    %c0_43 = arith.constant 0 : index
    %c0_44 = arith.constant 0 : index
    %c0_45 = arith.constant 0 : index
    %67 = vector.load %arg5[%c0_43, %c0_44, %c0_45] : memref<1x1x128xf32, #tpu.memory_space<vmem>>, vector<1x1x128xf32>
    %68 = vector.broadcast %67 : vector<1x1x128xf32> to vector<2x8x128xf32>
    %69 = arith.mulf %1, %68 : vector<2x8x128xf32>
    %70 = arith.addf %66, %69 : vector<2x8x128xf32>
    %71 = arith.negf %3 : vector<2x8x128xf32>
    %72 = math.exp %71 : vector<2x8x128xf32>
    %cst_46 = arith.constant 1.000000e+00 : f32
    %73 = vector.broadcast %cst_46 : f32 to vector<2x8x128xf32>
    %74 = arith.addf %73, %72 : vector<2x8x128xf32>
    %75 = arith.divf %73, %74 : vector<2x8x128xf32>
    %76 = arith.mulf %3, %75 : vector<2x8x128xf32>
    %77 = arith.mulf %70, %76 : vector<2x8x128xf32>
    %78 = arith.truncf %77 : vector<2x8x128xf32> to vector<2x8x128xbf16>
    %c0_47 = arith.constant 0 : index
    %c0_48 = arith.constant 0 : index
    %c0_49 = arith.constant 0 : index
    %79 = vector.load %arg6[%c0_47, %c0_48, %c0_49] : memref<2x8x128xbf16, #tpu.memory_space<vmem>>, vector<2x8x128xbf16>
    tpu.vector_store %arg6[%c0_47, %c0_48, %c0_49], %78 {strides = array<i32>} : memref<2x8x128xbf16, #tpu.memory_space<vmem>>, vector<2x8x128xbf16>,
    return
  }
  func.func @transform_0(%arg0: i32) -> (i32, i32, i32) {
    %c0_i32 = arith.constant 0 : i32
    %c0_i32_0 = arith.constant 0 : i32
    %c0_i32_1 = arith.constant 0 : i32
    return %c0_i32, %arg0, %c0_i32_0 : i32, i32, i32
  }
  func.func @transform_1(%arg0: i32) -> (i32, i32, i32) {
    %c0_i32 = arith.constant 0 : i32
    %c0_i32_0 = arith.constant 0 : i32
    %c0_i32_1 = arith.constant 0 : i32
    return %c0_i32, %arg0, %c0_i32_0 : i32, i32, i32
  }
  func.func @transform_2(%arg0: i32) -> (i32, i32, i32) {
    %c0_i32 = arith.constant 0 : i32
    %c0_i32_0 = arith.constant 0 : i32
    %c0_i32_1 = arith.constant 0 : i32
    return %c0_i32, %arg0, %c0_i32_0 : i32, i32, i32
  }
  func.func @transform_3(%arg0: i32) -> (i32, i32) {
    %c0_i32 = arith.constant 0 : i32
    %c0_i32_0 = arith.constant 0 : i32
    %c0_i32_1 = arith.constant 0 : i32
    return %c0_i32, %c0_i32_0 : i32, i32
  }
  func.func @transform_4(%arg0: i32) -> (i32, i32, i32) {
    %c0_i32 = arith.constant 0 : i32
    %c0_i32_0 = arith.constant 0 : i32
    %c0_i32_1 = arith.constant 0 : i32
    %c0_i32_2 = arith.constant 0 : i32
    return %c0_i32, %c0_i32_0, %c0_i32_1 : i32, i32, i32
  }
  func.func @transform_5(%arg0: i32) -> (i32, i32, i32) {
    %c0_i32 = arith.constant 0 : i32
    %c0_i32_0 = arith.constant 0 : i32
    %c0_i32_1 = arith.constant 0 : i32
    return %c0_i32, %arg0, %c0_i32_0 : i32, i32, i32
  }
}

module attributes {stable_mosaic.version = 11 : i64} {
  func.func @_mm_kernel(%arg0: i32, %arg1: i32, %arg2: i32, %arg3: memref<16x128xbf16, #tpu.memory_space<vmem>>, %arg4: memref<128x32xbf16, #tpu.memory_space<vmem>>, %arg5: memref<16x32xf32, #tpu.memory_space<vmem>>, %arg6: memref<16x32xf32, #tpu.memory_space<vmem>>) attributes {dimension_semantics = [#tpu.dimension_semantics<parallel>, #tpu.dimension_semantics<parallel>, #tpu.dimension_semantics<arbitrary>], iteration_bounds = array<i64: 1, 1, 1>, scalar_prefetch = 0 : i64, scratch_operands = 1 : i64, tpu.core_type = #tpu.core_type<tc>, window_params = [{transform_indices = @transform_0, window_bounds = array<i64: 16, 128>}, {transform_indices = @transform_1, window_bounds = array<i64: 128, 32>}, {transform_indices = @transform_2, window_bounds = array<i64: 16, 32>}]} {
    %c0_i32 = arith.constant 0 : i32
    %0 = arith.cmpi eq, %arg2, %c0_i32 : i32
    %1 = arith.extui %0 : i1 to i32
    %c0_i32_0 = arith.constant 0 : i32
    %2 = arith.cmpi ne, %1, %c0_i32_0 : i32
    scf.if %2 {
      %cst_10 = arith.constant 0.000000e+00 : f32
      %12 = vector.broadcast %cst_10 : f32 to vector<16x32xf32>
      %c0_11 = arith.constant 0 : index
      %c0_12 = arith.constant 0 : index
      %13 = vector.load %arg6[%c0_11, %c0_12] : memref<16x32xf32, #tpu.memory_space<vmem>>, vector<16x32xf32>
      tpu.vector_store %arg6[%c0_11, %c0_12], %12 {strides = array<i32>} : memref<16x32xf32, #tpu.memory_space<vmem>>, vector<16x32xf32>,
    } else {
    }
    %c0 = arith.constant 0 : index
    %c0_1 = arith.constant 0 : index
    %3 = vector.load %arg6[%c0, %c0_1] : memref<16x32xf32, #tpu.memory_space<vmem>>, vector<16x32xf32>
    %c0_2 = arith.constant 0 : index
    %c0_3 = arith.constant 0 : index
    %4 = vector.load %arg3[%c0_2, %c0_3] : memref<16x128xbf16, #tpu.memory_space<vmem>>, vector<16x128xbf16>
    %c0_4 = arith.constant 0 : index
    %c0_5 = arith.constant 0 : index
    %5 = vector.load %arg4[%c0_4, %c0_5] : memref<128x32xbf16, #tpu.memory_space<vmem>>, vector<128x32xbf16>
    %cst = arith.constant dense<0.000000e+00> : vector<16x32xf32>
    %6 = tpu.matmul %4, %5, %cst {dimension_numbers = #tpu.dot_dimension_numbers<[1], [0], [0], [1], [0, 0, 1, 1], [], []>} : vector<16x128xbf16>, vector<128x32xbf16>, vector<16x32xf32> -> vector<16x32xf32>
    %7 = arith.addf %3, %6 : vector<16x32xf32>
    %c0_6 = arith.constant 0 : index
    %c0_7 = arith.constant 0 : index
    %8 = vector.load %arg6[%c0_6, %c0_7] : memref<16x32xf32, #tpu.memory_space<vmem>>, vector<16x32xf32>
    tpu.vector_store %arg6[%c0_6, %c0_7], %7 {strides = array<i32>} : memref<16x32xf32, #tpu.memory_space<vmem>>, vector<16x32xf32>,
    %c0_i32_8 = arith.constant 0 : i32
    %9 = arith.cmpi eq, %arg2, %c0_i32_8 : i32
    %10 = arith.extui %9 : i1 to i32
    %c0_i32_9 = arith.constant 0 : i32
    %11 = arith.cmpi ne, %10, %c0_i32_9 : i32
    scf.if %11 {
      %c0_10 = arith.constant 0 : index
      %c0_11 = arith.constant 0 : index
      %12 = vector.load %arg6[%c0_10, %c0_11] : memref<16x32xf32, #tpu.memory_space<vmem>>, vector<16x32xf32>
      %c0_12 = arith.constant 0 : index
      %c0_13 = arith.constant 0 : index
      %13 = vector.load %arg5[%c0_12, %c0_13] : memref<16x32xf32, #tpu.memory_space<vmem>>, vector<16x32xf32>
      tpu.vector_store %arg5[%c0_12, %c0_13], %12 {strides = array<i32>} : memref<16x32xf32, #tpu.memory_space<vmem>>, vector<16x32xf32>,
    } else {
    }
    return
  }
  func.func @transform_0(%arg0: i32, %arg1: i32, %arg2: i32) -> (i32, i32) {
    %c0_i32 = arith.constant 0 : i32
    return %arg0, %arg2 : i32, i32
  }
  func.func @transform_1(%arg0: i32, %arg1: i32, %arg2: i32) -> (i32, i32) {
    %c0_i32 = arith.constant 0 : i32
    return %arg2, %arg1 : i32, i32
  }
  func.func @transform_2(%arg0: i32, %arg1: i32, %arg2: i32) -> (i32, i32) {
    %c0_i32 = arith.constant 0 : i32
    return %arg0, %arg1 : i32, i32
  }
}

module attributes {stable_mosaic.version = 11 : i64} {
  func.func @_ln_mm_bias_kernel(%arg0: i32, %arg1: i32, %arg2: memref<16x32xf32, #tpu.memory_space<vmem>>, %arg3: memref<1x32xf32, #tpu.memory_space<vmem>>, %arg4: memref<1x32xf32, #tpu.memory_space<vmem>>, %arg5: memref<32x32xbf16, #tpu.memory_space<vmem>>, %arg6: memref<1x32xf32, #tpu.memory_space<vmem>>, %arg7: memref<16x32xbf16, #tpu.memory_space<vmem>>, %arg8: memref<16x32xbf16, #tpu.memory_space<vmem>>) attributes {dimension_semantics = [#tpu.dimension_semantics<parallel>, #tpu.dimension_semantics<arbitrary>], iteration_bounds = array<i64: 1, 1>, scalar_prefetch = 0 : i64, scratch_operands = 1 : i64, tpu.core_type = #tpu.core_type<tc>, window_params = [{transform_indices = @transform_0, window_bounds = array<i64: 16, 32>}, {pipeline_mode = #tpu.pipeline_mode<synchronous>, transform_indices = @transform_1, window_bounds = array<i64: 1, 32>}, {pipeline_mode = #tpu.pipeline_mode<synchronous>, transform_indices = @transform_2, window_bounds = array<i64: 1, 32>}, {transform_indices = @transform_3, window_bounds = array<i64: 32, 32>}, {transform_indices = @transform_4, window_bounds = array<i64: 1, 32>}, {transform_indices = @transform_5, window_bounds = array<i64: 16, 32>}]} {
    %c0_i32 = arith.constant 0 : i32
    %0 = arith.cmpi eq, %arg1, %c0_i32 : i32
    %1 = arith.extui %0 : i1 to i32
    %c0_i32_0 = arith.constant 0 : i32
    %2 = arith.cmpi ne, %1, %c0_i32_0 : i32
    scf.if %2 {
      %c0_11 = arith.constant 0 : index
      %c0_12 = arith.constant 0 : index
      %19 = vector.load %arg2[%c0_11, %c0_12] : memref<16x32xf32, #tpu.memory_space<vmem>>, vector<16x32xf32>
      %cst_13 = arith.constant dense<0.000000e+00> : vector<16xf32>
      %20 = vector.multi_reduction <add>, %19, %cst_13 [1] : vector<16x32xf32> to vector<16xf32>
      %21 = vector.shape_cast %20 : vector<16xf32> to vector<16x1xf32>
      %cst_14 = arith.constant 3.200000e+01 : f32
      %22 = vector.broadcast %cst_14 : f32 to vector<16x1xf32>
      %23 = arith.divf %21, %22 : vector<16x1xf32>
      %24 = vector.broadcast %23 : vector<16x1xf32> to vector<16x32xf32>
      %25 = arith.subf %19, %24 : vector<16x32xf32>
      %26 = arith.mulf %25, %25 : vector<16x32xf32>
      %cst_15 = arith.constant dense<0.000000e+00> : vector<16xf32>
      %27 = vector.multi_reduction <add>, %26, %cst_15 [1] : vector<16x32xf32> to vector<16xf32>
      %28 = vector.shape_cast %27 : vector<16xf32> to vector<16x1xf32>
      %cst_16 = arith.constant 3.200000e+01 : f32
      %29 = vector.broadcast %cst_16 : f32 to vector<16x1xf32>
      %30 = arith.divf %28, %29 : vector<16x1xf32>
      %cst_17 = arith.constant 9.99999996E-13 : f32
      %31 = vector.broadcast %cst_17 : f32 to vector<16x1xf32>
      %32 = arith.addf %30, %31 : vector<16x1xf32>
      %33 = math.rsqrt %32 : vector<16x1xf32>
      %34 = vector.broadcast %33 : vector<16x1xf32> to vector<16x32xf32>
      %35 = arith.mulf %25, %34 : vector<16x32xf32>
      %c0_18 = arith.constant 0 : index
      %c0_19 = arith.constant 0 : index
      %36 = vector.load %arg3[%c0_18, %c0_19] : memref<1x32xf32, #tpu.memory_space<vmem>>, vector<1x32xf32>
      %37 = vector.broadcast %36 : vector<1x32xf32> to vector<16x32xf32>
      %38 = arith.mulf %35, %37 : vector<16x32xf32>
      %c0_20 = arith.constant 0 : index
      %c0_21 = arith.constant 0 : index
      %39 = vector.load %arg4[%c0_20, %c0_21] : memref<1x32xf32, #tpu.memory_space<vmem>>, vector<1x32xf32>
      %40 = vector.broadcast %39 : vector<1x32xf32> to vector<16x32xf32>
      %41 = arith.addf %38, %40 : vector<16x32xf32>
      %42 = arith.truncf %41 : vector<16x32xf32> to vector<16x32xbf16>
      %c0_22 = arith.constant 0 : index
      %c0_23 = arith.constant 0 : index
      %43 = vector.load %arg8[%c0_22, %c0_23] : memref<16x32xbf16, #tpu.memory_space<vmem>>, vector<16x32xbf16>
      tpu.vector_store %arg8[%c0_22, %c0_23], %42 {strides = array<i32>} : memref<16x32xbf16, #tpu.memory_space<vmem>>, vector<16x32xbf16>,
    } else {
    }
    %c0 = arith.constant 0 : index
    %c0_1 = arith.constant 0 : index
    %3 = vector.load %arg8[%c0, %c0_1] : memref<16x32xbf16, #tpu.memory_space<vmem>>, vector<16x32xbf16>
    %c0_2 = arith.constant 0 : index
    %c0_3 = arith.constant 0 : index
    %4 = vector.load %arg5[%c0_2, %c0_3] : memref<32x32xbf16, #tpu.memory_space<vmem>>, vector<32x32xbf16>
    %cst = arith.constant dense<0.000000e+00> : vector<16x32xf32>
    %5 = tpu.matmul %3, %4, %cst {dimension_numbers = #tpu.dot_dimension_numbers<[1], [0], [0], [1], [0, 0, 1, 1], [], []>} : vector<16x32xbf16>, vector<32x32xbf16>, vector<16x32xf32> -> vector<16x32xf32>
    %c0_4 = arith.constant 0 : index
    %c0_5 = arith.constant 0 : index
    %6 = vector.load %arg6[%c0_4, %c0_5] : memref<1x32xf32, #tpu.memory_space<vmem>>, vector<1x32xf32>
    %7 = vector.broadcast %6 : vector<1x32xf32> to vector<16x32xf32>
    %8 = arith.addf %5, %7 : vector<16x32xf32>
    %cst_6 = arith.constant 5.000000e-01 : f32
    %9 = vector.broadcast %cst_6 : f32 to vector<16x32xf32>
    %10 = arith.mulf %9, %8 : vector<16x32xf32>
    %cst_7 = arith.constant 0.707106769 : f32
    %11 = vector.broadcast %cst_7 : f32 to vector<16x32xf32>
    %12 = arith.mulf %8, %11 : vector<16x32xf32>
    %13 = math.erf %12 : vector<16x32xf32>
    %cst_8 = arith.constant 1.000000e+00 : f32
    %14 = vector.broadcast %cst_8 : f32 to vector<16x32xf32>
    %15 = arith.addf %14, %13 : vector<16x32xf32>
    %16 = arith.mulf %10, %15 : vector<16x32xf32>
    %17 = arith.truncf %16 : vector<16x32xf32> to vector<16x32xbf16>
    %c0_9 = arith.constant 0 : index
    %c0_10 = arith.constant 0 : index
    %18 = vector.load %arg7[%c0_9, %c0_10] : memref<16x32xbf16, #tpu.memory_space<vmem>>, vector<16x32xbf16>
    tpu.vector_store %arg7[%c0_9, %c0_10], %17 {strides = array<i32>} : memref<16x32xbf16, #tpu.memory_space<vmem>>, vector<16x32xbf16>,
    return
  }
  func.func @transform_0(%arg0: i32, %arg1: i32) -> (i32, i32) {
    %c0_i32 = arith.constant 0 : i32
    %c0_i32_0 = arith.constant 0 : i32
    return %arg0, %c0_i32 : i32, i32
  }
  func.func @transform_1(%arg0: i32, %arg1: i32) -> (i32, i32) {
    %c0_i32 = arith.constant 0 : i32
    %c0_i32_0 = arith.constant 0 : i32
    %c0_i32_1 = arith.constant 0 : i32
    return %c0_i32, %c0_i32_0 : i32, i32
  }
  func.func @transform_2(%arg0: i32, %arg1: i32) -> (i32, i32) {
    %c0_i32 = arith.constant 0 : i32
    %c0_i32_0 = arith.constant 0 : i32
    %c0_i32_1 = arith.constant 0 : i32
    return %c0_i32, %c0_i32_0 : i32, i32
  }
  func.func @transform_3(%arg0: i32, %arg1: i32) -> (i32, i32) {
    %c0_i32 = arith.constant 0 : i32
    %c0_i32_0 = arith.constant 0 : i32
    return %c0_i32, %arg1 : i32, i32
  }
  func.func @transform_4(%arg0: i32, %arg1: i32) -> (i32, i32) {
    %c0_i32 = arith.constant 0 : i32
    %c0_i32_0 = arith.constant 0 : i32
    return %c0_i32, %arg1 : i32, i32
  }
  func.func @transform_5(%arg0: i32, %arg1: i32) -> (i32, i32) {
    %c0_i32 = arith.constant 0 : i32
    return %arg0, %arg1 : i32, i32
  }
}

module attributes {stable_mosaic.version = 11 : i64} {
  func.func @_ln_mm_bias_kernel(%arg0: i32, %arg1: i32, %arg2: memref<16x32xbf16, #tpu.memory_space<vmem>>, %arg3: memref<1x32xf32, #tpu.memory_space<vmem>>, %arg4: memref<1x32xf32, #tpu.memory_space<vmem>>, %arg5: memref<32x128xbf16, #tpu.memory_space<vmem>>, %arg6: memref<1x128xf32, #tpu.memory_space<vmem>>, %arg7: memref<16x128xf32, #tpu.memory_space<vmem>>, %arg8: memref<16x32xbf16, #tpu.memory_space<vmem>>) attributes {dimension_semantics = [#tpu.dimension_semantics<parallel>, #tpu.dimension_semantics<arbitrary>], iteration_bounds = array<i64: 1, 1>, scalar_prefetch = 0 : i64, scratch_operands = 1 : i64, tpu.core_type = #tpu.core_type<tc>, window_params = [{transform_indices = @transform_0, window_bounds = array<i64: 16, 32>}, {pipeline_mode = #tpu.pipeline_mode<synchronous>, transform_indices = @transform_1, window_bounds = array<i64: 1, 32>}, {pipeline_mode = #tpu.pipeline_mode<synchronous>, transform_indices = @transform_2, window_bounds = array<i64: 1, 32>}, {transform_indices = @transform_3, window_bounds = array<i64: 32, 128>}, {transform_indices = @transform_4, window_bounds = array<i64: 1, 128>}, {transform_indices = @transform_5, window_bounds = array<i64: 16, 128>}]} {
    %c0_i32 = arith.constant 0 : i32
    %0 = arith.cmpi eq, %arg1, %c0_i32 : i32
    %1 = arith.extui %0 : i1 to i32
    %c0_i32_0 = arith.constant 0 : i32
    %2 = arith.cmpi ne, %1, %c0_i32_0 : i32
    scf.if %2 {
      %c0_8 = arith.constant 0 : index
      %c0_9 = arith.constant 0 : index
      %10 = vector.load %arg2[%c0_8, %c0_9] : memref<16x32xbf16, #tpu.memory_space<vmem>>, vector<16x32xbf16>
      %11 = arith.extf %10 : vector<16x32xbf16> to vector<16x32xf32>
      %cst_10 = arith.constant dense<0.000000e+00> : vector<16xf32>
      %12 = vector.multi_reduction <add>, %11, %cst_10 [1] : vector<16x32xf32> to vector<16xf32>
      %13 = vector.shape_cast %12 : vector<16xf32> to vector<16x1xf32>
      %cst_11 = arith.constant 3.200000e+01 : f32
      %14 = vector.broadcast %cst_11 : f32 to vector<16x1xf32>
      %15 = arith.divf %13, %14 : vector<16x1xf32>
      %16 = vector.broadcast %15 : vector<16x1xf32> to vector<16x32xf32>
      %17 = arith.subf %11, %16 : vector<16x32xf32>
      %18 = arith.mulf %17, %17 : vector<16x32xf32>
      %cst_12 = arith.constant dense<0.000000e+00> : vector<16xf32>
      %19 = vector.multi_reduction <add>, %18, %cst_12 [1] : vector<16x32xf32> to vector<16xf32>
      %20 = vector.shape_cast %19 : vector<16xf32> to vector<16x1xf32>
      %cst_13 = arith.constant 3.200000e+01 : f32
      %21 = vector.broadcast %cst_13 : f32 to vector<16x1xf32>
      %22 = arith.divf %20, %21 : vector<16x1xf32>
      %cst_14 = arith.constant 9.99999996E-13 : f32
      %23 = vector.broadcast %cst_14 : f32 to vector<16x1xf32>
      %24 = arith.addf %22, %23 : vector<16x1xf32>
      %25 = math.rsqrt %24 : vector<16x1xf32>
      %26 = vector.broadcast %25 : vector<16x1xf32> to vector<16x32xf32>
      %27 = arith.mulf %17, %26 : vector<16x32xf32>
      %c0_15 = arith.constant 0 : index
      %c0_16 = arith.constant 0 : index
      %28 = vector.load %arg3[%c0_15, %c0_16] : memref<1x32xf32, #tpu.memory_space<vmem>>, vector<1x32xf32>
      %29 = vector.broadcast %28 : vector<1x32xf32> to vector<16x32xf32>
      %30 = arith.mulf %27, %29 : vector<16x32xf32>
      %c0_17 = arith.constant 0 : index
      %c0_18 = arith.constant 0 : index
      %31 = vector.load %arg4[%c0_17, %c0_18] : memref<1x32xf32, #tpu.memory_space<vmem>>, vector<1x32xf32>
      %32 = vector.broadcast %31 : vector<1x32xf32> to vector<16x32xf32>
      %33 = arith.addf %30, %32 : vector<16x32xf32>
      %34 = arith.truncf %33 : vector<16x32xf32> to vector<16x32xbf16>
      %c0_19 = arith.constant 0 : index
      %c0_20 = arith.constant 0 : index
      %35 = vector.load %arg8[%c0_19, %c0_20] : memref<16x32xbf16, #tpu.memory_space<vmem>>, vector<16x32xbf16>
      tpu.vector_store %arg8[%c0_19, %c0_20], %34 {strides = array<i32>} : memref<16x32xbf16, #tpu.memory_space<vmem>>, vector<16x32xbf16>,
    } else {
    }
    %c0 = arith.constant 0 : index
    %c0_1 = arith.constant 0 : index
    %3 = vector.load %arg8[%c0, %c0_1] : memref<16x32xbf16, #tpu.memory_space<vmem>>, vector<16x32xbf16>
    %c0_2 = arith.constant 0 : index
    %c0_3 = arith.constant 0 : index
    %4 = vector.load %arg5[%c0_2, %c0_3] : memref<32x128xbf16, #tpu.memory_space<vmem>>, vector<32x128xbf16>
    %cst = arith.constant dense<0.000000e+00> : vector<16x128xf32>
    %5 = tpu.matmul %3, %4, %cst {dimension_numbers = #tpu.dot_dimension_numbers<[1], [0], [0], [1], [0, 0, 1, 1], [], []>} : vector<16x32xbf16>, vector<32x128xbf16>, vector<16x128xf32> -> vector<16x128xf32>
    %c0_4 = arith.constant 0 : index
    %c0_5 = arith.constant 0 : index
    %6 = vector.load %arg6[%c0_4, %c0_5] : memref<1x128xf32, #tpu.memory_space<vmem>>, vector<1x128xf32>
    %7 = vector.broadcast %6 : vector<1x128xf32> to vector<16x128xf32>
    %8 = arith.addf %5, %7 : vector<16x128xf32>
    %c0_6 = arith.constant 0 : index
    %c0_7 = arith.constant 0 : index
    %9 = vector.load %arg7[%c0_6, %c0_7] : memref<16x128xf32, #tpu.memory_space<vmem>>, vector<16x128xf32>
    tpu.vector_store %arg7[%c0_6, %c0_7], %8 {strides = array<i32>} : memref<16x128xf32, #tpu.memory_space<vmem>>, vector<16x128xf32>,
    return
  }
  func.func @transform_0(%arg0: i32, %arg1: i32) -> (i32, i32) {
    %c0_i32 = arith.constant 0 : i32
    %c0_i32_0 = arith.constant 0 : i32
    return %arg0, %c0_i32 : i32, i32
  }
  func.func @transform_1(%arg0: i32, %arg1: i32) -> (i32, i32) {
    %c0_i32 = arith.constant 0 : i32
    %c0_i32_0 = arith.constant 0 : i32
    %c0_i32_1 = arith.constant 0 : i32
    return %c0_i32, %c0_i32_0 : i32, i32
  }
  func.func @transform_2(%arg0: i32, %arg1: i32) -> (i32, i32) {
    %c0_i32 = arith.constant 0 : i32
    %c0_i32_0 = arith.constant 0 : i32
    %c0_i32_1 = arith.constant 0 : i32
    return %c0_i32, %c0_i32_0 : i32, i32
  }
  func.func @transform_3(%arg0: i32, %arg1: i32) -> (i32, i32) {
    %c0_i32 = arith.constant 0 : i32
    %c0_i32_0 = arith.constant 0 : i32
    return %c0_i32, %arg1 : i32, i32
  }
  func.func @transform_4(%arg0: i32, %arg1: i32) -> (i32, i32) {
    %c0_i32 = arith.constant 0 : i32
    %c0_i32_0 = arith.constant 0 : i32
    return %c0_i32, %arg1 : i32, i32
  }
  func.func @transform_5(%arg0: i32, %arg1: i32) -> (i32, i32) {
    %c0_i32 = arith.constant 0 : i32
    return %arg0, %arg1 : i32, i32
  }
}

</mosaic_0001>

<llo_original>
// kernel: _lambda_.13
$region0: #{_lambda_.13}
  #allocation0 [shape = 'u32[]', space=smem, size = 0x4, offset = 0x4, fixed_abs, tag = 'smem constant byte address 0x4 - core index']
  #allocation1 [shape = 'u32[144,128]{1,0:T(1,128)}', space=vmem, size = 0x12000, scoped, tag = 'internal scratch']
  %s0 = inlined_call_operand.hbm [shape: bf16[2,8,128], index: 0, kind: input, shape index: {}]
  %s1 = inlined_call_operand.hbm [shape: f32[4,1,128], index: 1, kind: input, shape index: {}]
  %s2 = inlined_call_operand.hbm [shape: f32[1,1,128], index: 2, kind: input, shape index: {}]
  %s3 = inlined_call_operand.hbm [shape: bf16[2,8,128], index: 3, kind: output, shape index: {}]
  %s4 = sld [smem:[#allocation0]]
  $region34: #{_lambda_.13} parent=0
    _
  %s6 = ssub.s32 1, %s4
  %s7 = scalar_select 0, %s6, %s4
  $region1: #{_lambda_.13} parent=0
    #allocation2 [shape = 'u8[4096]{0}', space=vmem, size = 0x1000, scoped, tag = 'input window, operand 0, single buffered']
    #allocation3 [shape = 's32[1]{0}', space=sflag, size = 0x4, scoped, tag = 'scoped memory for _lambda_.13']
    #allocation4 [shape = 's32[1]{0}', space=sflag, size = 0x4, scoped, tag = 'scoped memory for _lambda_.13']
    #allocation5 [shape = 'u8[2048]{0}', space=vmem, size = 0x800, scoped, tag = 'input window, operand 1, single buffered']
    #allocation6 [shape = 's32[1]{0}', space=sflag, size = 0x4, scoped, tag = 'scoped memory for _lambda_.13']
    #allocation7 [shape = 'u8[512]{0}', space=vmem, size = 0x400, scoped, tag = 'input window, operand 2, single buffered']
    #allocation8 [shape = 'u8[4096]{0}', space=vmem, size = 0x1000, scoped, tag = 'output window, operand 0, single buffered']
    %8 = vsyncpa [#allocation3], 0
    %9 = vsyncpa [#allocation6], 0
    %10 = vsyncpa [#allocation4], 0
    // Predicated region
    $region2: #{_lambda_.13} parent=1 // pred_check
      _
    $region3: #{_lambda_.13} parent=1 // pred_check_branch
      %12 = sbr.rel (0) target = $region5
    $region4: #{_lambda_.13} parent=1 // pred_region
      %s14 = ssub.s32 128, 128
      %15 = vsyncadd [#allocation3], %s14
      %s16 = sshll.u32 [#allocation2], 4
      %s17 = int_to_ptr.vmem [resolvable:$true] %s16
      %22 = dma.hbm_to_vmem [thread:$0]  %s0, 128, %s17, [#allocation3], 64, 64, 4
    $region5: #{_lambda_.13} parent=1 // pred_fallthru
      _
    // Predicated region
    $region6: #{_lambda_.13} parent=1 // pred_check
      _
    $region7: #{_lambda_.13} parent=1 // pred_check_branch
      %24 = sbr.rel (0) target = $region9
    $region8: #{_lambda_.13} parent=1 // pred_region
      %s26 = ssub.s32 64, 64
      %27 = vsyncadd [#allocation6], %s26
      %s28 = sshll.u32 [#allocation5], 4
      %s29 = int_to_ptr.vmem [resolvable:$true] %s28
      %34 = dma.hbm_to_vmem [thread:$0]  %s1, 64, %s29, [#allocation6], 16, 16, 1
    $region9: #{_lambda_.13} parent=1 // pred_fallthru
      _
    // Predicated region
    $region10: #{_lambda_.13} parent=1 // pred_check
      _
    $region11: #{_lambda_.13} parent=1 // pred_check_branch
      %36 = sbr.rel (0) target = $region13
    $region12: #{_lambda_.13} parent=1 // pred_region
      %s38 = ssub.s32 16, 16
      %39 = vsyncadd [#allocation6], %s38
      %s41 = sshll.u32 [#allocation7], 4
      %s42 = int_to_ptr.vmem [resolvable:$true] %s41
      %44 = dma.hbm_to_vmem [thread:$0]  %s2, 16, %s42, [#allocation6]
    $region13: #{_lambda_.13} parent=1 // pred_fallthru
      _
    // Predicated region
    $region14: #{_lambda_.13} parent=1 // pred_check
      _
    $region15: #{_lambda_.13} parent=1 // pred_check_branch
      %46 = sbr.rel (0) target = $region17
    $region16: #{_lambda_.13} parent=1 // pred_region
      %47 = dma.done [#allocation3], 128
    $region17: #{_lambda_.13} parent=1 // pred_fallthru
      _
    // Predicated region
    $region18: #{_lambda_.13} parent=1 // pred_check
      _
    $region19: #{_lambda_.13} parent=1 // pred_check_branch
      %49 = sbr.rel (0) target = $region21
    $region20: #{_lambda_.13} parent=1 // pred_region
      %50 = dma.done [#allocation6], 64
    $region21: #{_lambda_.13} parent=1 // pred_fallthru
      _
    // Predicated region
    $region22: #{_lambda_.13} parent=1 // pred_check
      _
    $region23: #{_lambda_.13} parent=1 // pred_check_branch
      %52 = sbr.rel (0) target = $region25
    $region24: #{_lambda_.13} parent=1 // pred_region
      %53 = dma.done [#allocation6], 16
    $region25: #{_lambda_.13} parent=1 // pred_fallthru
      _
    %v54 = vld [vmem:[#allocation2] sm:$0xf]
    %v55 = vld [vmem:[#allocation2 + $0x4] sm:$0xf]
    %v56 = vunpack.c.l.bf16 %v54
    %v57 = vunpack.c.l.bf16 %v55
    %v58 = vld [vmem:[#allocation7] sm:$0x1]
    %v60 = vlaneseq
    %v61 = vshrl.u32 %v60, 7
    %v62 = vsub.s32 0, %v61
    %v63 = vrot.slane %v58, %v62
    %v65 = vadd.f32 %v63, 0.0
    %v66 = vld [vmem:[#allocation5] sm:$0x1]
    %v68 = vlaneseq
    %v69 = vshrl.u32 %v68, 7
    %v70 = vsub.s32 0, %v69
    %v71 = vrot.slane %v66, %v70
    %v73 = vmul.f32 %v71, 0.0
    %v74 = vadd.f32 %v65, %v73
    %s75 = scalar_lea.vmem [#allocation5], 1
    %v76 = vld [vmem:[%s75] sm:$0x1]
    %v78 = vlaneseq
    %v79 = vshrl.u32 %v78, 7
    %v80 = vsub.s32 0, %v79
    %v81 = vrot.slane %v76, %v80
    %v83 = vmul.f32 %v81, 0.0
    %v84 = vadd.f32 %v74, %v83
    %s85 = scalar_lea.vmem [#allocation5], 2
    %v86 = vld [vmem:[%s85] sm:$0x1]
    %v88 = vlaneseq
    %v89 = vshrl.u32 %v88, 7
    %v90 = vsub.s32 0, %v89
    %v91 = vrot.slane %v86, %v90
    %v93 = vmul.f32 %v91, 0.0
    %v94 = vmul.f32 %v56, %v91
    %v95 = vadd.f32 %v84, %v93
    %v96 = vadd.f32 %v84, %v94
    %s97 = scalar_lea.vmem [#allocation5], 3
    %v98 = vld [vmem:[%s97] sm:$0x1]
    %v100 = vlaneseq
    %v101 = vshrl.u32 %v100, 7
    %v102 = vsub.s32 0, %v101
    %v103 = vrot.slane %v98, %v102
    %v105 = vmul.f32 %v56, %v103
    %v106 = vmul.f32 %v57, %v103
    %v107 = vadd.f32 %v95, %v105
    %v108 = vadd.f32 %v96, %v106
    %v109 = vxor.u32 %v107, 2147483648
    %v110 = vxor.u32 %v108, 2147483648
    %v111 = vmul.f32 %v109, 1.442695
    %v112 = vpow.pop %v111
    %v113 = vmul.f32 %v110, 1.442695
    %v114 = vpow.pop %v113
    %v115 = vadd.f32 %v112, 1.0
    %v116 = vadd.f32 %v114, 1.0
    %v117 = vrcp.pop %v115
    %v118 = vmul.f32 1.0, %v117
    %v119 = vrcp.pop %v116
    %v120 = vmul.f32 1.0, %v119
    %v121 = vmul.f32 %v107, %v118
    %v122 = vmul.f32 %v108, %v120
    %v123 = vpack.c.bf16 %v121, %v121
    %v124 = vpack.c.bf16 %v122, %v122
    %125 = vst [vmem:[#allocation8] sm:$0xf] %v123
    %126 = vst [vmem:[#allocation8 + $0x4] sm:$0xf] %v124
    // Predicated region
    $region26: #{_lambda_.13} parent=1 // pred_check
      _
    $region27: #{_lambda_.13} parent=1 // pred_check_branch
      %128 = sbr.rel (0) target = $region29
    $region28: #{_lambda_.13} parent=1 // pred_region
      %s130 = ssub.s32 128, 128
      %131 = vsyncadd [#allocation4], %s130
      %s132 = sshll.u32 [#allocation8], 4
      %s133 = int_to_ptr.vmem [resolvable:$true] %s132
      %138 = dma.vmem_to_hbm [thread:$0]  %s133, 128, %s3, [#allocation4], 64, 64, 4
    $region29: #{_lambda_.13} parent=1 // pred_fallthru
      _
    // Predicated region
    $region30: #{_lambda_.13} parent=1 // pred_check
      _
    $region31: #{_lambda_.13} parent=1 // pred_check_branch
      %140 = sbr.rel (0) target = $region33
    $region32: #{_lambda_.13} parent=1 // pred_region
      %141 = dma.done [#allocation4], 128
    $region33: #{_lambda_.13} parent=1 // pred_fallthru
      _
    %142 = vsyncpa [#allocation3], 1
    %143 = vsyncpa [#allocation6], 1
    %144 = vsyncpa [#allocation4], 1

// kernel: _lambda_.12
$region0: #{_lambda_.12}
  #allocation0 [shape = 'u32[]', space=smem, size = 0x4, offset = 0x4, fixed_abs, tag = 'smem constant byte address 0x4 - core index']
  #allocation1 [shape = 'u32[144,128]{1,0:T(1,128)}', space=vmem, size = 0x12000, scoped, tag = 'internal scratch']
  #allocation2 [shape = 'bf16[16,32]{1,0:T(16,128)(2,1)}', space=vmem, size = 0x1000, scoped, tag = 'scratch operand']
  %s0 = inlined_call_operand.hbm [shape: f32[16,32], index: 0, kind: input, shape index: {}]
  %s1 = inlined_call_operand.hbm [shape: f32[1,32], index: 1, kind: input, shape index: {}]
  %s2 = inlined_call_operand.hbm [shape: f32[1,32], index: 2, kind: input, shape index: {}]
  %s3 = inlined_call_operand.hbm [shape: bf16[32,128], index: 3, kind: input, shape index: {}]
  %s4 = inlined_call_operand.hbm [shape: bf16[32,128], index: 4, kind: input, shape index: {}]
  %s5 = inlined_call_operand.hbm [shape: bf16[16,128], index: 5, kind: output, shape index: {0}]
  %s6 = inlined_call_operand.hbm [shape: bf16[16,128], index: 6, kind: output, shape index: {1}]
  %7 = xla_tuple %s5, %s6
  %s8 = sld [smem:[#allocation0]]
  $region62: #{_lambda_.12} parent=0
    _
  %s10 = ssub.s32 1, %s8
  %s11 = scalar_select 0, %s10, %s8
  $region1: #{_lambda_.12} parent=0
    #allocation3 [shape = 'u8[8192]{0}', space=vmem, size = 0x2000, scoped, tag = 'input window, operand 0, single buffered']
    #allocation4 [shape = 's32[1]{0}', space=sflag, size = 0x4, scoped, tag = 'scoped memory for _lambda_.12']
    #allocation5 [shape = 's32[1]{0}', space=sflag, size = 0x4, scoped, tag = 'scoped memory for _lambda_.12']
    #allocation6 [shape = 'u8[512]{0}', space=vmem, size = 0x400, scoped, tag = 'input window, operand 1, single buffered']
    #allocation7 [shape = 's32[1]{0}', space=sflag, size = 0x4, scoped, tag = 'scoped memory for _lambda_.12']
    #allocation8 [shape = 'u8[512]{0}', space=vmem, size = 0x400, scoped, tag = 'input window, operand 2, single buffered']
    #allocation9 [shape = 'u8[8192]{0}', space=vmem, size = 0x2000, scoped, tag = 'input window, operand 3, single buffered']
    #allocation10 [shape = 's32[1]{0}', space=sflag, size = 0x4, scoped, tag = 'scoped memory for _lambda_.12']
    #allocation11 [shape = 'u8[8192]{0}', space=vmem, size = 0x2000, scoped, tag = 'input window, operand 4, single buffered']
    #allocation12 [shape = 'u8[4096]{0}', space=vmem, size = 0x1000, scoped, tag = 'output window, operand 0, single buffered']
    #allocation13 [shape = 'u8[4096]{0}', space=vmem, size = 0x1000, scoped, tag = 'output window, operand 1, single buffered']
    #allocation14 [shape = 's32[1]{0}', space=sflag, size = 0x4, scoped, tag = 'scoped memory for _lambda_.12']
    %12 = vsyncpa [#allocation4], 0
    %13 = vsyncpa [#allocation7], 0
    %14 = vsyncpa [#allocation10], 0
    %15 = vsyncpa [#allocation5], 0
    %16 = vsyncpa [#allocation14], 0
    // Predicated region
    $region2: #{_lambda_.12} parent=1 // pred_check
      _
    $region3: #{_lambda_.12} parent=1 // pred_check_branch
      %18 = sbr.rel (0) target = $region5
    $region4: #{_lambda_.12} parent=1 // pred_region
      %s20 = ssub.s32 256, 256
      %21 = vsyncadd [#allocation4], %s20
      %s22 = sshll.u32 [#allocation3], 4
      %s23 = int_to_ptr.vmem [resolvable:$true] %s22
      %28 = dma.hbm_to_vmem [thread:$0]  %s0, 256, %s23, [#allocation4], 128, 128, 8
    $region5: #{_lambda_.12} parent=1 // pred_fallthru
      _
    // Predicated region
    $region6: #{_lambda_.12} parent=1 // pred_check
      _
    $region7: #{_lambda_.12} parent=1 // pred_check_branch
      %30 = sbr.rel (0) target = $region9
    $region8: #{_lambda_.12} parent=1 // pred_region
      %s32 = ssub.s32 16, 16
      %33 = vsyncadd [#allocation7], %s32
      %s35 = sshll.u32 [#allocation6], 4
      %s36 = int_to_ptr.vmem [resolvable:$true] %s35
      %38 = dma.hbm_to_vmem [thread:$0]  %s1, 16, %s36, [#allocation7]
    $region9: #{_lambda_.12} parent=1 // pred_fallthru
      _
    // Predicated region
    $region10: #{_lambda_.12} parent=1 // pred_check
      _
    $region11: #{_lambda_.12} parent=1 // pred_check_branch
      %40 = sbr.rel (0) target = $region13
    $region12: #{_lambda_.12} parent=1 // pred_region
      %s42 = ssub.s32 16, 16
      %43 = vsyncadd [#allocation7], %s42
      %s45 = sshll.u32 [#allocation8], 4
      %s46 = int_to_ptr.vmem [resolvable:$true] %s45
      %48 = dma.hbm_to_vmem [thread:$0]  %s2, 16, %s46, [#allocation7]
    $region13: #{_lambda_.12} parent=1 // pred_fallthru
      _
    // Predicated region
    $region14: #{_lambda_.12} parent=1 // pred_check
      _
    $region15: #{_lambda_.12} parent=1 // pred_check_branch
      %50 = sbr.rel (0) target = $region17
    $region16: #{_lambda_.12} parent=1 // pred_region
      %s52 = ssub.s32 256, 256
      %53 = vsyncadd [#allocation10], %s52
      %s54 = sshll.u32 [#allocation9], 4
      %s55 = int_to_ptr.vmem [resolvable:$true] %s54
      %60 = dma.hbm_to_vmem [thread:$0]  %s3, 256, %s55, [#allocation10], 64, 64, 4
    $region17: #{_lambda_.12} parent=1 // pred_fallthru
      _
    // Predicated region
    $region18: #{_lambda_.12} parent=1 // pred_check
      _
    $region19: #{_lambda_.12} parent=1 // pred_check_branch
      %62 = sbr.rel (0) target = $region21
    $region20: #{_lambda_.12} parent=1 // pred_region
      %s64 = ssub.s32 256, 256
      %65 = vsyncadd [#allocation10], %s64
      %s66 = sshll.u32 [#allocation11], 4
      %s67 = int_to_ptr.vmem [resolvable:$true] %s66
      %72 = dma.hbm_to_vmem [thread:$0]  %s4, 256, %s67, [#allocation10], 64, 64, 4
    $region21: #{_lambda_.12} parent=1 // pred_fallthru
      _
    // Predicated region
    $region22: #{_lambda_.12} parent=1 // pred_check
      _
    $region23: #{_lambda_.12} parent=1 // pred_check_branch
      %74 = sbr.rel (0) target = $region25
    $region24: #{_lambda_.12} parent=1 // pred_region
      %75 = dma.done [#allocation4], 256
    $region25: #{_lambda_.12} parent=1 // pred_fallthru
      _
    // Predicated region
    $region26: #{_lambda_.12} parent=1 // pred_check
      _
    $region27: #{_lambda_.12} parent=1 // pred_check_branch
      %77 = sbr.rel (0) target = $region29
    $region28: #{_lambda_.12} parent=1 // pred_region
      %78 = dma.done [#allocation7], 16
    $region29: #{_lambda_.12} parent=1 // pred_fallthru
      _
    // Predicated region
    $region30: #{_lambda_.12} parent=1 // pred_check
      _
    $region31: #{_lambda_.12} parent=1 // pred_check_branch
      %80 = sbr.rel (0) target = $region33
    $region32: #{_lambda_.12} parent=1 // pred_region
      %81 = dma.done [#allocation7], 16
    $region33: #{_lambda_.12} parent=1 // pred_fallthru
      _
    // Predicated region
    $region34: #{_lambda_.12} parent=1 // pred_check
      _
    $region35: #{_lambda_.12} parent=1 // pred_check_branch
      %83 = sbr.rel (0) target = $region37
    $region36: #{_lambda_.12} parent=1 // pred_region
      %84 = dma.done [#allocation10], 256
    $region37: #{_lambda_.12} parent=1 // pred_fallthru
      _
    // Predicated region
    $region38: #{_lambda_.12} parent=1 // pred_check
      _
    $region39: #{_lambda_.12} parent=1 // pred_check_branch
      %86 = sbr.rel (0) target = $region41
    $region40: #{_lambda_.12} parent=1 // pred_region
      %87 = dma.done [#allocation10], 256
    $region41: #{_lambda_.12} parent=1 // pred_fallthru
      _
    %p89 = scmp.eq.s32.totalorder 0, 0
    // Predicated region
    $region42: #{_lambda_.12} parent=1 // pred_check
      %p90 = pneg %p89
    $region43: #{_lambda_.12} parent=1 // pred_check_branch
      %92 = sbr.rel (%p90) target = $region45
    $region44: #{_lambda_.12} parent=1 // pred_region
      %v93 = vld [vmem:[#allocation3] sm:$0xff]
      %v94 = vld [vmem:[#allocation3 + $0x8] sm:$0xff]
      %vm95 = vcmask 261120
      %v96 = vsel %vm95, %v93, 0.0
      %97 = vadd.xlane.f32.xlu0 %v96
      %v98 = vpop.xlane.xlu0 %97
      %v99 = vsel %vm95, %v94, 0.0
      %100 = vadd.xlane.f32.xlu0 %v99
      %v101 = vpop.xlane.xlu0 %100
      %v102 = vrcp.pop 32.0
      %v103 = vmul.f32 %v98, %v102
      %v104 = vmul.f32 %v101, %v102
      %v105 = vsub.f32 %v93, %v103
      %v106 = vsub.f32 %v94, %v104
      %v107 = vmul.f32 %v105, %v105
      %v108 = vmul.f32 %v106, %v106
      %v109 = vsel %vm95, %v107, 0.0
      %110 = vadd.xlane.f32.xlu0 %v109
      %v111 = vpop.xlane.xlu0 %110
      %v112 = vsel %vm95, %v108, 0.0
      %113 = vadd.xlane.f32.xlu0 %v112
      %v114 = vpop.xlane.xlu0 %113
      %v115 = vmul.f32 %v111, %v102
      %v116 = vmul.f32 %v114, %v102
      %v117 = vadd.f32 %v115, 1e-05
      %v118 = vadd.f32 %v116, 1e-05
      %v119 = vrsqrt.pop %v117
      %v120 = vrsqrt.pop %v118
      %v121 = vmul.f32 %v105, %v119
      %v122 = vmul.f32 %v106, %v120
      %v123 = vld [vmem:[#allocation6] sm:$0x1]
      %v125 = vlaneseq
      %v126 = vshrl.u32 %v125, 7
      %v127 = vsub.s32 0, %v126
      %v128 = vrot.slane %v123, %v127
      %v130 = vmul.f32 %v121, %v128
      %v131 = vmul.f32 %v122, %v128
      %v132 = vld [vmem:[#allocation8] sm:$0x1]
      %v134 = vlaneseq
      %v135 = vshrl.u32 %v134, 7
      %v136 = vsub.s32 0, %v135
      %v137 = vrot.slane %v132, %v136
      %v139 = vadd.f32 %v130, %v137
      %v140 = vadd.f32 %v131, %v137
      %v141 = vpack.c.bf16 %v140, %v139
      %142 = vst.msk [vmem:[#allocation2] sm:$0xff] %vm95, %v141
    $region45: #{_lambda_.12} parent=1 // pred_fallthru
      _
    %v143 = vld [vmem:[#allocation2] sm:$0xff]
    %v144 = vld [vmem:[#allocation9] sm:$0xf]
    %v145 = vld [vmem:[#allocation9 + $0x4] sm:$0xf]
    %v146 = vld [vmem:[#allocation9 + $0x8] sm:$0xf]
    %v147 = vld [vmem:[#allocation9 + $0xc] sm:$0xf]
    %v152 = vunpack.c.l.b16 %v144
    %v153 = vunpack.c.l.b16 %v145
    %v154 = vunpack.c.l.b16 %v146
    %v155 = vunpack.c.l.b16 %v147
    %v156 = vpack.c.b16 %v153, %v152
    %v157 = vpack.c.b16 %v155, %v154
    %vm160 = vcmask 261120
    %v162 = vsel %vm160, %v143, 0
    %164 = vmatprep.subr.bf16.mxu0 0
    %165 = vmatpush1.bf16.msra.mxu0 %v156
    %166 = vmatprep.subr.bf16.mxu0 0
    %167 = vmatpush1.bf16.msra.mxu0 %v157
    %168 = vmatprep.subr.bf16.mxu0 0
    %169 = vmatpush1.bf16.msra.mxu0 0
    %170 = vmatprep.subr.bf16.mxu0 0
    %171 = vmatpush1.bf16.msra.mxu0 0
    %172 = vmatprep.subr.bf16.mxu0 0
    %173 = vmatpush1.bf16.msra.mxu0 0
    %174 = vmatprep.subr.bf16.mxu0 0
    %175 = vmatpush1.bf16.msra.mxu0 0
    %176 = vmatprep.subr.bf16.mxu0 0
    %177 = vmatpush1.bf16.msra.mxu0 0
    %178 = vmatprep.subr.bf16.mxu0 0
    %179 = vmatpush1.bf16.msra.mxu0 0
    %180 = vmatprep.subr.bf16.mxu0 0
    %181 = vmatpush1.bf16.msra.mxu0 0
    %182 = vmatprep.subr.bf16.mxu0 0
    %183 = vmatpush1.bf16.msra.mxu0 0
    %184 = vmatprep.subr.bf16.mxu0 0
    %185 = vmatpush1.bf16.msra.mxu0 0
    %186 = vmatprep.subr.bf16.mxu0 0
    %187 = vmatpush1.bf16.msra.mxu0 0
    %188 = vmatprep.subr.bf16.mxu0 0
    %189 = vmatpush1.bf16.msra.mxu0 0
    %190 = vmatprep.subr.bf16.mxu0 0
    %191 = vmatpush1.bf16.msra.mxu0 0
    %192 = vmatprep.subr.bf16.mxu0 0
    %193 = vmatpush1.bf16.msra.mxu0 0
    %194 = vmatprep.subr.bf16.mxu0 0
    %195 = vmatpush1.bf16.msra.mxu0 0
    %196 = vmatprep.mubr.bf16.mxu0 0
    %197 = vmatmul.mubr.bf16.gmra.mrb[0].mxu0 %v162
    %v198 = vpop.f32.mrb[0].mxu0
    %v199 = vadd.f32 0.0, %v198
    %v200 = vpop.f32.mrb[0].mxu0
    %v201 = vpop.f32.mrb[0].mxu0
    %v202 = vadd.f32 0.0, %v201
    %v203 = vpop.f32.mrb[0].mxu0
    %204 = vdwg.mxu0
    %v205 = vpack.c.bf16 %v202, %v199
    %v207 = vunpack.c.l.b16 %v205
    %v208 = vunpack.c.h.b16 %v205
    %v209 = vpack.c.b16 %v207, %v207
    %v210 = vpack.c.b16 %v208, %v208
    %213 = vst [vmem:[#allocation12] sm:$0xf] %v209
    %214 = vst [vmem:[#allocation12 + $0x4] sm:$0xf] %v210
    %v215 = vld [vmem:[#allocation11] sm:$0xf]
    %v216 = vld [vmem:[#allocation11 + $0x4] sm:$0xf]
    %v217 = vld [vmem:[#allocation11 + $0x8] sm:$0xf]
    %v218 = vld [vmem:[#allocation11 + $0xc] sm:$0xf]
    %v223 = vunpack.c.l.b16 %v215
    %v224 = vunpack.c.l.b16 %v216
    %v225 = vunpack.c.l.b16 %v217
    %v226 = vunpack.c.l.b16 %v218
    %v227 = vpack.c.b16 %v224, %v223
    %v228 = vpack.c.b16 %v226, %v225
    %231 = vmatprep.subr.bf16.mxu0 0
    %232 = vmatpush1.bf16.msra.mxu0 %v227
    %233 = vmatprep.subr.bf16.mxu0 0
    %234 = vmatpush1.bf16.msra.mxu0 %v228
    %235 = vmatprep.subr.bf16.mxu0 0
    %236 = vmatpush1.bf16.msra.mxu0 0
    %237 = vmatprep.subr.bf16.mxu0 0
    %238 = vmatpush1.bf16.msra.mxu0 0
    %239 = vmatprep.subr.bf16.mxu0 0
    %240 = vmatpush1.bf16.msra.mxu0 0
    %241 = vmatprep.subr.bf16.mxu0 0
    %242 = vmatpush1.bf16.msra.mxu0 0
    %243 = vmatprep.subr.bf16.mxu0 0
    %244 = vmatpush1.bf16.msra.mxu0 0
    %245 = vmatprep.subr.bf16.mxu0 0
    %246 = vmatpush1.bf16.msra.mxu0 0
    %247 = vmatprep.subr.bf16.mxu0 0
    %248 = vmatpush1.bf16.msra.mxu0 0
    %249 = vmatprep.subr.bf16.mxu0 0
    %250 = vmatpush1.bf16.msra.mxu0 0
    %251 = vmatprep.subr.bf16.mxu0 0
    %252 = vmatpush1.bf16.msra.mxu0 0
    %253 = vmatprep.subr.bf16.mxu0 0
    %254 = vmatpush1.bf16.msra.mxu0 0
    %255 = vmatprep.subr.bf16.mxu0 0
    %256 = vmatpush1.bf16.msra.mxu0 0
    %257 = vmatprep.subr.bf16.mxu0 0
    %258 = vmatpush1.bf16.msra.mxu0 0
    %259 = vmatprep.subr.bf16.mxu0 0
    %260 = vmatpush1.bf16.msra.mxu0 0
    %261 = vmatprep.subr.bf16.mxu0 0
    %262 = vmatpush1.bf16.msra.mxu0 0
    %263 = vmatprep.mubr.bf16.mxu0 0
    %264 = vmatmul.mubr.bf16.gmra.mrb[0].mxu0 %v162
    %v265 = vpop.f32.mrb[0].mxu0
    %v266 = vadd.f32 0.0, %v265
    %v267 = vpop.f32.mrb[0].mxu0
    %v268 = vpop.f32.mrb[0].mxu0
    %v269 = vadd.f32 0.0, %v268
    %v270 = vpop.f32.mrb[0].mxu0
    %271 = vdwg.mxu0
    %v272 = vpack.c.bf16 %v269, %v266
    %v274 = vunpack.c.l.b16 %v272
    %v275 = vunpack.c.h.b16 %v272
    %v276 = vpack.c.b16 %v274, %v274
    %v277 = vpack.c.b16 %v275, %v275
    %280 = vst [vmem:[#allocation13] sm:$0xf] %v276
    %281 = vst [vmem:[#allocation13 + $0x4] sm:$0xf] %v277
    // Predicated region
    $region46: #{_lambda_.12} parent=1 // pred_check
      _
    $region47: #{_lambda_.12} parent=1 // pred_check_branch
      %283 = sbr.rel (0) target = $region49
    $region48: #{_lambda_.12} parent=1 // pred_region
      %s285 = ssub.s32 128, 128
      %286 = vsyncadd [#allocation5], %s285
      %s287 = sshll.u32 [#allocation12], 4
      %s288 = int_to_ptr.vmem [resolvable:$true] %s287
      %293 = dma.vmem_to_hbm [thread:$0]  %s288, 128, %s5, [#allocation5], 64, 64, 4
    $region49: #{_lambda_.12} parent=1 // pred_fallthru
      _
    // Predicated region
    $region50: #{_lambda_.12} parent=1 // pred_check
      _
    $region51: #{_lambda_.12} parent=1 // pred_check_branch
      %295 = sbr.rel (0) target = $region53
    $region52: #{_lambda_.12} parent=1 // pred_region
      %s297 = ssub.s32 128, 128
      %298 = vsyncadd [#allocation14], %s297
      %s299 = sshll.u32 [#allocation13], 4
      %s300 = int_to_ptr.vmem [resolvable:$true] %s299
      %305 = dma.vmem_to_hbm [thread:$0]  %s300, 128, %s6, [#allocation14], 64, 64, 4
    $region53: #{_lambda_.12} parent=1 // pred_fallthru
      _
    // Predicated region
    $region54: #{_lambda_.12} parent=1 // pred_check
      _
    $region55: #{_lambda_.12} parent=1 // pred_check_branch
      %307 = sbr.rel (0) target = $region57
    $region56: #{_lambda_.12} parent=1 // pred_region
      %308 = dma.done [#allocation5], 128
    $region57: #{_lambda_.12} parent=1 // pred_fallthru
      _
    // Predicated region
    $region58: #{_lambda_.12} parent=1 // pred_check
      _
    $region59: #{_lambda_.12} parent=1 // pred_check_branch
      %310 = sbr.rel (0) target = $region61
    $region60: #{_lambda_.12} parent=1 // pred_region
      %311 = dma.done [#allocation14], 128
    $region61: #{_lambda_.12} parent=1 // pred_fallthru
      _
    %312 = vsyncpa [#allocation4], 1
    %313 = vsyncpa [#allocation7], 1
    %314 = vsyncpa [#allocation10], 1
    %315 = vsyncpa [#allocation5], 1
    %316 = vsyncpa [#allocation14], 1

// kernel: _lambda_.14
$region0: #{_lambda_.14}
  #allocation0 [shape = 'u32[]', space=smem, size = 0x4, offset = 0x4, fixed_abs, tag = 'smem constant byte address 0x4 - core index']
  #allocation1 [shape = 'u32[144,128]{1,0:T(1,128)}', space=vmem, size = 0x12000, scoped, tag = 'internal scratch']
  #allocation2 [shape = 'f32[16,160]{1,0:T(8,128)}', space=vmem, size = 0x4000, scoped, tag = 'scratch operand']
  %s0 = inlined_call_operand.hbm [shape: bf16[16,128], index: 0, kind: input, shape index: {}]
  %s1 = inlined_call_operand.hbm [shape: bf16[128,160], index: 1, kind: input, shape index: {}]
  %s2 = inlined_call_operand.hbm [shape: f32[1,160], index: 2, kind: input, shape index: {}]
  %s3 = inlined_call_operand.hbm [shape: f32[16,160], index: 3, kind: output, shape index: {}]
  %s4 = sld [smem:[#allocation0]]
  $region42: #{_lambda_.14} parent=0
    _
  %s6 = ssub.s32 1, %s4
  %s7 = scalar_select 0, %s6, %s4
  $region1: #{_lambda_.14} parent=0
    #allocation3 [shape = 'u8[4096]{0}', space=vmem, size = 0x1000, scoped, tag = 'input window, operand 0, single buffered']
    #allocation4 [shape = 's32[1]{0}', space=sflag, size = 0x4, scoped, tag = 'scoped memory for _lambda_.14']
    #allocation5 [shape = 's32[1]{0}', space=sflag, size = 0x4, scoped, tag = 'scoped memory for _lambda_.14']
    #allocation6 [shape = 'u8[65536]{0}', space=vmem, size = 0x10000, scoped, tag = 'input window, operand 1, single buffered']
    #allocation7 [shape = 's32[1]{0}', space=sflag, size = 0x4, scoped, tag = 'scoped memory for _lambda_.14']
    #allocation8 [shape = 'u8[1024]{0}', space=vmem, size = 0x400, scoped, tag = 'input window, operand 2, single buffered']
    #allocation9 [shape = 'u8[16384]{0}', space=vmem, size = 0x4000, scoped, tag = 'output window, operand 0, single buffered']
    %8 = vsyncpa [#allocation4], 0
    %9 = vsyncpa [#allocation7], 0
    %10 = vsyncpa [#allocation5], 0
    // Predicated region
    $region2: #{_lambda_.14} parent=1 // pred_check
      _
    $region3: #{_lambda_.14} parent=1 // pred_check_branch
      %12 = sbr.rel (0) target = $region5
    $region4: #{_lambda_.14} parent=1 // pred_region
      %s14 = ssub.s32 128, 128
      %15 = vsyncadd [#allocation4], %s14
      %s16 = sshll.u32 [#allocation3], 4
      %s17 = int_to_ptr.vmem [resolvable:$true] %s16
      %22 = dma.hbm_to_vmem [thread:$0]  %s0, 128, %s17, [#allocation4], 64, 64, 4
    $region5: #{_lambda_.14} parent=1 // pred_fallthru
      _
    // Predicated region
    $region6: #{_lambda_.14} parent=1 // pred_check
      _
    $region7: #{_lambda_.14} parent=1 // pred_check_branch
      %24 = sbr.rel (0) target = $region9
    $region8: #{_lambda_.14} parent=1 // pred_region
      %s26 = ssub.s32 2048, 2048
      %27 = vsyncadd [#allocation7], %s26
      %s28 = sshll.u32 [#allocation6], 4
      %s29 = int_to_ptr.vmem [resolvable:$true] %s28
      %34 = dma.hbm_to_vmem [thread:$0]  %s1, 2048, %s29, [#allocation7], 128, 128, 8
    $region9: #{_lambda_.14} parent=1 // pred_fallthru
      _
    // Predicated region
    $region10: #{_lambda_.14} parent=1 // pred_check
      _
    $region11: #{_lambda_.14} parent=1 // pred_check_branch
      %36 = sbr.rel (0) target = $region13
    $region12: #{_lambda_.14} parent=1 // pred_region
      %s38 = ssub.s32 32, 32
      %39 = vsyncadd [#allocation7], %s38
      %s41 = sshll.u32 [#allocation8], 4
      %s42 = int_to_ptr.vmem [resolvable:$true] %s41
      %44 = dma.hbm_to_vmem [thread:$0]  %s2, 32, %s42, [#allocation7]
    $region13: #{_lambda_.14} parent=1 // pred_fallthru
      _
    // Predicated region
    $region14: #{_lambda_.14} parent=1 // pred_check
      _
    $region15: #{_lambda_.14} parent=1 // pred_check_branch
      %46 = sbr.rel (0) target = $region17
    $region16: #{_lambda_.14} parent=1 // pred_region
      %47 = dma.done [#allocation4], 128
    $region17: #{_lambda_.14} parent=1 // pred_fallthru
      _
    // Predicated region
    $region18: #{_lambda_.14} parent=1 // pred_check
      _
    $region19: #{_lambda_.14} parent=1 // pred_check_branch
      %49 = sbr.rel (0) target = $region21
    $region20: #{_lambda_.14} parent=1 // pred_region
      %50 = dma.done [#allocation7], 2048
    $region21: #{_lambda_.14} parent=1 // pred_fallthru
      _
    // Predicated region
    $region22: #{_lambda_.14} parent=1 // pred_check
      _
    $region23: #{_lambda_.14} parent=1 // pred_check_branch
      %52 = sbr.rel (0) target = $region25
    $region24: #{_lambda_.14} parent=1 // pred_region
      %53 = dma.done [#allocation7], 32
    $region25: #{_lambda_.14} parent=1 // pred_fallthru
      _
    %p55 = scmp.eq.s32.totalorder 0, 0
    // Predicated region
    $region26: #{_lambda_.14} parent=1 // pred_check
      %p56 = pneg %p55
    $region27: #{_lambda_.14} parent=1 // pred_check_branch
      %58 = sbr.rel (%p56) target = $region29
    $region28: #{_lambda_.14} parent=1 // pred_region
      %59 = vst [vmem:[#allocation2] sm:$0xff] 0.0
      %vm60 = vcmask 261120
      %61 = vst.msk [vmem:[#allocation2 + $0x8] sm:$0xff] %vm60, 0.0
      %62 = vst [vmem:[#allocation2 + $0x10] sm:$0xff] 0.0
      %63 = vst.msk [vmem:[#allocation2 + $0x18] sm:$0xff] %vm60, 0.0
    $region29: #{_lambda_.14} parent=1 // pred_fallthru
      _
    %v64 = vld [vmem:[#allocation2] sm:$0xff]
    %v65 = vld [vmem:[#allocation2 + $0x8] sm:$0xff]
    %v66 = vld [vmem:[#allocation2 + $0x10] sm:$0xff]
    %v67 = vld [vmem:[#allocation2 + $0x18] sm:$0xff]
    %v68 = vld [vmem:[#allocation3] sm:$0xf]
    %v69 = vld [vmem:[#allocation3 + $0x4] sm:$0xf]
    %v70 = vld [vmem:[#allocation6] sm:$0xff]
    %v71 = vld [vmem:[#allocation6 + $0x8] sm:$0xff]
    %v72 = vld [vmem:[#allocation6 + $0x10] sm:$0xff]
    %v73 = vld [vmem:[#allocation6 + $0x18] sm:$0xff]
    %v74 = vld [vmem:[#allocation6 + $0x20] sm:$0xff]
    %v75 = vld [vmem:[#allocation6 + $0x28] sm:$0xff]
    %v76 = vld [vmem:[#allocation6 + $0x30] sm:$0xff]
    %v77 = vld [vmem:[#allocation6 + $0x38] sm:$0xff]
    %v78 = vld [vmem:[#allocation6 + $0x40] sm:$0xff]
    %v79 = vld [vmem:[#allocation6 + $0x48] sm:$0xff]
    %v80 = vld [vmem:[#allocation6 + $0x50] sm:$0xff]
    %v81 = vld [vmem:[#allocation6 + $0x58] sm:$0xff]
    %v82 = vld [vmem:[#allocation6 + $0x60] sm:$0xff]
    %v83 = vld [vmem:[#allocation6 + $0x68] sm:$0xff]
    %v84 = vld [vmem:[#allocation6 + $0x70] sm:$0xff]
    %v85 = vld [vmem:[#allocation6 + $0x78] sm:$0xff]
    %v88 = vunpack.c.l.b16 %v68
    %v89 = vunpack.c.l.b16 %v69
    %v90 = vpack.c.b16 %v89, %v88
    %v108 = vunpack.c.l.b16 %v70
    %v109 = vunpack.c.h.b16 %v70
    %v110 = vunpack.c.l.b16 %v71
    %v111 = vunpack.c.h.b16 %v71
    %v112 = vunpack.c.l.b16 %v72
    %v113 = vunpack.c.h.b16 %v72
    %v114 = vunpack.c.l.b16 %v73
    %v115 = vunpack.c.h.b16 %v73
    %v116 = vunpack.c.l.b16 %v74
    %v117 = vunpack.c.h.b16 %v74
    %v118 = vunpack.c.l.b16 %v75
    %v119 = vunpack.c.h.b16 %v75
    %v120 = vunpack.c.l.b16 %v76
    %v121 = vunpack.c.h.b16 %v76
    %v122 = vunpack.c.l.b16 %v77
    %v123 = vunpack.c.h.b16 %v77
    %v124 = vunpack.c.l.b16 %v78
    %v125 = vunpack.c.h.b16 %v78
    %v126 = vunpack.c.l.b16 %v79
    %v127 = vunpack.c.h.b16 %v79
    %v128 = vunpack.c.l.b16 %v80
    %v129 = vunpack.c.h.b16 %v80
    %v130 = vunpack.c.l.b16 %v81
    %v131 = vunpack.c.h.b16 %v81
    %v132 = vunpack.c.l.b16 %v82
    %v133 = vunpack.c.h.b16 %v82
    %v134 = vunpack.c.l.b16 %v83
    %v135 = vunpack.c.h.b16 %v83
    %v136 = vunpack.c.l.b16 %v84
    %v137 = vunpack.c.h.b16 %v84
    %v138 = vunpack.c.l.b16 %v85
    %v139 = vunpack.c.h.b16 %v85
    %v140 = vpack.c.b16 %v110, %v108
    %v141 = vpack.c.b16 %v111, %v109
    %v142 = vpack.c.b16 %v114, %v112
    %v143 = vpack.c.b16 %v115, %v113
    %v144 = vpack.c.b16 %v118, %v116
    %v145 = vpack.c.b16 %v119, %v117
    %v146 = vpack.c.b16 %v122, %v120
    %v147 = vpack.c.b16 %v123, %v121
    %v148 = vpack.c.b16 %v126, %v124
    %v149 = vpack.c.b16 %v127, %v125
    %v150 = vpack.c.b16 %v130, %v128
    %v151 = vpack.c.b16 %v131, %v129
    %v152 = vpack.c.b16 %v134, %v132
    %v153 = vpack.c.b16 %v135, %v133
    %v154 = vpack.c.b16 %v138, %v136
    %v155 = vpack.c.b16 %v139, %v137
    %172 = vmatprep.subr.bf16.mxu0 %v141
    %173 = vmatpush1.bf16.msra.mxu0 %v140
    %174 = vmatprep.subr.bf16.mxu0 %v143
    %175 = vmatpush1.bf16.msra.mxu0 %v142
    %176 = vmatprep.subr.bf16.mxu0 %v145
    %177 = vmatpush1.bf16.msra.mxu0 %v144
    %178 = vmatprep.subr.bf16.mxu0 %v147
    %179 = vmatpush1.bf16.msra.mxu0 %v146
    %180 = vmatprep.subr.bf16.mxu0 %v149
    %181 = vmatpush1.bf16.msra.mxu0 %v148
    %182 = vmatprep.subr.bf16.mxu0 %v151
    %183 = vmatpush1.bf16.msra.mxu0 %v150
    %184 = vmatprep.subr.bf16.mxu0 %v153
    %185 = vmatpush1.bf16.msra.mxu0 %v152
    %186 = vmatprep.subr.bf16.mxu0 %v155
    %187 = vmatpush1.bf16.msra.mxu0 %v154
    %188 = vmatprep.subr.bf16.mxu0 0
    %189 = vmatpush1.bf16.msra.mxu0 0
    %190 = vmatprep.subr.bf16.mxu0 0
    %191 = vmatpush1.bf16.msra.mxu0 0
    %192 = vmatprep.subr.bf16.mxu0 0
    %193 = vmatpush1.bf16.msra.mxu0 0
    %194 = vmatprep.subr.bf16.mxu0 0
    %195 = vmatpush1.bf16.msra.mxu0 0
    %196 = vmatprep.subr.bf16.mxu0 0
    %197 = vmatpush1.bf16.msra.mxu0 0
    %198 = vmatprep.subr.bf16.mxu0 0
    %199 = vmatpush1.bf16.msra.mxu0 0
    %200 = vmatprep.subr.bf16.mxu0 0
    %201 = vmatpush1.bf16.msra.mxu0 0
    %202 = vmatprep.subr.bf16.mxu0 0
    %203 = vmatpush1.bf16.msra.mxu0 0
    %204 = vmatprep.mubr.bf16.mxu0 0
    %205 = vmatmul.mubr.bf16.gmra.mrb[0].mxu0 %v90
    %v206 = vpop.f32.mrb[0].mxu0
    %v207 = vadd.f32 0.0, %v206
    %v208 = vpop.f32.mrb[0].mxu0
    %v209 = vadd.f32 0.0, %v208
    %v210 = vpop.f32.mrb[0].mxu0
    %v211 = vadd.f32 0.0, %v210
    %v212 = vpop.f32.mrb[0].mxu0
    %v213 = vadd.f32 0.0, %v212
    %214 = vdwg.mxu0
    %v215 = vadd.f32 %v64, %v207
    %v216 = vadd.f32 %v65, %v209
    %v217 = vadd.f32 %v66, %v211
    %v218 = vadd.f32 %v67, %v213
    %219 = vst [vmem:[#allocation2] sm:$0xff] %v215
    %vm220 = vcmask 261120
    %221 = vst.msk [vmem:[#allocation2 + $0x8] sm:$0xff] %vm220, %v216
    %222 = vst [vmem:[#allocation2 + $0x10] sm:$0xff] %v217
    %223 = vst.msk [vmem:[#allocation2 + $0x18] sm:$0xff] %vm220, %v218
    // Predicated region
    $region30: #{_lambda_.14} parent=1 // pred_check
      %p224 = pneg %p55
    $region31: #{_lambda_.14} parent=1 // pred_check_branch
      %226 = sbr.rel (%p224) target = $region33
    $region32: #{_lambda_.14} parent=1 // pred_region
      %v227 = vld [vmem:[#allocation2] sm:$0xff]
      %v228 = vld [vmem:[#allocation2 + $0x8] sm:$0xff]
      %v229 = vld [vmem:[#allocation2 + $0x10] sm:$0xff]
      %v230 = vld [vmem:[#allocation2 + $0x18] sm:$0xff]
      %v231 = vld [vmem:[#allocation8] sm:$0x3]
      %v233 = vlaneseq
      %v234 = vshrl.u32 %v233, 7
      %v235 = vsub.s32 0, %v234
      %v236 = vrot.slane %v231, %v235
      %v237 = vlaneseq
      %v238 = vshrl.u32 %v237, 7
      %v239 = vsub.s32 1, %v238
      %v240 = vrot.slane %v231, %v239
      %v243 = vadd.f32 %v227, %v236
      %v244 = vadd.f32 %v228, %v240
      %v245 = vadd.f32 %v229, %v236
      %v246 = vadd.f32 %v230, %v240
      %247 = vst [vmem:[#allocation9] sm:$0xff] %v243
      %248 = vst.msk [vmem:[#allocation9 + $0x8] sm:$0xff] %vm220, %v244
      %249 = vst [vmem:[#allocation9 + $0x10] sm:$0xff] %v245
      %250 = vst.msk [vmem:[#allocation9 + $0x18] sm:$0xff] %vm220, %v246
    $region33: #{_lambda_.14} parent=1 // pred_fallthru
      _
    // Predicated region
    $region34: #{_lambda_.14} parent=1 // pred_check
      _
    $region35: #{_lambda_.14} parent=1 // pred_check_branch
      %252 = sbr.rel (0) target = $region37
    $region36: #{_lambda_.14} parent=1 // pred_region
      %s254 = ssub.s32 512, 512
      %255 = vsyncadd [#allocation5], %s254
      %s256 = sshll.u32 [#allocation9], 4
      %s257 = int_to_ptr.vmem [resolvable:$true] %s256
      %262 = dma.vmem_to_hbm [thread:$0]  %s257, 512, %s3, [#allocation5], 256, 256, 16
    $region37: #{_lambda_.14} parent=1 // pred_fallthru
      _
    // Predicated region
    $region38: #{_lambda_.14} parent=1 // pred_check
      _
    $region39: #{_lambda_.14} parent=1 // pred_check_branch
      %264 = sbr.rel (0) target = $region41
    $region40: #{_lambda_.14} parent=1 // pred_region
      %265 = dma.done [#allocation5], 512
    $region41: #{_lambda_.14} parent=1 // pred_fallthru
      _
    %266 = vsyncpa [#allocation4], 1
    %267 = vsyncpa [#allocation7], 1
    %268 = vsyncpa [#allocation5], 1

// kernel: _lambda_.15
$region0: #{_lambda_.15}
  #allocation0 [shape = 'u32[]', space=smem, size = 0x4, offset = 0x4, fixed_abs, tag = 'smem constant byte address 0x4 - core index']
  #allocation1 [shape = 'u32[144,128]{1,0:T(1,128)}', space=vmem, size = 0x12000, scoped, tag = 'internal scratch']
  #allocation2 [shape = 'f32[2,8,16,128]{3,2,1,0:T(8,128)}', space=vmem, size = 0x20000, scoped, tag = 'scratch operand']
  #allocation3 [shape = 'f32[2,8,16,128]{3,2,1,0:T(8,128)}', space=vmem, size = 0x20000, scoped, tag = 'scratch operand']
  #allocation4 [shape = 'f32[2,8,16,128]{3,2,1,0:T(8,128)}', space=vmem, size = 0x20000, scoped, tag = 'scratch operand']
  %s0 = inlined_call_operand.hbm [shape: bf16[2,8,128], index: 0, kind: input, shape index: {}]
  %s1 = inlined_call_operand.hbm [shape: f32[2,8,160], index: 1, kind: input, shape index: {}]
  %s2 = inlined_call_operand.hbm [shape: bf16[2,8,128], index: 2, kind: input, shape index: {}]
  %s3 = inlined_call_operand.hbm [shape: f32[16,128], index: 3, kind: input, shape index: {}]
  %s4 = inlined_call_operand.hbm [shape: f32[1,1,128], index: 4, kind: input, shape index: {}]
  %s5 = inlined_call_operand.hbm [shape: bf16[2,8,128], index: 5, kind: output, shape index: {}]
  %s6 = sld [smem:[#allocation0]]
  $region50: #{_lambda_.15} parent=0
    _
  %s8 = ssub.s32 1, %s6
  %s9 = scalar_select 0, %s8, %s6
  $region1: #{_lambda_.15} parent=0
    #allocation5 [shape = 'u8[4096]{0}', space=vmem, size = 0x1000, scoped, tag = 'input window, operand 0, single buffered']
    #allocation6 [shape = 's32[1]{0}', space=sflag, size = 0x4, scoped, tag = 'scoped memory for _lambda_.15']
    #allocation7 [shape = 's32[1]{0}', space=sflag, size = 0x4, scoped, tag = 'scoped memory for _lambda_.15']
    #allocation8 [shape = 'u8[16384]{0}', space=vmem, size = 0x4000, scoped, tag = 'input window, operand 1, single buffered']
    #allocation9 [shape = 's32[1]{0}', space=sflag, size = 0x4, scoped, tag = 'scoped memory for _lambda_.15']
    #allocation10 [shape = 'u8[4096]{0}', space=vmem, size = 0x1000, scoped, tag = 'input window, operand 2, single buffered']
    #allocation11 [shape = 'u8[8192]{0}', space=vmem, size = 0x2000, scoped, tag = 'input window, operand 3, single buffered']
    #allocation12 [shape = 's32[1]{0}', space=sflag, size = 0x4, scoped, tag = 'scoped memory for _lambda_.15']
    #allocation13 [shape = 'u8[512]{0}', space=vmem, size = 0x400, scoped, tag = 'input window, operand 4, single buffered']
    #allocation14 [shape = 'u8[4096]{0}', space=vmem, size = 0x1000, scoped, tag = 'output window, operand 0, single buffered']
    %10 = vsyncpa [#allocation6], 0
    %11 = vsyncpa [#allocation9], 0
    %12 = vsyncpa [#allocation12], 0
    %13 = vsyncpa [#allocation7], 0
    // Predicated region
    $region2: #{_lambda_.15} parent=1 // pred_check
      _
    $region3: #{_lambda_.15} parent=1 // pred_check_branch
      %15 = sbr.rel (0) target = $region5
    $region4: #{_lambda_.15} parent=1 // pred_region
      %s17 = ssub.s32 128, 128
      %18 = vsyncadd [#allocation6], %s17
      %s19 = sshll.u32 [#allocation5], 4
      %s20 = int_to_ptr.vmem [resolvable:$true] %s19
      %25 = dma.hbm_to_vmem [thread:$0]  %s0, 128, %s20, [#allocation6], 64, 64, 4
    $region5: #{_lambda_.15} parent=1 // pred_fallthru
      _
    // Predicated region
    $region6: #{_lambda_.15} parent=1 // pred_check
      _
    $region7: #{_lambda_.15} parent=1 // pred_check_branch
      %27 = sbr.rel (0) target = $region9
    $region8: #{_lambda_.15} parent=1 // pred_region
      %s29 = ssub.s32 512, 512
      %30 = vsyncadd [#allocation9], %s29
      %s31 = sshll.u32 [#allocation8], 4
      %s32 = int_to_ptr.vmem [resolvable:$true] %s31
      %37 = dma.hbm_to_vmem [thread:$0]  %s1, 512, %s32, [#allocation9], 256, 256, 16
    $region9: #{_lambda_.15} parent=1 // pred_fallthru
      _
    // Predicated region
    $region10: #{_lambda_.15} parent=1 // pred_check
      _
    $region11: #{_lambda_.15} parent=1 // pred_check_branch
      %39 = sbr.rel (0) target = $region13
    $region12: #{_lambda_.15} parent=1 // pred_region
      %s41 = ssub.s32 128, 128
      %42 = vsyncadd [#allocation9], %s41
      %s43 = sshll.u32 [#allocation10], 4
      %s44 = int_to_ptr.vmem [resolvable:$true] %s43
      %49 = dma.hbm_to_vmem [thread:$0]  %s2, 128, %s44, [#allocation9], 64, 64, 4
    $region13: #{_lambda_.15} parent=1 // pred_fallthru
      _
    // Predicated region
    $region14: #{_lambda_.15} parent=1 // pred_check
      _
    $region15: #{_lambda_.15} parent=1 // pred_check_branch
      %51 = sbr.rel (0) target = $region17
    $region16: #{_lambda_.15} parent=1 // pred_region
      %s53 = ssub.s32 256, 256
      %54 = vsyncadd [#allocation12], %s53
      %s55 = sshll.u32 [#allocation11], 4
      %s56 = int_to_ptr.vmem [resolvable:$true] %s55
      %61 = dma.hbm_to_vmem [thread:$0]  %s3, 256, %s56, [#allocation12], 128, 128, 8
    $region17: #{_lambda_.15} parent=1 // pred_fallthru
      _
    // Predicated region
    $region18: #{_lambda_.15} parent=1 // pred_check
      _
    $region19: #{_lambda_.15} parent=1 // pred_check_branch
      %63 = sbr.rel (0) target = $region21
    $region20: #{_lambda_.15} parent=1 // pred_region
      %s65 = ssub.s32 16, 16
      %66 = vsyncadd [#allocation12], %s65
      %s68 = sshll.u32 [#allocation13], 4
      %s69 = int_to_ptr.vmem [resolvable:$true] %s68
      %71 = dma.hbm_to_vmem [thread:$0]  %s4, 16, %s69, [#allocation12]
    $region21: #{_lambda_.15} parent=1 // pred_fallthru
      _
    // Predicated region
    $region22: #{_lambda_.15} parent=1 // pred_check
      _
    $region23: #{_lambda_.15} parent=1 // pred_check_branch
      %73 = sbr.rel (0) target = $region25
    $region24: #{_lambda_.15} parent=1 // pred_region
      %74 = dma.done [#allocation6], 128
    $region25: #{_lambda_.15} parent=1 // pred_fallthru
      _
    // Predicated region
    $region26: #{_lambda_.15} parent=1 // pred_check
      _
    $region27: #{_lambda_.15} parent=1 // pred_check_branch
      %76 = sbr.rel (0) target = $region29
    $region28: #{_lambda_.15} parent=1 // pred_region
      %77 = dma.done [#allocation9], 512
    $region29: #{_lambda_.15} parent=1 // pred_fallthru
      _
    // Predicated region
    $region30: #{_lambda_.15} parent=1 // pred_check
      _
    $region31: #{_lambda_.15} parent=1 // pred_check_branch
      %79 = sbr.rel (0) target = $region33
    $region32: #{_lambda_.15} parent=1 // pred_region
      %80 = dma.done [#allocation9], 128
    $region33: #{_lambda_.15} parent=1 // pred_fallthru
      _
    // Predicated region
    $region34: #{_lambda_.15} parent=1 // pred_check
      _
    $region35: #{_lambda_.15} parent=1 // pred_check_branch
      %82 = sbr.rel (0) target = $region37
    $region36: #{_lambda_.15} parent=1 // pred_region
      %83 = dma.done [#allocation12], 256
    $region37: #{_lambda_.15} parent=1 // pred_fallthru
      _
    // Predicated region
    $region38: #{_lambda_.15} parent=1 // pred_check
      _
    $region39: #{_lambda_.15} parent=1 // pred_check_branch
      %85 = sbr.rel (0) target = $region41
    $region40: #{_lambda_.15} parent=1 // pred_region
      %86 = dma.done [#allocation12], 16
    $region41: #{_lambda_.15} parent=1 // pred_fallthru
      _
    %v87 = vld [vmem:[#allocation5] sm:$0xf]
    %v88 = vld [vmem:[#allocation5 + $0x4] sm:$0xf]
    %v89 = vunpack.c.l.bf16 %v87
    %v90 = vunpack.c.l.bf16 %v88
    %v91 = vld [vmem:[#allocation10] sm:$0xf]
    %v92 = vld [vmem:[#allocation10 + $0x4] sm:$0xf]
    %v93 = vunpack.c.l.bf16 %v91
    %v94 = vunpack.c.l.bf16 %v92
    %v95 = vld [vmem:[#allocation8] sm:$0xff]
    %v96 = vld [vmem:[#allocation8 + $0x8] sm:$0xff]
    %v97 = vld [vmem:[#allocation8 + $0x10] sm:$0xff]
    %v98 = vld [vmem:[#allocation8 + $0x18] sm:$0xff]
    %v99 = vmax.f32 %v95, 0.0
    %v100 = vmax.f32 %v97, 0.0
    %vm101 = vcmp.ne.f32.partialorder %v95, %v95
    %vm102 = vcmp.ne.f32.partialorder %v97, %v97
    %v103 = vadd.f32 %v95, 0.0
    %v104 = vadd.f32 %v97, 0.0
    %v105 = vand.u32 2147483647, %v95
    %v106 = vand.u32 2147483647, %v97
    %v107 = vsub.f32 0.0, %v105
    %v108 = vsub.f32 0.0, %v106
    %v109 = vmul.f32 %v107, 1.442695
    %v110 = vpow.pop %v109
    %v111 = vmul.f32 %v108, 1.442695
    %v112 = vpow.pop %v111
    %v113 = vadd.f32 %v110, 1.0
    %v114 = vlog2.pop %v113
    %v115 = vmul.f32 %v114, 0.6931472
    %v116 = vmul.f32 -0.5, %v110
    %v117 = vadd.f32 %v116, 1.0
    %v118 = vmul.f32 %v117, %v110
    %v119 = vand.u32 2147483647, %v110
    %vm120 = vcmp.lt.f32.partialorder %v119, 0.0004427343
    %v121 = vsel %vm120, %v118, %v115
    %v122 = vadd.f32 %v112, 1.0
    %v123 = vlog2.pop %v122
    %v124 = vmul.f32 %v123, 0.6931472
    %v125 = vmul.f32 -0.5, %v112
    %v126 = vadd.f32 %v125, 1.0
    %v127 = vmul.f32 %v126, %v112
    %v128 = vand.u32 2147483647, %v112
    %vm129 = vcmp.lt.f32.partialorder %v128, 0.0004427343
    %v130 = vsel %vm129, %v127, %v124
    %v131 = vadd.f32 %v99, %v121
    %v132 = vadd.f32 %v100, %v130
    %v133 = vsel %vm101, %v103, %v131
    %v134 = vsel %vm102, %v104, %v132
    %v135 = vld [vmem:[#allocation11] sm:$0xff]
    %v136 = vld [vmem:[#allocation11 + $0x8] sm:$0xff]
    %v139 = vcombine.high %v133, %v133
    %v141 = vunpack.c.l.s4 1966171168
    %v142 = vunpack.c.0.s8 %v141
    %v143 = vlaneseq
    %v144 = vshrl.u32 %v143, 7
    %v145 = vsub.s32 %v142, %v144
    %v146 = vrot.slane %v133, %v145
    %v148 = vunpack.c.l.s4 1966171168
    %v149 = vunpack.c.0.s8 %v148
    %v150 = vlaneseq
    %v151 = vshrl.u32 %v150, 7
    %v152 = vsub.s32 %v149, %v151
    %v153 = vrot.slane %v139, %v152
    %v154 = vcombine.high %v146, %v146
    %v155 = vcombine.high %v153, %v153
    %v157 = vunpack.c.l.s4 1966171168
    %v158 = vunpack.c.0.s8 %v157
    %v159 = vlaneseq
    %v160 = vshrl.u32 %v159, 7
    %v161 = vsub.s32 %v158, %v160
    %v162 = vrot.slane %v146, %v161
    %v164 = vunpack.c.l.s4 1966171168
    %v165 = vunpack.c.0.s8 %v164
    %v166 = vlaneseq
    %v167 = vshrl.u32 %v166, 7
    %v168 = vsub.s32 %v165, %v167
    %v169 = vrot.slane %v153, %v168
    %v171 = vunpack.c.l.s4 1966171168
    %v172 = vunpack.c.0.s8 %v171
    %v173 = vlaneseq
    %v174 = vshrl.u32 %v173, 7
    %v175 = vsub.s32 %v172, %v174
    %v176 = vrot.slane %v154, %v175
    %v178 = vunpack.c.l.s4 1966171168
    %v179 = vunpack.c.0.s8 %v178
    %v180 = vlaneseq
    %v181 = vshrl.u32 %v180, 7
    %v182 = vsub.s32 %v179, %v181
    %v183 = vrot.slane %v155, %v182
    %v184 = vcombine.high %v162, %v162
    %v185 = vcombine.high %v169, %v169
    %v186 = vcombine.high %v176, %v176
    %v187 = vcombine.high %v183, %v183
    %v188 = vcombine.high %v134, %v134
    %v190 = vunpack.c.l.s4 1966171168
    %v191 = vunpack.c.0.s8 %v190
    %v192 = vlaneseq
    %v193 = vshrl.u32 %v192, 7
    %v194 = vsub.s32 %v191, %v193
    %v195 = vrot.slane %v134, %v194
    %v197 = vunpack.c.l.s4 1966171168
    %v198 = vunpack.c.0.s8 %v197
    %v199 = vlaneseq
    %v200 = vshrl.u32 %v199, 7
    %v201 = vsub.s32 %v198, %v200
    %v202 = vrot.slane %v188, %v201
    %v203 = vcombine.high %v195, %v195
    %v204 = vcombine.high %v202, %v202
    %v206 = vunpack.c.l.s4 1966171168
    %v207 = vunpack.c.0.s8 %v206
    %v208 = vlaneseq
    %v209 = vshrl.u32 %v208, 7
    %v210 = vsub.s32 %v207, %v209
    %v211 = vrot.slane %v195, %v210
    %v213 = vunpack.c.l.s4 1966171168
    %v214 = vunpack.c.0.s8 %v213
    %v215 = vlaneseq
    %v216 = vshrl.u32 %v215, 7
    %v217 = vsub.s32 %v214, %v216
    %v218 = vrot.slane %v202, %v217
    %v220 = vunpack.c.l.s4 1966171168
    %v221 = vunpack.c.0.s8 %v220
    %v222 = vlaneseq
    %v223 = vshrl.u32 %v222, 7
    %v224 = vsub.s32 %v221, %v223
    %v225 = vrot.slane %v203, %v224
    %v227 = vunpack.c.l.s4 1966171168
    %v228 = vunpack.c.0.s8 %v227
    %v229 = vlaneseq
    %v230 = vshrl.u32 %v229, 7
    %v231 = vsub.s32 %v228, %v230
    %v232 = vrot.slane %v204, %v231
    %v233 = vcombine.high %v211, %v211
    %v234 = vcombine.high %v218, %v218
    %v235 = vcombine.high %v225, %v225
    %v236 = vcombine.high %v232, %v232
    %v237 = vlaneseq
    %v238 = vshrl.u32 %v237, 7
    %v239 = vsub.s32 0, %v238
    %v240 = vrot.slane %v162, %v239
    %v241 = vlaneseq
    %v242 = vshrl.u32 %v241, 7
    %v243 = vsub.s32 0, %v242
    %v244 = vrot.slane %v176, %v243
    %v245 = vlaneseq
    %v246 = vshrl.u32 %v245, 7
    %v247 = vsub.s32 0, %v246
    %v248 = vrot.slane %v184, %v247
    %v249 = vlaneseq
    %v250 = vshrl.u32 %v249, 7
    %v251 = vsub.s32 0, %v250
    %v252 = vrot.slane %v186, %v251
    %v253 = vlaneseq
    %v254 = vshrl.u32 %v253, 7
    %v255 = vsub.s32 0, %v254
    %v256 = vrot.slane %v169, %v255
    %v257 = vlaneseq
    %v258 = vshrl.u32 %v257, 7
    %v259 = vsub.s32 0, %v258
    %v260 = vrot.slane %v183, %v259
    %v261 = vlaneseq
    %v262 = vshrl.u32 %v261, 7
    %v263 = vsub.s32 0, %v262
    %v264 = vrot.slane %v185, %v263
    %v265 = vlaneseq
    %v266 = vshrl.u32 %v265, 7
    %v267 = vsub.s32 0, %v266
    %v268 = vrot.slane %v187, %v267
    %v269 = vlaneseq
    %v270 = vshrl.u32 %v269, 7
    %v271 = vsub.s32 0, %v270
    %v272 = vrot.slane %v211, %v271
    %v273 = vlaneseq
    %v274 = vshrl.u32 %v273, 7
    %v275 = vsub.s32 0, %v274
    %v276 = vrot.slane %v225, %v275
    %v277 = vlaneseq
    %v278 = vshrl.u32 %v277, 7
    %v279 = vsub.s32 0, %v278
    %v280 = vrot.slane %v233, %v279
    %v281 = vlaneseq
    %v282 = vshrl.u32 %v281, 7
    %v283 = vsub.s32 0, %v282
    %v284 = vrot.slane %v235, %v283
    %v285 = vlaneseq
    %v286 = vshrl.u32 %v285, 7
    %v287 = vsub.s32 0, %v286
    %v288 = vrot.slane %v218, %v287
    %v289 = vlaneseq
    %v290 = vshrl.u32 %v289, 7
    %v291 = vsub.s32 0, %v290
    %v292 = vrot.slane %v232, %v291
    %v293 = vlaneseq
    %v294 = vshrl.u32 %v293, 7
    %v295 = vsub.s32 0, %v294
    %v296 = vrot.slane %v234, %v295
    %v297 = vlaneseq
    %v298 = vshrl.u32 %v297, 7
    %v299 = vsub.s32 0, %v298
    %v300 = vrot.slane %v236, %v299
    %v317 = vmul.f32 %v240, %v135
    %v318 = vmul.f32 %v240, %v136
    %v319 = vmul.f32 %v244, %v135
    %v320 = vmul.f32 %v244, %v136
    %v321 = vmul.f32 %v248, %v135
    %v322 = vmul.f32 %v248, %v136
    %v323 = vmul.f32 %v252, %v135
    %v324 = vmul.f32 %v252, %v136
    %v325 = vmul.f32 %v256, %v135
    %v326 = vmul.f32 %v256, %v136
    %v327 = vmul.f32 %v260, %v135
    %v328 = vmul.f32 %v260, %v136
    %v329 = vmul.f32 %v264, %v135
    %v330 = vmul.f32 %v264, %v136
    %v331 = vmul.f32 %v268, %v135
    %v332 = vmul.f32 %v268, %v136
    %v333 = vmul.f32 %v272, %v135
    %v334 = vmul.f32 %v272, %v136
    %v335 = vmul.f32 %v276, %v135
    %v336 = vmul.f32 %v276, %v136
    %v337 = vmul.f32 %v280, %v135
    %v338 = vmul.f32 %v280, %v136
    %v339 = vmul.f32 %v284, %v135
    %v340 = vmul.f32 %v284, %v136
    %v341 = vmul.f32 %v288, %v135
    %v342 = vmul.f32 %v288, %v136
    %v343 = vmul.f32 %v292, %v135
    %v344 = vmul.f32 %v292, %v136
    %v345 = vmul.f32 %v296, %v135
    %v346 = vmul.f32 %v296, %v136
    %v347 = vmul.f32 %v300, %v135
    %v348 = vmul.f32 %v300, %v136
    %v349 = vmul.f32 %v317, 1.442695
    %v350 = vpow.pop %v349
    %v351 = vmul.f32 %v318, 1.442695
    %v352 = vpow.pop %v351
    %v353 = vmul.f32 %v319, 1.442695
    %v354 = vpow.pop %v353
    %v355 = vmul.f32 %v320, 1.442695
    %v356 = vpow.pop %v355
    %v357 = vmul.f32 %v321, 1.442695
    %v358 = vpow.pop %v357
    %v359 = vmul.f32 %v322, 1.442695
    %v360 = vpow.pop %v359
    %v361 = vmul.f32 %v323, 1.442695
    %v362 = vpow.pop %v361
    %v363 = vmul.f32 %v324, 1.442695
    %v364 = vpow.pop %v363
    %v365 = vmul.f32 %v325, 1.442695
    %v366 = vpow.pop %v365
    %v367 = vmul.f32 %v326, 1.442695
    %v368 = vpow.pop %v367
    %v369 = vmul.f32 %v327, 1.442695
    %v370 = vpow.pop %v369
    %v371 = vmul.f32 %v328, 1.442695
    %v372 = vpow.pop %v371
    %v373 = vmul.f32 %v329, 1.442695
    %v374 = vpow.pop %v373
    %v375 = vmul.f32 %v330, 1.442695
    %v376 = vpow.pop %v375
    %v377 = vmul.f32 %v331, 1.442695
    %v378 = vpow.pop %v377
    %v379 = vmul.f32 %v332, 1.442695
    %v380 = vpow.pop %v379
    %v381 = vmul.f32 %v333, 1.442695
    %v382 = vpow.pop %v381
    %v383 = vmul.f32 %v334, 1.442695
    %v384 = vpow.pop %v383
    %v385 = vmul.f32 %v335, 1.442695
    %v386 = vpow.pop %v385
    %v387 = vmul.f32 %v336, 1.442695
    %v388 = vpow.pop %v387
    %v389 = vmul.f32 %v337, 1.442695
    %v390 = vpow.pop %v389
    %v391 = vmul.f32 %v338, 1.442695
    %v392 = vpow.pop %v391
    %v393 = vmul.f32 %v339, 1.442695
    %v394 = vpow.pop %v393
    %v395 = vmul.f32 %v340, 1.442695
    %v396 = vpow.pop %v395
    %v397 = vmul.f32 %v341, 1.442695
    %v398 = vpow.pop %v397
    %v399 = vmul.f32 %v342, 1.442695
    %v400 = vpow.pop %v399
    %v401 = vmul.f32 %v343, 1.442695
    %v402 = vpow.pop %v401
    %v403 = vmul.f32 %v344, 1.442695
    %v404 = vpow.pop %v403
    %v405 = vmul.f32 %v345, 1.442695
    %v406 = vpow.pop %v405
    %v407 = vmul.f32 %v346, 1.442695
    %v408 = vpow.pop %v407
    %v409 = vmul.f32 %v347, 1.442695
    %v410 = vpow.pop %v409
    %v411 = vmul.f32 %v348, 1.442695
    %v412 = vpow.pop %v411
    %413 = vst [vmem:[#allocation2] sm:$0xff] %v350
    %414 = vst [vmem:[#allocation2 + $0x8] sm:$0xff] %v352
    %415 = vst [vmem:[#allocation2 + $0x10] sm:$0xff] %v354
    %416 = vst [vmem:[#allocation2 + $0x18] sm:$0xff] %v356
    %417 = vst [vmem:[#allocation2 + $0x20] sm:$0xff] %v358
    %418 = vst [vmem:[#allocation2 + $0x28] sm:$0xff] %v360
    %419 = vst [vmem:[#allocation2 + $0x30] sm:$0xff] %v362
    %420 = vst [vmem:[#allocation2 + $0x38] sm:$0xff] %v364
    %421 = vst [vmem:[#allocation2 + $0x40] sm:$0xff] %v366
    %422 = vst [vmem:[#allocation2 + $0x48] sm:$0xff] %v368
    %423 = vst [vmem:[#allocation2 + $0x50] sm:$0xff] %v370
    %424 = vst [vmem:[#allocation2 + $0x58] sm:$0xff] %v372
    %425 = vst [vmem:[#allocation2 + $0x60] sm:$0xff] %v374
    %426 = vst [vmem:[#allocation2 + $0x68] sm:$0xff] %v376
    %427 = vst [vmem:[#allocation2 + $0x70] sm:$0xff] %v378
    %428 = vst [vmem:[#allocation2 + $0x78] sm:$0xff] %v380
    %429 = vst [vmem:[#allocation2 + $0x80] sm:$0xff] %v382
    %430 = vst [vmem:[#allocation2 + $0x88] sm:$0xff] %v384
    %431 = vst [vmem:[#allocation2 + $0x90] sm:$0xff] %v386
    %432 = vst [vmem:[#allocation2 + $0x98] sm:$0xff] %v388
    %433 = vst [vmem:[#allocation2 + $0xa0] sm:$0xff] %v390
    %434 = vst [vmem:[#allocation2 + $0xa8] sm:$0xff] %v392
    %435 = vst [vmem:[#allocation2 + $0xb0] sm:$0xff] %v394
    %436 = vst [vmem:[#allocation2 + $0xb8] sm:$0xff] %v396
    %437 = vst [vmem:[#allocation2 + $0xc0] sm:$0xff] %v398
    %438 = vst [vmem:[#allocation2 + $0xc8] sm:$0xff] %v400
    %439 = vst [vmem:[#allocation2 + $0xd0] sm:$0xff] %v402
    %440 = vst [vmem:[#allocation2 + $0xd8] sm:$0xff] %v404
    %441 = vst [vmem:[#allocation2 + $0xe0] sm:$0xff] %v406
    %442 = vst [vmem:[#allocation2 + $0xe8] sm:$0xff] %v408
    %443 = vst [vmem:[#allocation2 + $0xf0] sm:$0xff] %v410
    %444 = vst [vmem:[#allocation2 + $0xf8] sm:$0xff] %v412
    %v445 = vmul.f32 %v133, %v89
    %v446 = vmul.f32 %v134, %v90
    %v449 = vcombine.high %v445, %v445
    %v451 = vunpack.c.l.s4 1966171168
    %v452 = vunpack.c.0.s8 %v451
    %v453 = vlaneseq
    %v454 = vshrl.u32 %v453, 7
    %v455 = vsub.s32 %v452, %v454
    %v456 = vrot.slane %v445, %v455
    %v458 = vunpack.c.l.s4 1966171168
    %v459 = vunpack.c.0.s8 %v458
    %v460 = vlaneseq
    %v461 = vshrl.u32 %v460, 7
    %v462 = vsub.s32 %v459, %v461
    %v463 = vrot.slane %v449, %v462
    %v464 = vcombine.high %v456, %v456
    %v465 = vcombine.high %v463, %v463
    %v467 = vunpack.c.l.s4 1966171168
    %v468 = vunpack.c.0.s8 %v467
    %v469 = vlaneseq
    %v470 = vshrl.u32 %v469, 7
    %v471 = vsub.s32 %v468, %v470
    %v472 = vrot.slane %v456, %v471
    %v474 = vunpack.c.l.s4 1966171168
    %v475 = vunpack.c.0.s8 %v474
    %v476 = vlaneseq
    %v477 = vshrl.u32 %v476, 7
    %v478 = vsub.s32 %v475, %v477
    %v479 = vrot.slane %v463, %v478
    %v481 = vunpack.c.l.s4 1966171168
    %v482 = vunpack.c.0.s8 %v481
    %v483 = vlaneseq
    %v484 = vshrl.u32 %v483, 7
    %v485 = vsub.s32 %v482, %v484
    %v486 = vrot.slane %v464, %v485
    %v488 = vunpack.c.l.s4 1966171168
    %v489 = vunpack.c.0.s8 %v488
    %v490 = vlaneseq
    %v491 = vshrl.u32 %v490, 7
    %v492 = vsub.s32 %v489, %v491
    %v493 = vrot.slane %v465, %v492
    %v494 = vcombine.high %v472, %v472
    %v495 = vcombine.high %v479, %v479
    %v496 = vcombine.high %v486, %v486
    %v497 = vcombine.high %v493, %v493
    %v498 = vcombine.high %v446, %v446
    %v500 = vunpack.c.l.s4 1966171168
    %v501 = vunpack.c.0.s8 %v500
    %v502 = vlaneseq
    %v503 = vshrl.u32 %v502, 7
    %v504 = vsub.s32 %v501, %v503
    %v505 = vrot.slane %v446, %v504
    %v507 = vunpack.c.l.s4 1966171168
    %v508 = vunpack.c.0.s8 %v507
    %v509 = vlaneseq
    %v510 = vshrl.u32 %v509, 7
    %v511 = vsub.s32 %v508, %v510
    %v512 = vrot.slane %v498, %v511
    %v513 = vcombine.high %v505, %v505
    %v514 = vcombine.high %v512, %v512
    %v516 = vunpack.c.l.s4 1966171168
    %v517 = vunpack.c.0.s8 %v516
    %v518 = vlaneseq
    %v519 = vshrl.u32 %v518, 7
    %v520 = vsub.s32 %v517, %v519
    %v521 = vrot.slane %v505, %v520
    %v523 = vunpack.c.l.s4 1966171168
    %v524 = vunpack.c.0.s8 %v523
    %v525 = vlaneseq
    %v526 = vshrl.u32 %v525, 7
    %v527 = vsub.s32 %v524, %v526
    %v528 = vrot.slane %v512, %v527
    %v530 = vunpack.c.l.s4 1966171168
    %v531 = vunpack.c.0.s8 %v530
    %v532 = vlaneseq
    %v533 = vshrl.u32 %v532, 7
    %v534 = vsub.s32 %v531, %v533
    %v535 = vrot.slane %v513, %v534
    %v537 = vunpack.c.l.s4 1966171168
    %v538 = vunpack.c.0.s8 %v537
    %v539 = vlaneseq
    %v540 = vshrl.u32 %v539, 7
    %v541 = vsub.s32 %v538, %v540
    %v542 = vrot.slane %v514, %v541
    %v543 = vcombine.high %v521, %v521
    %v544 = vcombine.high %v528, %v528
    %v545 = vcombine.high %v535, %v535
    %v546 = vcombine.high %v542, %v542
    %v547 = vlaneseq
    %v548 = vshrl.u32 %v547, 7
    %v549 = vsub.s32 0, %v548
    %v550 = vrot.slane %v96, %v549
    %552 = vbcast.lane.b32.xlu0 %v550, 256
    %v553 = vpop.permute.xlu0 %552
    %s555 = sor.u32 256, 8
    %556 = vbcast.lane.b32.xlu0 %v550, %s555
    %v557 = vpop.permute.xlu0 %556
    %v558 = vlaneseq
    %v559 = vshrl.u32 %v558, 7
    %v560 = vsub.s32 1, %v559
    %v561 = vrot.slane %v96, %v560
    %563 = vbcast.lane.b32.xlu0 %v561, 256
    %v564 = vpop.permute.xlu0 %563
    %s566 = sor.u32 256, 8
    %567 = vbcast.lane.b32.xlu0 %v561, %s566
    %v568 = vpop.permute.xlu0 %567
    %v569 = vlaneseq
    %v570 = vshrl.u32 %v569, 7
    %v571 = vsub.s32 2, %v570
    %v572 = vrot.slane %v96, %v571
    %574 = vbcast.lane.b32.xlu0 %v572, 256
    %v575 = vpop.permute.xlu0 %574
    %s577 = sor.u32 256, 8
    %578 = vbcast.lane.b32.xlu0 %v572, %s577
    %v579 = vpop.permute.xlu0 %578
    %v580 = vlaneseq
    %v581 = vshrl.u32 %v580, 7
    %v582 = vsub.s32 3, %v581
    %v583 = vrot.slane %v96, %v582
    %585 = vbcast.lane.b32.xlu0 %v583, 256
    %v586 = vpop.permute.xlu0 %585
    %s588 = sor.u32 256, 8
    %589 = vbcast.lane.b32.xlu0 %v583, %s588
    %v590 = vpop.permute.xlu0 %589
    %v591 = vlaneseq
    %v592 = vshrl.u32 %v591, 7
    %v593 = vsub.s32 4, %v592
    %v594 = vrot.slane %v96, %v593
    %596 = vbcast.lane.b32.xlu0 %v594, 256
    %v597 = vpop.permute.xlu0 %596
    %s599 = sor.u32 256, 8
    %600 = vbcast.lane.b32.xlu0 %v594, %s599
    %v601 = vpop.permute.xlu0 %600
    %v602 = vlaneseq
    %v603 = vshrl.u32 %v602, 7
    %v604 = vsub.s32 5, %v603
    %v605 = vrot.slane %v96, %v604
    %607 = vbcast.lane.b32.xlu0 %v605, 256
    %v608 = vpop.permute.xlu0 %607
    %s610 = sor.u32 256, 8
    %611 = vbcast.lane.b32.xlu0 %v605, %s610
    %v612 = vpop.permute.xlu0 %611
    %v613 = vlaneseq
    %v614 = vshrl.u32 %v613, 7
    %v615 = vsub.s32 6, %v614
    %v616 = vrot.slane %v96, %v615
    %618 = vbcast.lane.b32.xlu0 %v616, 256
    %v619 = vpop.permute.xlu0 %618
    %s621 = sor.u32 256, 8
    %622 = vbcast.lane.b32.xlu0 %v616, %s621
    %v623 = vpop.permute.xlu0 %622
    %v624 = vlaneseq
    %v625 = vshrl.u32 %v624, 7
    %v626 = vsub.s32 7, %v625
    %v627 = vrot.slane %v96, %v626
    %629 = vbcast.lane.b32.xlu0 %v627, 256
    %v630 = vpop.permute.xlu0 %629
    %s632 = sor.u32 256, 8
    %633 = vbcast.lane.b32.xlu0 %v627, %s632
    %v634 = vpop.permute.xlu0 %633
    %v635 = vlaneseq
    %v636 = vshrl.u32 %v635, 7
    %v637 = vsub.s32 0, %v636
    %v638 = vrot.slane %v98, %v637
    %640 = vbcast.lane.b32.xlu0 %v638, 256
    %v641 = vpop.permute.xlu0 %640
    %s643 = sor.u32 256, 8
    %644 = vbcast.lane.b32.xlu0 %v638, %s643
    %v645 = vpop.permute.xlu0 %644
    %v646 = vlaneseq
    %v647 = vshrl.u32 %v646, 7
    %v648 = vsub.s32 1, %v647
    %v649 = vrot.slane %v98, %v648
    %651 = vbcast.lane.b32.xlu0 %v649, 256
    %v652 = vpop.permute.xlu0 %651
    %s654 = sor.u32 256, 8
    %655 = vbcast.lane.b32.xlu0 %v649, %s654
    %v656 = vpop.permute.xlu0 %655
    %v657 = vlaneseq
    %v658 = vshrl.u32 %v657, 7
    %v659 = vsub.s32 2, %v658
    %v660 = vrot.slane %v98, %v659
    %662 = vbcast.lane.b32.xlu0 %v660, 256
    %v663 = vpop.permute.xlu0 %662
    %s665 = sor.u32 256, 8
    %666 = vbcast.lane.b32.xlu0 %v660, %s665
    %v667 = vpop.permute.xlu0 %666
    %v668 = vlaneseq
    %v669 = vshrl.u32 %v668, 7
    %v670 = vsub.s32 3, %v669
    %v671 = vrot.slane %v98, %v670
    %673 = vbcast.lane.b32.xlu0 %v671, 256
    %v674 = vpop.permute.xlu0 %673
    %s676 = sor.u32 256, 8
    %677 = vbcast.lane.b32.xlu0 %v671, %s676
    %v678 = vpop.permute.xlu0 %677
    %v679 = vlaneseq
    %v680 = vshrl.u32 %v679, 7
    %v681 = vsub.s32 4, %v680
    %v682 = vrot.slane %v98, %v681
    %684 = vbcast.lane.b32.xlu0 %v682, 256
    %v685 = vpop.permute.xlu0 %684
    %s687 = sor.u32 256, 8
    %688 = vbcast.lane.b32.xlu0 %v682, %s687
    %v689 = vpop.permute.xlu0 %688
    %v690 = vlaneseq
    %v691 = vshrl.u32 %v690, 7
    %v692 = vsub.s32 5, %v691
    %v693 = vrot.slane %v98, %v692
    %695 = vbcast.lane.b32.xlu0 %v693, 256
    %v696 = vpop.permute.xlu0 %695
    %s698 = sor.u32 256, 8
    %699 = vbcast.lane.b32.xlu0 %v693, %s698
    %v700 = vpop.permute.xlu0 %699
    %v701 = vlaneseq
    %v702 = vshrl.u32 %v701, 7
    %v703 = vsub.s32 6, %v702
    %v704 = vrot.slane %v98, %v703
    %706 = vbcast.lane.b32.xlu0 %v704, 256
    %v707 = vpop.permute.xlu0 %706
    %s709 = sor.u32 256, 8
    %710 = vbcast.lane.b32.xlu0 %v704, %s709
    %v711 = vpop.permute.xlu0 %710
    %v712 = vlaneseq
    %v713 = vshrl.u32 %v712, 7
    %v714 = vsub.s32 7, %v713
    %v715 = vrot.slane %v98, %v714
    %717 = vbcast.lane.b32.xlu0 %v715, 256
    %v718 = vpop.permute.xlu0 %717
    %s720 = sor.u32 256, 8
    %721 = vbcast.lane.b32.xlu0 %v715, %s720
    %v722 = vpop.permute.xlu0 %721
    %v723 = vlaneseq
    %v724 = vshrl.u32 %v723, 7
    %v725 = vsub.s32 0, %v724
    %v726 = vrot.slane %v472, %v725
    %v727 = vlaneseq
    %v728 = vshrl.u32 %v727, 7
    %v729 = vsub.s32 0, %v728
    %v730 = vrot.slane %v486, %v729
    %v731 = vlaneseq
    %v732 = vshrl.u32 %v731, 7
    %v733 = vsub.s32 0, %v732
    %v734 = vrot.slane %v494, %v733
    %v735 = vlaneseq
    %v736 = vshrl.u32 %v735, 7
    %v737 = vsub.s32 0, %v736
    %v738 = vrot.slane %v496, %v737
    %v739 = vlaneseq
    %v740 = vshrl.u32 %v739, 7
    %v741 = vsub.s32 0, %v740
    %v742 = vrot.slane %v479, %v741
    %v743 = vlaneseq
    %v744 = vshrl.u32 %v743, 7
    %v745 = vsub.s32 0, %v744
    %v746 = vrot.slane %v493, %v745
    %v747 = vlaneseq
    %v748 = vshrl.u32 %v747, 7
    %v749 = vsub.s32 0, %v748
    %v750 = vrot.slane %v495, %v749
    %v751 = vlaneseq
    %v752 = vshrl.u32 %v751, 7
    %v753 = vsub.s32 0, %v752
    %v754 = vrot.slane %v497, %v753
    %v755 = vlaneseq
    %v756 = vshrl.u32 %v755, 7
    %v757 = vsub.s32 0, %v756
    %v758 = vrot.slane %v521, %v757
    %v759 = vlaneseq
    %v760 = vshrl.u32 %v759, 7
    %v761 = vsub.s32 0, %v760
    %v762 = vrot.slane %v535, %v761
    %v763 = vlaneseq
    %v764 = vshrl.u32 %v763, 7
    %v765 = vsub.s32 0, %v764
    %v766 = vrot.slane %v543, %v765
    %v767 = vlaneseq
    %v768 = vshrl.u32 %v767, 7
    %v769 = vsub.s32 0, %v768
    %v770 = vrot.slane %v545, %v769
    %v771 = vlaneseq
    %v772 = vshrl.u32 %v771, 7
    %v773 = vsub.s32 0, %v772
    %v774 = vrot.slane %v528, %v773
    %v775 = vlaneseq
    %v776 = vshrl.u32 %v775, 7
    %v777 = vsub.s32 0, %v776
    %v778 = vrot.slane %v542, %v777
    %v779 = vlaneseq
    %v780 = vshrl.u32 %v779, 7
    %v781 = vsub.s32 0, %v780
    %v782 = vrot.slane %v544, %v781
    %v783 = vlaneseq
    %v784 = vshrl.u32 %v783, 7
    %v785 = vsub.s32 0, %v784
    %v786 = vrot.slane %v546, %v785
    %v803 = vmul.f32 %v726, %v553
    %v804 = vmul.f32 %v726, %v557
    %v805 = vmul.f32 %v730, %v564
    %v806 = vmul.f32 %v730, %v568
    %v807 = vmul.f32 %v734, %v575
    %v808 = vmul.f32 %v734, %v579
    %v809 = vmul.f32 %v738, %v586
    %v810 = vmul.f32 %v738, %v590
    %v811 = vmul.f32 %v742, %v597
    %v812 = vmul.f32 %v742, %v601
    %v813 = vmul.f32 %v746, %v608
    %v814 = vmul.f32 %v746, %v612
    %v815 = vmul.f32 %v750, %v619
    %v816 = vmul.f32 %v750, %v623
    %v817 = vmul.f32 %v754, %v630
    %v818 = vmul.f32 %v754, %v634
    %v819 = vmul.f32 %v758, %v641
    %v820 = vmul.f32 %v758, %v645
    %v821 = vmul.f32 %v762, %v652
    %v822 = vmul.f32 %v762, %v656
    %v823 = vmul.f32 %v766, %v663
    %v824 = vmul.f32 %v766, %v667
    %v825 = vmul.f32 %v770, %v674
    %v826 = vmul.f32 %v770, %v678
    %v827 = vmul.f32 %v774, %v685
    %v828 = vmul.f32 %v774, %v689
    %v829 = vmul.f32 %v778, %v696
    %v830 = vmul.f32 %v778, %v700
    %v831 = vmul.f32 %v782, %v707
    %v832 = vmul.f32 %v782, %v711
    %v833 = vmul.f32 %v786, %v718
    %v834 = vmul.f32 %v786, %v722
    %835 = vst [vmem:[#allocation3] sm:$0xff] %v803
    %836 = vst [vmem:[#allocation3 + $0x8] sm:$0xff] %v804
    %837 = vst [vmem:[#allocation3 + $0x10] sm:$0xff] %v805
    %838 = vst [vmem:[#allocation3 + $0x18] sm:$0xff] %v806
    %839 = vst [vmem:[#allocation3 + $0x20] sm:$0xff] %v807
    %840 = vst [vmem:[#allocation3 + $0x28] sm:$0xff] %v808
    %841 = vst [vmem:[#allocation3 + $0x30] sm:$0xff] %v809
    %842 = vst [vmem:[#allocation3 + $0x38] sm:$0xff] %v810
    %843 = vst [vmem:[#allocation3 + $0x40] sm:$0xff] %v811
    %844 = vst [vmem:[#allocation3 + $0x48] sm:$0xff] %v812
    %845 = vst [vmem:[#allocation3 + $0x50] sm:$0xff] %v813
    %846 = vst [vmem:[#allocation3 + $0x58] sm:$0xff] %v814
    %847 = vst [vmem:[#allocation3 + $0x60] sm:$0xff] %v815
    %848 = vst [vmem:[#allocation3 + $0x68] sm:$0xff] %v816
    %849 = vst [vmem:[#allocation3 + $0x70] sm:$0xff] %v817
    %850 = vst [vmem:[#allocation3 + $0x78] sm:$0xff] %v818
    %851 = vst [vmem:[#allocation3 + $0x80] sm:$0xff] %v819
    %852 = vst [vmem:[#allocation3 + $0x88] sm:$0xff] %v820
    %853 = vst [vmem:[#allocation3 + $0x90] sm:$0xff] %v821
    %854 = vst [vmem:[#allocation3 + $0x98] sm:$0xff] %v822
    %855 = vst [vmem:[#allocation3 + $0xa0] sm:$0xff] %v823
    %856 = vst [vmem:[#allocation3 + $0xa8] sm:$0xff] %v824
    %857 = vst [vmem:[#allocation3 + $0xb0] sm:$0xff] %v825
    %858 = vst [vmem:[#allocation3 + $0xb8] sm:$0xff] %v826
    %859 = vst [vmem:[#allocation3 + $0xc0] sm:$0xff] %v827
    %860 = vst [vmem:[#allocation3 + $0xc8] sm:$0xff] %v828
    %861 = vst [vmem:[#allocation3 + $0xd0] sm:$0xff] %v829
    %862 = vst [vmem:[#allocation3 + $0xd8] sm:$0xff] %v830
    %863 = vst [vmem:[#allocation3 + $0xe0] sm:$0xff] %v831
    %864 = vst [vmem:[#allocation3 + $0xe8] sm:$0xff] %v832
    %865 = vst [vmem:[#allocation3 + $0xf0] sm:$0xff] %v833
    %866 = vst [vmem:[#allocation3 + $0xf8] sm:$0xff] %v834
    %v867 = vld [vmem:[#allocation2] sm:$0xff]
    %v868 = vld [vmem:[#allocation2 + $0x8] sm:$0xff]
    %v869 = vld [vmem:[#allocation2 + $0x10] sm:$0xff]
    %v870 = vld [vmem:[#allocation2 + $0x18] sm:$0xff]
    %v871 = vld [vmem:[#allocation2 + $0x20] sm:$0xff]
    %v872 = vld [vmem:[#allocation2 + $0x28] sm:$0xff]
    %v873 = vld [vmem:[#allocation2 + $0x30] sm:$0xff]
    %v874 = vld [vmem:[#allocation2 + $0x38] sm:$0xff]
    %v875 = vld [vmem:[#allocation2 + $0x40] sm:$0xff]
    %v876 = vld [vmem:[#allocation2 + $0x48] sm:$0xff]
    %v877 = vld [vmem:[#allocation2 + $0x50] sm:$0xff]
    %v878 = vld [vmem:[#allocation2 + $0x58] sm:$0xff]
    %v879 = vld [vmem:[#allocation2 + $0x60] sm:$0xff]
    %v880 = vld [vmem:[#allocation2 + $0x68] sm:$0xff]
    %v881 = vld [vmem:[#allocation2 + $0x70] sm:$0xff]
    %v882 = vld [vmem:[#allocation2 + $0x78] sm:$0xff]
    %v883 = vmul.f32 %v867, 0.0
    %v884 = vmul.f32 %v868, 0.0
    %v885 = vmul.f32 %v869, 0.0
    %v886 = vmul.f32 %v870, 0.0
    %v887 = vmul.f32 %v871, 0.0
    %v888 = vmul.f32 %v872, 0.0
    %v889 = vmul.f32 %v873, 0.0
    %v890 = vmul.f32 %v874, 0.0
    %v891 = vmul.f32 %v875, 0.0
    %v892 = vmul.f32 %v876, 0.0
    %v893 = vmul.f32 %v877, 0.0
    %v894 = vmul.f32 %v878, 0.0
    %v895 = vmul.f32 %v879, 0.0
    %v896 = vmul.f32 %v880, 0.0
    %v897 = vmul.f32 %v881, 0.0
    %v898 = vmul.f32 %v882, 0.0
    %v899 = vld [vmem:[#allocation3] sm:$0xff]
    %v900 = vld [vmem:[#allocation3 + $0x8] sm:$0xff]
    %v901 = vld [vmem:[#allocation3 + $0x10] sm:$0xff]
    %v902 = vld [vmem:[#allocation3 + $0x18] sm:$0xff]
    %v903 = vld [vmem:[#allocation3 + $0x20] sm:$0xff]
    %v904 = vld [vmem:[#allocation3 + $0x28] sm:$0xff]
    %v905 = vld [vmem:[#allocation3 + $0x30] sm:$0xff]
    %v906 = vld [vmem:[#allocation3 + $0x38] sm:$0xff]
    %v907 = vld [vmem:[#allocation3 + $0x40] sm:$0xff]
    %v908 = vld [vmem:[#allocation3 + $0x48] sm:$0xff]
    %v909 = vld [vmem:[#allocation3 + $0x50] sm:$0xff]
    %v910 = vld [vmem:[#allocation3 + $0x58] sm:$0xff]
    %v911 = vld [vmem:[#allocation3 + $0x60] sm:$0xff]
    %v912 = vld [vmem:[#allocation3 + $0x68] sm:$0xff]
    %v913 = vld [vmem:[#allocation3 + $0x70] sm:$0xff]
    %v914 = vld [vmem:[#allocation3 + $0x78] sm:$0xff]
    %v915 = vadd.f32 %v883, %v899
    %v916 = vadd.f32 %v884, %v900
    %v917 = vadd.f32 %v885, %v901
    %v918 = vadd.f32 %v886, %v902
    %v919 = vadd.f32 %v887, %v903
    %v920 = vadd.f32 %v888, %v904
    %v921 = vadd.f32 %v889, %v905
    %v922 = vadd.f32 %v890, %v906
    %v923 = vadd.f32 %v891, %v907
    %v924 = vadd.f32 %v892, %v908
    %v925 = vadd.f32 %v893, %v909
    %v926 = vadd.f32 %v894, %v910
    %v927 = vadd.f32 %v895, %v911
    %v928 = vadd.f32 %v896, %v912
    %v929 = vadd.f32 %v897, %v913
    %v930 = vadd.f32 %v898, %v914
    %931 = vst [vmem:[#allocation4] sm:$0xff] %v915
    %932 = vst [vmem:[#allocation4 + $0x8] sm:$0xff] %v916
    %933 = vst [vmem:[#allocation4 + $0x10] sm:$0xff] %v917
    %934 = vst [vmem:[#allocation4 + $0x18] sm:$0xff] %v918
    %935 = vst [vmem:[#allocation4 + $0x20] sm:$0xff] %v919
    %936 = vst [vmem:[#allocation4 + $0x28] sm:$0xff] %v920
    %937 = vst [vmem:[#allocation4 + $0x30] sm:$0xff] %v921
    %938 = vst [vmem:[#allocation4 + $0x38] sm:$0xff] %v922
    %939 = vst [vmem:[#allocation4 + $0x40] sm:$0xff] %v923
    %940 = vst [vmem:[#allocation4 + $0x48] sm:$0xff] %v924
    %941 = vst [vmem:[#allocation4 + $0x50] sm:$0xff] %v925
    %942 = vst [vmem:[#allocation4 + $0x58] sm:$0xff] %v926
    %943 = vst [vmem:[#allocation4 + $0x60] sm:$0xff] %v927
    %944 = vst [vmem:[#allocation4 + $0x68] sm:$0xff] %v928
    %945 = vst [vmem:[#allocation4 + $0x70] sm:$0xff] %v929
    %946 = vst [vmem:[#allocation4 + $0x78] sm:$0xff] %v930
    %s947 = scalar_lea.vmem [#allocation2], 128
    %v948 = vld [vmem:[%s947] sm:$0xff]
    %v949 = vld [vmem:[%s947 + $0x8] sm:$0xff]
    %v950 = vld [vmem:[%s947 + $0x10] sm:$0xff]
    %v951 = vld [vmem:[%s947 + $0x18] sm:$0xff]
    %v952 = vld [vmem:[%s947 + $0x20] sm:$0xff]
    %v953 = vld [vmem:[%s947 + $0x28] sm:$0xff]
    %v954 = vld [vmem:[%s947 + $0x30] sm:$0xff]
    %v955 = vld [vmem:[%s947 + $0x38] sm:$0xff]
    %v956 = vld [vmem:[%s947 + $0x40] sm:$0xff]
    %v957 = vld [vmem:[%s947 + $0x48] sm:$0xff]
    %v958 = vld [vmem:[%s947 + $0x50] sm:$0xff]
    %v959 = vld [vmem:[%s947 + $0x58] sm:$0xff]
    %v960 = vld [vmem:[%s947 + $0x60] sm:$0xff]
    %v961 = vld [vmem:[%s947 + $0x68] sm:$0xff]
    %v962 = vld [vmem:[%s947 + $0x70] sm:$0xff]
    %v963 = vld [vmem:[%s947 + $0x78] sm:$0xff]
    %v964 = vmul.f32 %v948, %v915
    %v965 = vmul.f32 %v949, %v916
    %v966 = vmul.f32 %v950, %v917
    %v967 = vmul.f32 %v951, %v918
    %v968 = vmul.f32 %v952, %v919
    %v969 = vmul.f32 %v953, %v920
    %v970 = vmul.f32 %v954, %v921
    %v971 = vmul.f32 %v955, %v922
    %v972 = vmul.f32 %v956, %v923
    %v973 = vmul.f32 %v957, %v924
    %v974 = vmul.f32 %v958, %v925
    %v975 = vmul.f32 %v959, %v926
    %v976 = vmul.f32 %v960, %v927
    %v977 = vmul.f32 %v961, %v928
    %v978 = vmul.f32 %v962, %v929
    %v979 = vmul.f32 %v963, %v930
    %s980 = scalar_lea.vmem [#allocation3], 128
    %v981 = vld [vmem:[%s980] sm:$0xff]
    %v982 = vld [vmem:[%s980 + $0x8] sm:$0xff]
    %v983 = vld [vmem:[%s980 + $0x10] sm:$0xff]
    %v984 = vld [vmem:[%s980 + $0x18] sm:$0xff]
    %v985 = vld [vmem:[%s980 + $0x20] sm:$0xff]
    %v986 = vld [vmem:[%s980 + $0x28] sm:$0xff]
    %v987 = vld [vmem:[%s980 + $0x30] sm:$0xff]
    %v988 = vld [vmem:[%s980 + $0x38] sm:$0xff]
    %v989 = vld [vmem:[%s980 + $0x40] sm:$0xff]
    %v990 = vld [vmem:[%s980 + $0x48] sm:$0xff]
    %v991 = vld [vmem:[%s980 + $0x50] sm:$0xff]
    %v992 = vld [vmem:[%s980 + $0x58] sm:$0xff]
    %v993 = vld [vmem:[%s980 + $0x60] sm:$0xff]
    %v994 = vld [vmem:[%s980 + $0x68] sm:$0xff]
    %v995 = vld [vmem:[%s980 + $0x70] sm:$0xff]
    %v996 = vld [vmem:[%s980 + $0x78] sm:$0xff]
    %v997 = vadd.f32 %v964, %v981
    %v998 = vadd.f32 %v965, %v982
    %v999 = vadd.f32 %v966, %v983
    %v1000 = vadd.f32 %v967, %v984
    %v1001 = vadd.f32 %v968, %v985
    %v1002 = vadd.f32 %v969, %v986
    %v1003 = vadd.f32 %v970, %v987
    %v1004 = vadd.f32 %v971, %v988
    %v1005 = vadd.f32 %v972, %v989
    %v1006 = vadd.f32 %v973, %v990
    %v1007 = vadd.f32 %v974, %v991
    %v1008 = vadd.f32 %v975, %v992
    %v1009 = vadd.f32 %v976, %v993
    %v1010 = vadd.f32 %v977, %v994
    %v1011 = vadd.f32 %v978, %v995
    %v1012 = vadd.f32 %v979, %v996
    %s1013 = scalar_lea.vmem [#allocation4], 128
    %1014 = vst [vmem:[%s1013] sm:$0xff] %v997
    %1015 = vst [vmem:[%s1013 + $0x8] sm:$0xff] %v998
    %1016 = vst [vmem:[%s1013 + $0x10] sm:$0xff] %v999
    %1017 = vst [vmem:[%s1013 + $0x18] sm:$0xff] %v1000
    %1018 = vst [vmem:[%s1013 + $0x20] sm:$0xff] %v1001
    %1019 = vst [vmem:[%s1013 + $0x28] sm:$0xff] %v1002
    %1020 = vst [vmem:[%s1013 + $0x30] sm:$0xff] %v1003
    %1021 = vst [vmem:[%s1013 + $0x38] sm:$0xff] %v1004
    %1022 = vst [vmem:[%s1013 + $0x40] sm:$0xff] %v1005
    %1023 = vst [vmem:[%s1013 + $0x48] sm:$0xff] %v1006
    %1024 = vst [vmem:[%s1013 + $0x50] sm:$0xff] %v1007
    %1025 = vst [vmem:[%s1013 + $0x58] sm:$0xff] %v1008
    %1026 = vst [vmem:[%s1013 + $0x60] sm:$0xff] %v1009
    %1027 = vst [vmem:[%s1013 + $0x68] sm:$0xff] %v1010
    %1028 = vst [vmem:[%s1013 + $0x70] sm:$0xff] %v1011
    %1029 = vst [vmem:[%s1013 + $0x78] sm:$0xff] %v1012
    %v1030 = vld [vmem:[#allocation4] sm:$0xff]
    %v1031 = vld [vmem:[#allocation4 + $0x8] sm:$0xff]
    %v1032 = vld [vmem:[#allocation4 + $0x10] sm:$0xff]
    %v1033 = vld [vmem:[#allocation4 + $0x18] sm:$0xff]
    %v1034 = vld [vmem:[#allocation4 + $0x20] sm:$0xff]
    %v1035 = vld [vmem:[#allocation4 + $0x28] sm:$0xff]
    %v1036 = vld [vmem:[#allocation4 + $0x30] sm:$0xff]
    %v1037 = vld [vmem:[#allocation4 + $0x38] sm:$0xff]
    %v1038 = vld [vmem:[#allocation4 + $0x40] sm:$0xff]
    %v1039 = vld [vmem:[#allocation4 + $0x48] sm:$0xff]
    %v1040 = vld [vmem:[#allocation4 + $0x50] sm:$0xff]
    %v1041 = vld [vmem:[#allocation4 + $0x58] sm:$0xff]
    %v1042 = vld [vmem:[#allocation4 + $0x60] sm:$0xff]
    %v1043 = vld [vmem:[#allocation4 + $0x68] sm:$0xff]
    %v1044 = vld [vmem:[#allocation4 + $0x70] sm:$0xff]
    %v1045 = vld [vmem:[#allocation4 + $0x78] sm:$0xff]
    %v1046 = vld [vmem:[#allocation4 + $0x80] sm:$0xff]
    %v1047 = vld [vmem:[#allocation4 + $0x88] sm:$0xff]
    %v1048 = vld [vmem:[#allocation4 + $0x90] sm:$0xff]
    %v1049 = vld [vmem:[#allocation4 + $0x98] sm:$0xff]
    %v1050 = vld [vmem:[#allocation4 + $0xa0] sm:$0xff]
    %v1051 = vld [vmem:[#allocation4 + $0xa8] sm:$0xff]
    %v1052 = vld [vmem:[#allocation4 + $0xb0] sm:$0xff]
    %v1053 = vld [vmem:[#allocation4 + $0xb8] sm:$0xff]
    %v1054 = vld [vmem:[#allocation4 + $0xc0] sm:$0xff]
    %v1055 = vld [vmem:[#allocation4 + $0xc8] sm:$0xff]
    %v1056 = vld [vmem:[#allocation4 + $0xd0] sm:$0xff]
    %v1057 = vld [vmem:[#allocation4 + $0xd8] sm:$0xff]
    %v1058 = vld [vmem:[#allocation4 + $0xe0] sm:$0xff]
    %v1059 = vld [vmem:[#allocation4 + $0xe8] sm:$0xff]
    %v1060 = vld [vmem:[#allocation4 + $0xf0] sm:$0xff]
    %v1061 = vld [vmem:[#allocation4 + $0xf8] sm:$0xff]
    %s1063 = sor.u32 256, 16
    %1064 = vbcast.lane.b32.xlu0 %v550, %s1063
    %v1065 = vpop.permute.xlu0 %1064
    %s1067 = sor.u32 256, 24
    %1068 = vbcast.lane.b32.xlu0 %v550, %s1067
    %v1069 = vpop.permute.xlu0 %1068
    %s1071 = sor.u32 256, 16
    %1072 = vbcast.lane.b32.xlu0 %v561, %s1071
    %v1073 = vpop.permute.xlu0 %1072
    %s1075 = sor.u32 256, 24
    %1076 = vbcast.lane.b32.xlu0 %v561, %s1075
    %v1077 = vpop.permute.xlu0 %1076
    %s1079 = sor.u32 256, 16
    %1080 = vbcast.lane.b32.xlu0 %v572, %s1079
    %v1081 = vpop.permute.xlu0 %1080
    %s1083 = sor.u32 256, 24
    %1084 = vbcast.lane.b32.xlu0 %v572, %s1083
    %v1085 = vpop.permute.xlu0 %1084
    %s1087 = sor.u32 256, 16
    %1088 = vbcast.lane.b32.xlu0 %v583, %s1087
    %v1089 = vpop.permute.xlu0 %1088
    %s1091 = sor.u32 256, 24
    %1092 = vbcast.lane.b32.xlu0 %v583, %s1091
    %v1093 = vpop.permute.xlu0 %1092
    %s1095 = sor.u32 256, 16
    %1096 = vbcast.lane.b32.xlu0 %v594, %s1095
    %v1097 = vpop.permute.xlu0 %1096
    %s1099 = sor.u32 256, 24
    %1100 = vbcast.lane.b32.xlu0 %v594, %s1099
    %v1101 = vpop.permute.xlu0 %1100
    %s1103 = sor.u32 256, 16
    %1104 = vbcast.lane.b32.xlu0 %v605, %s1103
    %v1105 = vpop.permute.xlu0 %1104
    %s1107 = sor.u32 256, 24
    %1108 = vbcast.lane.b32.xlu0 %v605, %s1107
    %v1109 = vpop.permute.xlu0 %1108
    %s1111 = sor.u32 256, 16
    %1112 = vbcast.lane.b32.xlu0 %v616, %s1111
    %v1113 = vpop.permute.xlu0 %1112
    %s1115 = sor.u32 256, 24
    %1116 = vbcast.lane.b32.xlu0 %v616, %s1115
    %v1117 = vpop.permute.xlu0 %1116
    %s1119 = sor.u32 256, 16
    %1120 = vbcast.lane.b32.xlu0 %v627, %s1119
    %v1121 = vpop.permute.xlu0 %1120
    %s1123 = sor.u32 256, 24
    %1124 = vbcast.lane.b32.xlu0 %v627, %s1123
    %v1125 = vpop.permute.xlu0 %1124
    %s1127 = sor.u32 256, 16
    %1128 = vbcast.lane.b32.xlu0 %v638, %s1127
    %v1129 = vpop.permute.xlu0 %1128
    %s1131 = sor.u32 256, 24
    %1132 = vbcast.lane.b32.xlu0 %v638, %s1131
    %v1133 = vpop.permute.xlu0 %1132
    %s1135 = sor.u32 256, 16
    %1136 = vbcast.lane.b32.xlu0 %v649, %s1135
    %v1137 = vpop.permute.xlu0 %1136
    %s1139 = sor.u32 256, 24
    %1140 = vbcast.lane.b32.xlu0 %v649, %s1139
    %v1141 = vpop.permute.xlu0 %1140
    %s1143 = sor.u32 256, 16
    %1144 = vbcast.lane.b32.xlu0 %v660, %s1143
    %v1145 = vpop.permute.xlu0 %1144
    %s1147 = sor.u32 256, 24
    %1148 = vbcast.lane.b32.xlu0 %v660, %s1147
    %v1149 = vpop.permute.xlu0 %1148
    %s1151 = sor.u32 256, 16
    %1152 = vbcast.lane.b32.xlu0 %v671, %s1151
    %v1153 = vpop.permute.xlu0 %1152
    %s1155 = sor.u32 256, 24
    %1156 = vbcast.lane.b32.xlu0 %v671, %s1155
    %v1157 = vpop.permute.xlu0 %1156
    %s1159 = sor.u32 256, 16
    %1160 = vbcast.lane.b32.xlu0 %v682, %s1159
    %v1161 = vpop.permute.xlu0 %1160
    %s1163 = sor.u32 256, 24
    %1164 = vbcast.lane.b32.xlu0 %v682, %s1163
    %v1165 = vpop.permute.xlu0 %1164
    %s1167 = sor.u32 256, 16
    %1168 = vbcast.lane.b32.xlu0 %v693, %s1167
    %v1169 = vpop.permute.xlu0 %1168
    %s1171 = sor.u32 256, 24
    %1172 = vbcast.lane.b32.xlu0 %v693, %s1171
    %v1173 = vpop.permute.xlu0 %1172
    %s1175 = sor.u32 256, 16
    %1176 = vbcast.lane.b32.xlu0 %v704, %s1175
    %v1177 = vpop.permute.xlu0 %1176
    %s1179 = sor.u32 256, 24
    %1180 = vbcast.lane.b32.xlu0 %v704, %s1179
    %v1181 = vpop.permute.xlu0 %1180
    %s1183 = sor.u32 256, 16
    %1184 = vbcast.lane.b32.xlu0 %v715, %s1183
    %v1185 = vpop.permute.xlu0 %1184
    %s1187 = sor.u32 256, 24
    %1188 = vbcast.lane.b32.xlu0 %v715, %s1187
    %v1189 = vpop.permute.xlu0 %1188
    %v1190 = vmul.f32 %v1030, %v1065
    %v1191 = vmul.f32 %v1031, %v1069
    %v1192 = vmul.f32 %v1032, %v1073
    %v1193 = vmul.f32 %v1033, %v1077
    %v1194 = vmul.f32 %v1034, %v1081
    %v1195 = vmul.f32 %v1035, %v1085
    %v1196 = vmul.f32 %v1036, %v1089
    %v1197 = vmul.f32 %v1037, %v1093
    %v1198 = vmul.f32 %v1038, %v1097
    %v1199 = vmul.f32 %v1039, %v1101
    %v1200 = vmul.f32 %v1040, %v1105
    %v1201 = vmul.f32 %v1041, %v1109
    %v1202 = vmul.f32 %v1042, %v1113
    %v1203 = vmul.f32 %v1043, %v1117
    %v1204 = vmul.f32 %v1044, %v1121
    %v1205 = vmul.f32 %v1045, %v1125
    %v1206 = vmul.f32 %v1046, %v1129
    %v1207 = vmul.f32 %v1047, %v1133
    %v1208 = vmul.f32 %v1048, %v1137
    %v1209 = vmul.f32 %v1049, %v1141
    %v1210 = vmul.f32 %v1050, %v1145
    %v1211 = vmul.f32 %v1051, %v1149
    %v1212 = vmul.f32 %v1052, %v1153
    %v1213 = vmul.f32 %v1053, %v1157
    %v1214 = vmul.f32 %v1054, %v1161
    %v1215 = vmul.f32 %v1055, %v1165
    %v1216 = vmul.f32 %v1056, %v1169
    %v1217 = vmul.f32 %v1057, %v1173
    %v1218 = vmul.f32 %v1058, %v1177
    %v1219 = vmul.f32 %v1059, %v1181
    %v1220 = vmul.f32 %v1060, %v1185
    %v1221 = vmul.f32 %v1061, %v1189
    %v1222 = vadd.f32 %v1190, %v1191
    %v1223 = vrot.slane %v1222, 4
    %v1224 = vadd.f32 %v1222, %v1223
    %v1225 = vrot.slane %v1224, 2
    %v1226 = vadd.f32 %v1224, %v1225
    %v1227 = vrot.slane %v1226, 1
    %v1228 = vadd.f32 %v1226, %v1227
    %v1229 = vadd.f32 %v1192, %v1193
    %v1230 = vrot.slane %v1229, 4
    %v1231 = vadd.f32 %v1229, %v1230
    %v1232 = vrot.slane %v1231, 2
    %v1233 = vadd.f32 %v1231, %v1232
    %v1234 = vrot.slane %v1233, 1
    %v1235 = vadd.f32 %v1233, %v1234
    %v1236 = vadd.f32 %v1194, %v1195
    %v1237 = vrot.slane %v1236, 4
    %v1238 = vadd.f32 %v1236, %v1237
    %v1239 = vrot.slane %v1238, 2
    %v1240 = vadd.f32 %v1238, %v1239
    %v1241 = vrot.slane %v1240, 1
    %v1242 = vadd.f32 %v1240, %v1241
    %v1243 = vadd.f32 %v1196, %v1197
    %v1244 = vrot.slane %v1243, 4
    %v1245 = vadd.f32 %v1243, %v1244
    %v1246 = vrot.slane %v1245, 2
    %v1247 = vadd.f32 %v1245, %v1246
    %v1248 = vrot.slane %v1247, 1
    %v1249 = vadd.f32 %v1247, %v1248
    %v1250 = vadd.f32 %v1198, %v1199
    %v1251 = vrot.slane %v1250, 4
    %v1252 = vadd.f32 %v1250, %v1251
    %v1253 = vrot.slane %v1252, 2
    %v1254 = vadd.f32 %v1252, %v1253
    %v1255 = vrot.slane %v1254, 1
    %v1256 = vadd.f32 %v1254, %v1255
    %v1257 = vadd.f32 %v1200, %v1201
    %v1258 = vrot.slane %v1257, 4
    %v1259 = vadd.f32 %v1257, %v1258
    %v1260 = vrot.slane %v1259, 2
    %v1261 = vadd.f32 %v1259, %v1260
    %v1262 = vrot.slane %v1261, 1
    %v1263 = vadd.f32 %v1261, %v1262
    %v1264 = vadd.f32 %v1202, %v1203
    %v1265 = vrot.slane %v1264, 4
    %v1266 = vadd.f32 %v1264, %v1265
    %v1267 = vrot.slane %v1266, 2
    %v1268 = vadd.f32 %v1266, %v1267
    %v1269 = vrot.slane %v1268, 1
    %v1270 = vadd.f32 %v1268, %v1269
    %v1271 = vadd.f32 %v1204, %v1205
    %v1272 = vrot.slane %v1271, 4
    %v1273 = vadd.f32 %v1271, %v1272
    %v1274 = vrot.slane %v1273, 2
    %v1275 = vadd.f32 %v1273, %v1274
    %v1276 = vrot.slane %v1275, 1
    %v1277 = vadd.f32 %v1275, %v1276
    %v1278 = vadd.f32 %v1206, %v1207
    %v1279 = vrot.slane %v1278, 4
    %v1280 = vadd.f32 %v1278, %v1279
    %v1281 = vrot.slane %v1280, 2
    %v1282 = vadd.f32 %v1280, %v1281
    %v1283 = vrot.slane %v1282, 1
    %v1284 = vadd.f32 %v1282, %v1283
    %v1285 = vadd.f32 %v1208, %v1209
    %v1286 = vrot.slane %v1285, 4
    %v1287 = vadd.f32 %v1285, %v1286
    %v1288 = vrot.slane %v1287, 2
    %v1289 = vadd.f32 %v1287, %v1288
    %v1290 = vrot.slane %v1289, 1
    %v1291 = vadd.f32 %v1289, %v1290
    %v1292 = vadd.f32 %v1210, %v1211
    %v1293 = vrot.slane %v1292, 4
    %v1294 = vadd.f32 %v1292, %v1293
    %v1295 = vrot.slane %v1294, 2
    %v1296 = vadd.f32 %v1294, %v1295
    %v1297 = vrot.slane %v1296, 1
    %v1298 = vadd.f32 %v1296, %v1297
    %v1299 = vadd.f32 %v1212, %v1213
    %v1300 = vrot.slane %v1299, 4
    %v1301 = vadd.f32 %v1299, %v1300
    %v1302 = vrot.slane %v1301, 2
    %v1303 = vadd.f32 %v1301, %v1302
    %v1304 = vrot.slane %v1303, 1
    %v1305 = vadd.f32 %v1303, %v1304
    %v1306 = vadd.f32 %v1214, %v1215
    %v1307 = vrot.slane %v1306, 4
    %v1308 = vadd.f32 %v1306, %v1307
    %v1309 = vrot.slane %v1308, 2
    %v1310 = vadd.f32 %v1308, %v1309
    %v1311 = vrot.slane %v1310, 1
    %v1312 = vadd.f32 %v1310, %v1311
    %v1313 = vadd.f32 %v1216, %v1217
    %v1314 = vrot.slane %v1313, 4
    %v1315 = vadd.f32 %v1313, %v1314
    %v1316 = vrot.slane %v1315, 2
    %v1317 = vadd.f32 %v1315, %v1316
    %v1318 = vrot.slane %v1317, 1
    %v1319 = vadd.f32 %v1317, %v1318
    %v1320 = vadd.f32 %v1218, %v1219
    %v1321 = vrot.slane %v1320, 4
    %v1322 = vadd.f32 %v1320, %v1321
    %v1323 = vrot.slane %v1322, 2
    %v1324 = vadd.f32 %v1322, %v1323
    %v1325 = vrot.slane %v1324, 1
    %v1326 = vadd.f32 %v1324, %v1325
    %v1327 = vadd.f32 %v1220, %v1221
    %v1328 = vrot.slane %v1327, 4
    %v1329 = vadd.f32 %v1327, %v1328
    %v1330 = vrot.slane %v1329, 2
    %v1331 = vadd.f32 %v1329, %v1330
    %v1332 = vrot.slane %v1331, 1
    %v1333 = vadd.f32 %v1331, %v1332
    %v1334 = vld [vmem:[#allocation13] sm:$0x1]
    %v1336 = vlaneseq
    %v1337 = vshrl.u32 %v1336, 7
    %v1338 = vsub.s32 0, %v1337
    %v1339 = vrot.slane %v1334, %v1338
    %v1341 = vmul.f32 %v89, %v1339
    %v1342 = vmul.f32 %v90, %v1339
    %v1345 = vrot.slane %v1341, 1
    %v1346 = vrot.slane %v1341, 2
    %v1347 = vrot.slane %v1341, 3
    %v1348 = vrot.slane %v1341, 4
    %v1349 = vrot.slane %v1341, 5
    %v1350 = vrot.slane %v1341, 6
    %v1351 = vrot.slane %v1341, 7
    %v1352 = vrot.slane %v1342, 1
    %v1353 = vrot.slane %v1342, 2
    %v1354 = vrot.slane %v1342, 3
    %v1355 = vrot.slane %v1342, 4
    %v1356 = vrot.slane %v1342, 5
    %v1357 = vrot.slane %v1342, 6
    %v1358 = vrot.slane %v1342, 7
    %v1375 = vadd.f32 %v1228, %v1341
    %v1376 = vadd.f32 %v1235, %v1345
    %v1377 = vadd.f32 %v1242, %v1346
    %v1378 = vadd.f32 %v1249, %v1347
    %v1379 = vadd.f32 %v1256, %v1348
    %v1380 = vadd.f32 %v1263, %v1349
    %v1381 = vadd.f32 %v1270, %v1350
    %v1382 = vadd.f32 %v1277, %v1351
    %v1383 = vadd.f32 %v1284, %v1342
    %v1384 = vadd.f32 %v1291, %v1352
    %v1385 = vadd.f32 %v1298, %v1353
    %v1386 = vadd.f32 %v1305, %v1354
    %v1387 = vadd.f32 %v1312, %v1355
    %v1388 = vadd.f32 %v1319, %v1356
    %v1389 = vadd.f32 %v1326, %v1357
    %v1390 = vadd.f32 %v1333, %v1358
    %v1391 = vxor.u32 %v93, 2147483648
    %v1392 = vxor.u32 %v94, 2147483648
    %v1393 = vmul.f32 %v1391, 1.442695
    %v1394 = vpow.pop %v1393
    %v1395 = vmul.f32 %v1392, 1.442695
    %v1396 = vpow.pop %v1395
    %v1397 = vadd.f32 %v1394, 1.0
    %v1398 = vadd.f32 %v1396, 1.0
    %v1399 = vrcp.pop %v1397
    %v1400 = vmul.f32 1.0, %v1399
    %v1401 = vrcp.pop %v1398
    %v1402 = vmul.f32 1.0, %v1401
    %v1403 = vmul.f32 %v93, %v1400
    %v1404 = vmul.f32 %v94, %v1402
    %v1407 = vrot.slane %v1403, 1
    %v1408 = vrot.slane %v1403, 2
    %v1409 = vrot.slane %v1403, 3
    %v1410 = vrot.slane %v1403, 4
    %v1411 = vrot.slane %v1403, 5
    %v1412 = vrot.slane %v1403, 6
    %v1413 = vrot.slane %v1403, 7
    %v1414 = vrot.slane %v1404, 1
    %v1415 = vrot.slane %v1404, 2
    %v1416 = vrot.slane %v1404, 3
    %v1417 = vrot.slane %v1404, 4
    %v1418 = vrot.slane %v1404, 5
    %v1419 = vrot.slane %v1404, 6
    %v1420 = vrot.slane %v1404, 7
    %v1437 = vmul.f32 %v1375, %v1403
    %v1438 = vmul.f32 %v1376, %v1407
    %v1439 = vmul.f32 %v1377, %v1408
    %v1440 = vmul.f32 %v1378, %v1409
    %v1441 = vmul.f32 %v1379, %v1410
    %v1442 = vmul.f32 %v1380, %v1411
    %v1443 = vmul.f32 %v1381, %v1412
    %v1444 = vmul.f32 %v1382, %v1413
    %v1445 = vmul.f32 %v1383, %v1404
    %v1446 = vmul.f32 %v1384, %v1414
    %v1447 = vmul.f32 %v1385, %v1415
    %v1448 = vmul.f32 %v1386, %v1416
    %v1449 = vmul.f32 %v1387, %v1417
    %v1450 = vmul.f32 %v1388, %v1418
    %v1451 = vmul.f32 %v1389, %v1419
    %v1452 = vmul.f32 %v1390, %v1420
    %v1453 = vpack.c.bf16 %v1437, %v1437
    %v1454 = vpack.c.bf16 %v1438, %v1438
    %v1455 = vpack.c.bf16 %v1439, %v1439
    %v1456 = vpack.c.bf16 %v1440, %v1440
    %v1457 = vpack.c.bf16 %v1441, %v1441
    %v1458 = vpack.c.bf16 %v1442, %v1442
    %v1459 = vpack.c.bf16 %v1443, %v1443
    %v1460 = vpack.c.bf16 %v1444, %v1444
    %v1461 = vpack.c.bf16 %v1445, %v1445
    %v1462 = vpack.c.bf16 %v1446, %v1446
    %v1463 = vpack.c.bf16 %v1447, %v1447
    %v1464 = vpack.c.bf16 %v1448, %v1448
    %v1465 = vpack.c.bf16 %v1449, %v1449
    %v1466 = vpack.c.bf16 %v1450, %v1450
    %v1467 = vpack.c.bf16 %v1451, %v1451
    %v1468 = vpack.c.bf16 %v1452, %v1452
    %v1485 = vunpack.c.l.b16 %v1453
    %v1486 = vunpack.c.l.b16 %v1454
    %v1487 = vunpack.c.l.b16 %v1455
    %v1488 = vunpack.c.l.b16 %v1456
    %v1489 = vunpack.c.l.b16 %v1457
    %v1490 = vunpack.c.l.b16 %v1458
    %v1491 = vunpack.c.l.b16 %v1459
    %v1492 = vunpack.c.l.b16 %v1460
    %v1493 = vunpack.c.l.b16 %v1461
    %v1494 = vunpack.c.l.b16 %v1462
    %v1495 = vunpack.c.l.b16 %v1463
    %v1496 = vunpack.c.l.b16 %v1464
    %v1497 = vunpack.c.l.b16 %v1465
    %v1498 = vunpack.c.l.b16 %v1466
    %v1499 = vunpack.c.l.b16 %v1467
    %v1500 = vunpack.c.l.b16 %v1468
    %v1501 = vpack.c.b16 %v1485, %v1485
    %v1502 = vpack.c.b16 %v1486, %v1486
    %v1503 = vpack.c.b16 %v1487, %v1487
    %v1504 = vpack.c.b16 %v1488, %v1488
    %v1505 = vpack.c.b16 %v1489, %v1489
    %v1506 = vpack.c.b16 %v1490, %v1490
    %v1507 = vpack.c.b16 %v1491, %v1491
    %v1508 = vpack.c.b16 %v1492, %v1492
    %v1509 = vpack.c.b16 %v1493, %v1493
    %v1510 = vpack.c.b16 %v1494, %v1494
    %v1511 = vpack.c.b16 %v1495, %v1495
    %v1512 = vpack.c.b16 %v1496, %v1496
    %v1513 = vpack.c.b16 %v1497, %v1497
    %v1514 = vpack.c.b16 %v1498, %v1498
    %v1515 = vpack.c.b16 %v1499, %v1499
    %v1516 = vpack.c.b16 %v1500, %v1500
    %v1517 = vunpack.c.l.b16 %v1501
    %v1518 = vunpack.c.l.b16 %v1502
    %v1519 = vunpack.c.l.b16 %v1503
    %v1520 = vunpack.c.l.b16 %v1504
    %v1521 = vunpack.c.l.b16 %v1505
    %v1522 = vunpack.c.l.b16 %v1506
    %v1523 = vunpack.c.l.b16 %v1507
    %v1524 = vunpack.c.l.b16 %v1508
    %v1525 = vunpack.c.l.b16 %v1509
    %v1526 = vunpack.c.l.b16 %v1510
    %v1527 = vunpack.c.l.b16 %v1511
    %v1528 = vunpack.c.l.b16 %v1512
    %v1529 = vunpack.c.l.b16 %v1513
    %v1530 = vunpack.c.l.b16 %v1514
    %v1531 = vunpack.c.l.b16 %v1515
    %v1532 = vunpack.c.l.b16 %v1516
    %v1533 = vrot.slane %v1518, 7
    %vm1534 = vcmask 1041409
    %v1535 = vsel %vm1534, %v1533, %v1517
    %v1536 = vrot.slane %v1519, 6
    %vm1537 = vcmask 1042434
    %v1538 = vsel %vm1537, %v1536, %v1535
    %v1539 = vrot.slane %v1520, 5
    %vm1540 = vcmask 1043459
    %v1541 = vsel %vm1540, %v1539, %v1538
    %v1542 = vrot.slane %v1521, 4
    %vm1543 = vcmask 1044484
    %v1544 = vsel %vm1543, %v1542, %v1541
    %v1545 = vrot.slane %v1522, 3
    %vm1546 = vcmask 1045509
    %v1547 = vsel %vm1546, %v1545, %v1544
    %v1548 = vrot.slane %v1523, 2
    %vm1549 = vcmask 1046534
    %v1550 = vsel %vm1549, %v1548, %v1547
    %v1551 = vrot.slane %v1524, 1
    %vm1552 = vcmask 1047559
    %v1553 = vsel %vm1552, %v1551, %v1550
    %v1554 = vrot.slane %v1526, 7
    %v1555 = vsel %vm1534, %v1554, %v1525
    %v1556 = vrot.slane %v1527, 6
    %v1557 = vsel %vm1537, %v1556, %v1555
    %v1558 = vrot.slane %v1528, 5
    %v1559 = vsel %vm1540, %v1558, %v1557
    %v1560 = vrot.slane %v1529, 4
    %v1561 = vsel %vm1543, %v1560, %v1559
    %v1562 = vrot.slane %v1530, 3
    %v1563 = vsel %vm1546, %v1562, %v1561
    %v1564 = vrot.slane %v1531, 2
    %v1565 = vsel %vm1549, %v1564, %v1563
    %v1566 = vrot.slane %v1532, 1
    %v1567 = vsel %vm1552, %v1566, %v1565
    %v1568 = vpack.c.b16 %v1553, %v1553
    %v1569 = vpack.c.b16 %v1567, %v1567
    %1572 = vst [vmem:[#allocation14] sm:$0xf] %v1568
    %1573 = vst [vmem:[#allocation14 + $0x4] sm:$0xf] %v1569
    // Predicated region
    $region42: #{_lambda_.15} parent=1 // pred_check
      _
    $region43: #{_lambda_.15} parent=1 // pred_check_branch
      %1575 = sbr.rel (0) target = $region45
    $region44: #{_lambda_.15} parent=1 // pred_region
      %s1577 = ssub.s32 128, 128
      %1578 = vsyncadd [#allocation7], %s1577
      %s1579 = sshll.u32 [#allocation14], 4
      %s1580 = int_to_ptr.vmem [resolvable:$true] %s1579
      %1585 = dma.vmem_to_hbm [thread:$0]  %s1580, 128, %s5, [#allocation7], 64, 64, 4
    $region45: #{_lambda_.15} parent=1 // pred_fallthru
      _
    // Predicated region
    $region46: #{_lambda_.15} parent=1 // pred_check
      _
    $region47: #{_lambda_.15} parent=1 // pred_check_branch
      %1587 = sbr.rel (0) target = $region49
    $region48: #{_lambda_.15} parent=1 // pred_region
      %1588 = dma.done [#allocation7], 128
    $region49: #{_lambda_.15} parent=1 // pred_fallthru
      _
    %1589 = vsyncpa [#allocation6], 1
    %1590 = vsyncpa [#allocation9], 1
    %1591 = vsyncpa [#allocation12], 1
    %1592 = vsyncpa [#allocation7], 1

// kernel: _lambda_.16
$region0: #{_lambda_.16}
  #allocation0 [shape = 'u32[]', space=smem, size = 0x4, offset = 0x4, fixed_abs, tag = 'smem constant byte address 0x4 - core index']
  #allocation1 [shape = 'u32[144,128]{1,0:T(1,128)}', space=vmem, size = 0x12000, scoped, tag = 'internal scratch']
  #allocation2 [shape = 'f32[16,32]{1,0:T(8,128)}', space=vmem, size = 0x2000, scoped, tag = 'scratch operand']
  %s0 = inlined_call_operand.hbm [shape: bf16[16,128], index: 0, kind: input, shape index: {}]
  %s1 = inlined_call_operand.hbm [shape: bf16[128,32], index: 1, kind: input, shape index: {}]
  %s2 = inlined_call_operand.hbm [shape: f32[16,32], index: 2, kind: output, shape index: {}]
  %s3 = sld [smem:[#allocation0]]
  $region34: #{_lambda_.16} parent=0
    _
  %s5 = ssub.s32 1, %s3
  %s6 = scalar_select 0, %s5, %s3
  $region1: #{_lambda_.16} parent=0
    #allocation3 [shape = 'u8[4096]{0}', space=vmem, size = 0x1000, scoped, tag = 'input window, operand 0, single buffered']
    #allocation4 [shape = 's32[1]{0}', space=sflag, size = 0x4, scoped, tag = 'scoped memory for _lambda_.16']
    #allocation5 [shape = 's32[1]{0}', space=sflag, size = 0x4, scoped, tag = 'scoped memory for _lambda_.16']
    #allocation6 [shape = 'u8[32768]{0}', space=vmem, size = 0x8000, scoped, tag = 'input window, operand 1, single buffered']
    #allocation7 [shape = 's32[1]{0}', space=sflag, size = 0x4, scoped, tag = 'scoped memory for _lambda_.16']
    #allocation8 [shape = 'u8[8192]{0}', space=vmem, size = 0x2000, scoped, tag = 'output window, operand 0, single buffered']
    %7 = vsyncpa [#allocation4], 0
    %8 = vsyncpa [#allocation7], 0
    %9 = vsyncpa [#allocation5], 0
    // Predicated region
    $region2: #{_lambda_.16} parent=1 // pred_check
      _
    $region3: #{_lambda_.16} parent=1 // pred_check_branch
      %11 = sbr.rel (0) target = $region5
    $region4: #{_lambda_.16} parent=1 // pred_region
      %s13 = ssub.s32 128, 128
      %14 = vsyncadd [#allocation4], %s13
      %s15 = sshll.u32 [#allocation3], 4
      %s16 = int_to_ptr.vmem [resolvable:$true] %s15
      %21 = dma.hbm_to_vmem [thread:$0]  %s0, 128, %s16, [#allocation4], 64, 64, 4
    $region5: #{_lambda_.16} parent=1 // pred_fallthru
      _
    // Predicated region
    $region6: #{_lambda_.16} parent=1 // pred_check
      _
    $region7: #{_lambda_.16} parent=1 // pred_check_branch
      %23 = sbr.rel (0) target = $region9
    $region8: #{_lambda_.16} parent=1 // pred_region
      %s25 = ssub.s32 1024, 1024
      %26 = vsyncadd [#allocation7], %s25
      %s27 = sshll.u32 [#allocation6], 4
      %s28 = int_to_ptr.vmem [resolvable:$true] %s27
      %33 = dma.hbm_to_vmem [thread:$0]  %s1, 1024, %s28, [#allocation7], 64, 64, 4
    $region9: #{_lambda_.16} parent=1 // pred_fallthru
      _
    // Predicated region
    $region10: #{_lambda_.16} parent=1 // pred_check
      _
    $region11: #{_lambda_.16} parent=1 // pred_check_branch
      %35 = sbr.rel (0) target = $region13
    $region12: #{_lambda_.16} parent=1 // pred_region
      %36 = dma.done [#allocation4], 128
    $region13: #{_lambda_.16} parent=1 // pred_fallthru
      _
    // Predicated region
    $region14: #{_lambda_.16} parent=1 // pred_check
      _
    $region15: #{_lambda_.16} parent=1 // pred_check_branch
      %38 = sbr.rel (0) target = $region17
    $region16: #{_lambda_.16} parent=1 // pred_region
      %39 = dma.done [#allocation7], 1024
    $region17: #{_lambda_.16} parent=1 // pred_fallthru
      _
    %p41 = scmp.eq.s32.totalorder 0, 0
    // Predicated region
    $region18: #{_lambda_.16} parent=1 // pred_check
      %p42 = pneg %p41
    $region19: #{_lambda_.16} parent=1 // pred_check_branch
      %44 = sbr.rel (%p42) target = $region21
    $region20: #{_lambda_.16} parent=1 // pred_region
      %vm45 = vcmask 261120
      %46 = vst.msk [vmem:[#allocation2] sm:$0xff] %vm45, 0.0
      %47 = vst.msk [vmem:[#allocation2 + $0x8] sm:$0xff] %vm45, 0.0
    $region21: #{_lambda_.16} parent=1 // pred_fallthru
      _
    %v48 = vld [vmem:[#allocation2] sm:$0xff]
    %v49 = vld [vmem:[#allocation2 + $0x8] sm:$0xff]
    %v50 = vld [vmem:[#allocation3] sm:$0xf]
    %v51 = vld [vmem:[#allocation3 + $0x4] sm:$0xf]
    %v52 = vld [vmem:[#allocation6] sm:$0xf]
    %v53 = vld [vmem:[#allocation6 + $0x4] sm:$0xf]
    %v54 = vld [vmem:[#allocation6 + $0x8] sm:$0xf]
    %v55 = vld [vmem:[#allocation6 + $0xc] sm:$0xf]
    %v56 = vld [vmem:[#allocation6 + $0x10] sm:$0xf]
    %v57 = vld [vmem:[#allocation6 + $0x14] sm:$0xf]
    %v58 = vld [vmem:[#allocation6 + $0x18] sm:$0xf]
    %v59 = vld [vmem:[#allocation6 + $0x1c] sm:$0xf]
    %v60 = vld [vmem:[#allocation6 + $0x20] sm:$0xf]
    %v61 = vld [vmem:[#allocation6 + $0x24] sm:$0xf]
    %v62 = vld [vmem:[#allocation6 + $0x28] sm:$0xf]
    %v63 = vld [vmem:[#allocation6 + $0x2c] sm:$0xf]
    %v64 = vld [vmem:[#allocation6 + $0x30] sm:$0xf]
    %v65 = vld [vmem:[#allocation6 + $0x34] sm:$0xf]
    %v66 = vld [vmem:[#allocation6 + $0x38] sm:$0xf]
    %v67 = vld [vmem:[#allocation6 + $0x3c] sm:$0xf]
    %v70 = vunpack.c.l.b16 %v50
    %v71 = vunpack.c.l.b16 %v51
    %v72 = vpack.c.b16 %v71, %v70
    %v90 = vunpack.c.l.b16 %v52
    %v91 = vunpack.c.l.b16 %v53
    %v92 = vunpack.c.l.b16 %v54
    %v93 = vunpack.c.l.b16 %v55
    %v94 = vunpack.c.l.b16 %v56
    %v95 = vunpack.c.l.b16 %v57
    %v96 = vunpack.c.l.b16 %v58
    %v97 = vunpack.c.l.b16 %v59
    %v98 = vunpack.c.l.b16 %v60
    %v99 = vunpack.c.l.b16 %v61
    %v100 = vunpack.c.l.b16 %v62
    %v101 = vunpack.c.l.b16 %v63
    %v102 = vunpack.c.l.b16 %v64
    %v103 = vunpack.c.l.b16 %v65
    %v104 = vunpack.c.l.b16 %v66
    %v105 = vunpack.c.l.b16 %v67
    %v106 = vpack.c.b16 %v91, %v90
    %v107 = vpack.c.b16 %v93, %v92
    %v108 = vpack.c.b16 %v95, %v94
    %v109 = vpack.c.b16 %v97, %v96
    %v110 = vpack.c.b16 %v99, %v98
    %v111 = vpack.c.b16 %v101, %v100
    %v112 = vpack.c.b16 %v103, %v102
    %v113 = vpack.c.b16 %v105, %v104
    %122 = vmatprep.subr.bf16.mxu0 0
    %123 = vmatpush1.bf16.msra.mxu0 %v106
    %124 = vmatprep.subr.bf16.mxu0 0
    %125 = vmatpush1.bf16.msra.mxu0 %v107
    %126 = vmatprep.subr.bf16.mxu0 0
    %127 = vmatpush1.bf16.msra.mxu0 %v108
    %128 = vmatprep.subr.bf16.mxu0 0
    %129 = vmatpush1.bf16.msra.mxu0 %v109
    %130 = vmatprep.subr.bf16.mxu0 0
    %131 = vmatpush1.bf16.msra.mxu0 %v110
    %132 = vmatprep.subr.bf16.mxu0 0
    %133 = vmatpush1.bf16.msra.mxu0 %v111
    %134 = vmatprep.subr.bf16.mxu0 0
    %135 = vmatpush1.bf16.msra.mxu0 %v112
    %136 = vmatprep.subr.bf16.mxu0 0
    %137 = vmatpush1.bf16.msra.mxu0 %v113
    %138 = vmatprep.subr.bf16.mxu0 0
    %139 = vmatpush1.bf16.msra.mxu0 0
    %140 = vmatprep.subr.bf16.mxu0 0
    %141 = vmatpush1.bf16.msra.mxu0 0
    %142 = vmatprep.subr.bf16.mxu0 0
    %143 = vmatpush1.bf16.msra.mxu0 0
    %144 = vmatprep.subr.bf16.mxu0 0
    %145 = vmatpush1.bf16.msra.mxu0 0
    %146 = vmatprep.subr.bf16.mxu0 0
    %147 = vmatpush1.bf16.msra.mxu0 0
    %148 = vmatprep.subr.bf16.mxu0 0
    %149 = vmatpush1.bf16.msra.mxu0 0
    %150 = vmatprep.subr.bf16.mxu0 0
    %151 = vmatpush1.bf16.msra.mxu0 0
    %152 = vmatprep.subr.bf16.mxu0 0
    %153 = vmatpush1.bf16.msra.mxu0 0
    %154 = vmatprep.mubr.bf16.mxu0 0
    %155 = vmatmul.mubr.bf16.gmra.mrb[0].mxu0 %v72
    %v156 = vpop.f32.mrb[0].mxu0
    %v157 = vadd.f32 0.0, %v156
    %v158 = vpop.f32.mrb[0].mxu0
    %v159 = vpop.f32.mrb[0].mxu0
    %v160 = vadd.f32 0.0, %v159
    %v161 = vpop.f32.mrb[0].mxu0
    %162 = vdwg.mxu0
    %v163 = vadd.f32 %v48, %v157
    %v164 = vadd.f32 %v49, %v160
    %vm165 = vcmask 261120
    %166 = vst.msk [vmem:[#allocation2] sm:$0xff] %vm165, %v163
    %167 = vst.msk [vmem:[#allocation2 + $0x8] sm:$0xff] %vm165, %v164
    // Predicated region
    $region22: #{_lambda_.16} parent=1 // pred_check
      %p168 = pneg %p41
    $region23: #{_lambda_.16} parent=1 // pred_check_branch
      %170 = sbr.rel (%p168) target = $region25
    $region24: #{_lambda_.16} parent=1 // pred_region
      %v171 = vld [vmem:[#allocation2] sm:$0xff]
      %v172 = vld [vmem:[#allocation2 + $0x8] sm:$0xff]
      %173 = vst.msk [vmem:[#allocation8] sm:$0xff] %vm165, %v171
      %174 = vst.msk [vmem:[#allocation8 + $0x8] sm:$0xff] %vm165, %v172
    $region25: #{_lambda_.16} parent=1 // pred_fallthru
      _
    // Predicated region
    $region26: #{_lambda_.16} parent=1 // pred_check
      _
    $region27: #{_lambda_.16} parent=1 // pred_check_branch
      %176 = sbr.rel (0) target = $region29
    $region28: #{_lambda_.16} parent=1 // pred_region
      %s178 = ssub.s32 256, 256
      %179 = vsyncadd [#allocation5], %s178
      %s180 = sshll.u32 [#allocation8], 4
      %s181 = int_to_ptr.vmem [resolvable:$true] %s180
      %186 = dma.vmem_to_hbm [thread:$0]  %s181, 256, %s2, [#allocation5], 128, 128, 8
    $region29: #{_lambda_.16} parent=1 // pred_fallthru
      _
    // Predicated region
    $region30: #{_lambda_.16} parent=1 // pred_check
      _
    $region31: #{_lambda_.16} parent=1 // pred_check_branch
      %188 = sbr.rel (0) target = $region33
    $region32: #{_lambda_.16} parent=1 // pred_region
      %189 = dma.done [#allocation5], 256
    $region33: #{_lambda_.16} parent=1 // pred_fallthru
      _
    %190 = vsyncpa [#allocation4], 1
    %191 = vsyncpa [#allocation7], 1
    %192 = vsyncpa [#allocation5], 1

// kernel: _lambda_.23
$region0: #{_lambda_.23}
  #allocation0 [shape = 'u32[]', space=smem, size = 0x4, offset = 0x4, fixed_abs, tag = 'smem constant byte address 0x4 - core index']
  #allocation1 [shape = 'u32[144,128]{1,0:T(1,128)}', space=vmem, size = 0x12000, scoped, tag = 'internal scratch']
  #allocation2 [shape = 'bf16[16,32]{1,0:T(16,128)(2,1)}', space=vmem, size = 0x1000, scoped, tag = 'scratch operand']
  %s0 = inlined_call_operand.hbm [shape: bf16[16,32], index: 0, kind: input, shape index: {}]
  %s1 = inlined_call_operand.hbm [shape: f32[1,32], index: 1, kind: input, shape index: {}]
  %s2 = inlined_call_operand.hbm [shape: f32[1,32], index: 2, kind: input, shape index: {}]
  %s3 = inlined_call_operand.hbm [shape: bf16[32,128], index: 3, kind: input, shape index: {}]
  %s4 = inlined_call_operand.hbm [shape: f32[1,128], index: 4, kind: input, shape index: {}]
  %s5 = inlined_call_operand.hbm [shape: f32[16,128], index: 5, kind: output, shape index: {}]
  %s6 = sld [smem:[#allocation0]]
  $region54: #{_lambda_.23} parent=0
    _
  %s8 = ssub.s32 1, %s6
  %s9 = scalar_select 0, %s8, %s6
  $region1: #{_lambda_.23} parent=0
    #allocation3 [shape = 'u8[4096]{0}', space=vmem, size = 0x1000, scoped, tag = 'input window, operand 0, single buffered']
    #allocation4 [shape = 's32[1]{0}', space=sflag, size = 0x4, scoped, tag = 'scoped memory for _lambda_.23']
    #allocation5 [shape = 's32[1]{0}', space=sflag, size = 0x4, scoped, tag = 'scoped memory for _lambda_.23']
    #allocation6 [shape = 'u8[512]{0}', space=vmem, size = 0x400, scoped, tag = 'input window, operand 1, single buffered']
    #allocation7 [shape = 's32[1]{0}', space=sflag, size = 0x4, scoped, tag = 'scoped memory for _lambda_.23']
    #allocation8 [shape = 'u8[512]{0}', space=vmem, size = 0x400, scoped, tag = 'input window, operand 2, single buffered']
    #allocation9 [shape = 'u8[8192]{0}', space=vmem, size = 0x2000, scoped, tag = 'input window, operand 3, single buffered']
    #allocation10 [shape = 's32[1]{0}', space=sflag, size = 0x4, scoped, tag = 'scoped memory for _lambda_.23']
    #allocation11 [shape = 'u8[512]{0}', space=vmem, size = 0x400, scoped, tag = 'input window, operand 4, single buffered']
    #allocation12 [shape = 'u8[8192]{0}', space=vmem, size = 0x2000, scoped, tag = 'output window, operand 0, single buffered']
    %10 = vsyncpa [#allocation4], 0
    %11 = vsyncpa [#allocation7], 0
    %12 = vsyncpa [#allocation10], 0
    %13 = vsyncpa [#allocation5], 0
    // Predicated region
    $region2: #{_lambda_.23} parent=1 // pred_check
      _
    $region3: #{_lambda_.23} parent=1 // pred_check_branch
      %15 = sbr.rel (0) target = $region5
    $region4: #{_lambda_.23} parent=1 // pred_region
      %s17 = ssub.s32 128, 128
      %18 = vsyncadd [#allocation4], %s17
      %s19 = sshll.u32 [#allocation3], 4
      %s20 = int_to_ptr.vmem [resolvable:$true] %s19
      %25 = dma.hbm_to_vmem [thread:$0]  %s0, 128, %s20, [#allocation4], 64, 64, 4
    $region5: #{_lambda_.23} parent=1 // pred_fallthru
      _
    // Predicated region
    $region6: #{_lambda_.23} parent=1 // pred_check
      _
    $region7: #{_lambda_.23} parent=1 // pred_check_branch
      %27 = sbr.rel (0) target = $region9
    $region8: #{_lambda_.23} parent=1 // pred_region
      %s29 = ssub.s32 16, 16
      %30 = vsyncadd [#allocation7], %s29
      %s32 = sshll.u32 [#allocation6], 4
      %s33 = int_to_ptr.vmem [resolvable:$true] %s32
      %35 = dma.hbm_to_vmem [thread:$0]  %s1, 16, %s33, [#allocation7]
    $region9: #{_lambda_.23} parent=1 // pred_fallthru
      _
    // Predicated region
    $region10: #{_lambda_.23} parent=1 // pred_check
      _
    $region11: #{_lambda_.23} parent=1 // pred_check_branch
      %37 = sbr.rel (0) target = $region13
    $region12: #{_lambda_.23} parent=1 // pred_region
      %s39 = ssub.s32 16, 16
      %40 = vsyncadd [#allocation7], %s39
      %s42 = sshll.u32 [#allocation8], 4
      %s43 = int_to_ptr.vmem [resolvable:$true] %s42
      %45 = dma.hbm_to_vmem [thread:$0]  %s2, 16, %s43, [#allocation7]
    $region13: #{_lambda_.23} parent=1 // pred_fallthru
      _
    // Predicated region
    $region14: #{_lambda_.23} parent=1 // pred_check
      _
    $region15: #{_lambda_.23} parent=1 // pred_check_branch
      %47 = sbr.rel (0) target = $region17
    $region16: #{_lambda_.23} parent=1 // pred_region
      %s49 = ssub.s32 256, 256
      %50 = vsyncadd [#allocation10], %s49
      %s51 = sshll.u32 [#allocation9], 4
      %s52 = int_to_ptr.vmem [resolvable:$true] %s51
      %57 = dma.hbm_to_vmem [thread:$0]  %s3, 256, %s52, [#allocation10], 64, 64, 4
    $region17: #{_lambda_.23} parent=1 // pred_fallthru
      _
    // Predicated region
    $region18: #{_lambda_.23} parent=1 // pred_check
      _
    $region19: #{_lambda_.23} parent=1 // pred_check_branch
      %59 = sbr.rel (0) target = $region21
    $region20: #{_lambda_.23} parent=1 // pred_region
      %s61 = ssub.s32 16, 16
      %62 = vsyncadd [#allocation10], %s61
      %s64 = sshll.u32 [#allocation11], 4
      %s65 = int_to_ptr.vmem [resolvable:$true] %s64
      %67 = dma.hbm_to_vmem [thread:$0]  %s4, 16, %s65, [#allocation10]
    $region21: #{_lambda_.23} parent=1 // pred_fallthru
      _
    // Predicated region
    $region22: #{_lambda_.23} parent=1 // pred_check
      _
    $region23: #{_lambda_.23} parent=1 // pred_check_branch
      %69 = sbr.rel (0) target = $region25
    $region24: #{_lambda_.23} parent=1 // pred_region
      %70 = dma.done [#allocation4], 128
    $region25: #{_lambda_.23} parent=1 // pred_fallthru
      _
    // Predicated region
    $region26: #{_lambda_.23} parent=1 // pred_check
      _
    $region27: #{_lambda_.23} parent=1 // pred_check_branch
      %72 = sbr.rel (0) target = $region29
    $region28: #{_lambda_.23} parent=1 // pred_region
      %73 = dma.done [#allocation7], 16
    $region29: #{_lambda_.23} parent=1 // pred_fallthru
      _
    // Predicated region
    $region30: #{_lambda_.23} parent=1 // pred_check
      _
    $region31: #{_lambda_.23} parent=1 // pred_check_branch
      %75 = sbr.rel (0) target = $region33
    $region32: #{_lambda_.23} parent=1 // pred_region
      %76 = dma.done [#allocation7], 16
    $region33: #{_lambda_.23} parent=1 // pred_fallthru
      _
    // Predicated region
    $region34: #{_lambda_.23} parent=1 // pred_check
      _
    $region35: #{_lambda_.23} parent=1 // pred_check_branch
      %78 = sbr.rel (0) target = $region37
    $region36: #{_lambda_.23} parent=1 // pred_region
      %79 = dma.done [#allocation10], 256
    $region37: #{_lambda_.23} parent=1 // pred_fallthru
      _
    // Predicated region
    $region38: #{_lambda_.23} parent=1 // pred_check
      _
    $region39: #{_lambda_.23} parent=1 // pred_check_branch
      %81 = sbr.rel (0) target = $region41
    $region40: #{_lambda_.23} parent=1 // pred_region
      %82 = dma.done [#allocation10], 16
    $region41: #{_lambda_.23} parent=1 // pred_fallthru
      _
    %p84 = scmp.eq.s32.totalorder 0, 0
    // Predicated region
    $region42: #{_lambda_.23} parent=1 // pred_check
      %p85 = pneg %p84
    $region43: #{_lambda_.23} parent=1 // pred_check_branch
      %87 = sbr.rel (%p85) target = $region45
    $region44: #{_lambda_.23} parent=1 // pred_region
      %v88 = vld [vmem:[#allocation3] sm:$0xf]
      %v89 = vld [vmem:[#allocation3 + $0x4] sm:$0xf]
      %v90 = vunpack.c.l.bf16 %v88
      %v91 = vunpack.c.l.bf16 %v89
      %vm92 = vcmask 261120
      %v93 = vsel %vm92, %v90, 0.0
      %94 = vadd.xlane.f32.xlu0 %v93
      %v95 = vpop.xlane.xlu0 %94
      %v96 = vsel %vm92, %v91, 0.0
      %97 = vadd.xlane.f32.xlu0 %v96
      %v98 = vpop.xlane.xlu0 %97
      %v99 = vrcp.pop 32.0
      %v100 = vmul.f32 %v95, %v99
      %v101 = vmul.f32 %v98, %v99
      %v102 = vsub.f32 %v90, %v100
      %v103 = vsub.f32 %v91, %v101
      %v104 = vmul.f32 %v102, %v102
      %v105 = vmul.f32 %v103, %v103
      %v106 = vsel %vm92, %v104, 0.0
      %107 = vadd.xlane.f32.xlu0 %v106
      %v108 = vpop.xlane.xlu0 %107
      %v109 = vsel %vm92, %v105, 0.0
      %110 = vadd.xlane.f32.xlu0 %v109
      %v111 = vpop.xlane.xlu0 %110
      %v112 = vmul.f32 %v108, %v99
      %v113 = vmul.f32 %v111, %v99
      %v114 = vadd.f32 %v112, 1e-12
      %v115 = vadd.f32 %v113, 1e-12
      %v116 = vrsqrt.pop %v114
      %v117 = vrsqrt.pop %v115
      %v118 = vmul.f32 %v102, %v116
      %v119 = vmul.f32 %v103, %v117
      %v120 = vld [vmem:[#allocation6] sm:$0x1]
      %v122 = vlaneseq
      %v123 = vshrl.u32 %v122, 7
      %v124 = vsub.s32 0, %v123
      %v125 = vrot.slane %v120, %v124
      %v127 = vmul.f32 %v118, %v125
      %v128 = vmul.f32 %v119, %v125
      %v129 = vld [vmem:[#allocation8] sm:$0x1]
      %v131 = vlaneseq
      %v132 = vshrl.u32 %v131, 7
      %v133 = vsub.s32 0, %v132
      %v134 = vrot.slane %v129, %v133
      %v136 = vadd.f32 %v127, %v134
      %v137 = vadd.f32 %v128, %v134
      %v138 = vpack.c.bf16 %v137, %v136
      %139 = vst.msk [vmem:[#allocation2] sm:$0xff] %vm92, %v138
    $region45: #{_lambda_.23} parent=1 // pred_fallthru
      _
    %v140 = vld [vmem:[#allocation2] sm:$0xff]
    %v141 = vld [vmem:[#allocation9] sm:$0xf]
    %v142 = vld [vmem:[#allocation9 + $0x4] sm:$0xf]
    %v143 = vld [vmem:[#allocation9 + $0x8] sm:$0xf]
    %v144 = vld [vmem:[#allocation9 + $0xc] sm:$0xf]
    %v145 = vld [vmem:[#allocation11] sm:$0x1]
    %v147 = vlaneseq
    %v148 = vshrl.u32 %v147, 7
    %v149 = vsub.s32 0, %v148
    %v150 = vrot.slane %v145, %v149
    %v156 = vunpack.c.l.b16 %v141
    %v157 = vunpack.c.l.b16 %v142
    %v158 = vunpack.c.l.b16 %v143
    %v159 = vunpack.c.l.b16 %v144
    %v160 = vpack.c.b16 %v157, %v156
    %v161 = vpack.c.b16 %v159, %v158
    %vm164 = vcmask 261120
    %v166 = vsel %vm164, %v140, 0
    %168 = vmatprep.subr.bf16.mxu0 0
    %169 = vmatpush1.bf16.msra.mxu0 %v160
    %170 = vmatprep.subr.bf16.mxu0 0
    %171 = vmatpush1.bf16.msra.mxu0 %v161
    %172 = vmatprep.subr.bf16.mxu0 0
    %173 = vmatpush1.bf16.msra.mxu0 0
    %174 = vmatprep.subr.bf16.mxu0 0
    %175 = vmatpush1.bf16.msra.mxu0 0
    %176 = vmatprep.subr.bf16.mxu0 0
    %177 = vmatpush1.bf16.msra.mxu0 0
    %178 = vmatprep.subr.bf16.mxu0 0
    %179 = vmatpush1.bf16.msra.mxu0 0
    %180 = vmatprep.subr.bf16.mxu0 0
    %181 = vmatpush1.bf16.msra.mxu0 0
    %182 = vmatprep.subr.bf16.mxu0 0
    %183 = vmatpush1.bf16.msra.mxu0 0
    %184 = vmatprep.subr.bf16.mxu0 0
    %185 = vmatpush1.bf16.msra.mxu0 0
    %186 = vmatprep.subr.bf16.mxu0 0
    %187 = vmatpush1.bf16.msra.mxu0 0
    %188 = vmatprep.subr.bf16.mxu0 0
    %189 = vmatpush1.bf16.msra.mxu0 0
    %190 = vmatprep.subr.bf16.mxu0 0
    %191 = vmatpush1.bf16.msra.mxu0 0
    %192 = vmatprep.subr.bf16.mxu0 0
    %193 = vmatpush1.bf16.msra.mxu0 0
    %194 = vmatprep.subr.bf16.mxu0 0
    %195 = vmatpush1.bf16.msra.mxu0 0
    %196 = vmatprep.subr.bf16.mxu0 0
    %197 = vmatpush1.bf16.msra.mxu0 0
    %198 = vmatprep.subr.bf16.mxu0 0
    %199 = vmatpush1.bf16.msra.mxu0 0
    %200 = vmatprep.mubr.bf16.mxu0 0
    %201 = vmatmul.mubr.bf16.gmra.mrb[0].mxu0 %v166
    %v202 = vpop.f32.mrb[0].mxu0
    %v203 = vadd.f32 %v150, %v202
    %v204 = vpop.f32.mrb[0].mxu0
    %v205 = vpop.f32.mrb[0].mxu0
    %v206 = vadd.f32 %v150, %v205
    %v207 = vpop.f32.mrb[0].mxu0
    %208 = vdwg.mxu0
    %209 = vst [vmem:[#allocation12] sm:$0xff] %v203
    %210 = vst [vmem:[#allocation12 + $0x8] sm:$0xff] %v206
    // Predicated region
    $region46: #{_lambda_.23} parent=1 // pred_check
      _
    $region47: #{_lambda_.23} parent=1 // pred_check_branch
      %212 = sbr.rel (0) target = $region49
    $region48: #{_lambda_.23} parent=1 // pred_region
      %s214 = ssub.s32 256, 256
      %215 = vsyncadd [#allocation5], %s214
      %s216 = sshll.u32 [#allocation12], 4
      %s217 = int_to_ptr.vmem [resolvable:$true] %s216
      %222 = dma.vmem_to_hbm [thread:$0]  %s217, 256, %s5, [#allocation5], 128, 128, 8
    $region49: #{_lambda_.23} parent=1 // pred_fallthru
      _
    // Predicated region
    $region50: #{_lambda_.23} parent=1 // pred_check
      _
    $region51: #{_lambda_.23} parent=1 // pred_check_branch
      %224 = sbr.rel (0) target = $region53
    $region52: #{_lambda_.23} parent=1 // pred_region
      %225 = dma.done [#allocation5], 256
    $region53: #{_lambda_.23} parent=1 // pred_fallthru
      _
    %226 = vsyncpa [#allocation4], 1
    %227 = vsyncpa [#allocation7], 1
    %228 = vsyncpa [#allocation10], 1
    %229 = vsyncpa [#allocation5], 1

// kernel: _lambda_.22
$region0: #{_lambda_.22}
  #allocation0 [shape = 'u32[]', space=smem, size = 0x4, offset = 0x4, fixed_abs, tag = 'smem constant byte address 0x4 - core index']
  #allocation1 [shape = 'u32[144,128]{1,0:T(1,128)}', space=vmem, size = 0x12000, scoped, tag = 'internal scratch']
  #allocation2 [shape = 'bf16[16,32]{1,0:T(16,128)(2,1)}', space=vmem, size = 0x1000, scoped, tag = 'scratch operand']
  %s0 = inlined_call_operand.hbm [shape: f32[16,32], index: 0, kind: input, shape index: {}]
  %s1 = inlined_call_operand.hbm [shape: f32[1,32], index: 1, kind: input, shape index: {}]
  %s2 = inlined_call_operand.hbm [shape: f32[1,32], index: 2, kind: input, shape index: {}]
  %s3 = inlined_call_operand.hbm [shape: bf16[32,32], index: 3, kind: input, shape index: {}]
  %s4 = inlined_call_operand.hbm [shape: f32[1,32], index: 4, kind: input, shape index: {}]
  %s5 = inlined_call_operand.hbm [shape: bf16[16,32], index: 5, kind: output, shape index: {}]
  %s6 = sld [smem:[#allocation0]]
  $region54: #{_lambda_.22} parent=0
    _
  %s8 = ssub.s32 1, %s6
  %s9 = scalar_select 0, %s8, %s6
  $region1: #{_lambda_.22} parent=0
    #allocation3 [shape = 'u8[8192]{0}', space=vmem, size = 0x2000, scoped, tag = 'input window, operand 0, single buffered']
    #allocation4 [shape = 's32[1]{0}', space=sflag, size = 0x4, scoped, tag = 'scoped memory for _lambda_.22']
    #allocation5 [shape = 's32[1]{0}', space=sflag, size = 0x4, scoped, tag = 'scoped memory for _lambda_.22']
    #allocation6 [shape = 'u8[512]{0}', space=vmem, size = 0x400, scoped, tag = 'input window, operand 1, single buffered']
    #allocation7 [shape = 's32[1]{0}', space=sflag, size = 0x4, scoped, tag = 'scoped memory for _lambda_.22']
    #allocation8 [shape = 'u8[512]{0}', space=vmem, size = 0x400, scoped, tag = 'input window, operand 2, single buffered']
    #allocation9 [shape = 'u8[8192]{0}', space=vmem, size = 0x2000, scoped, tag = 'input window, operand 3, single buffered']
    #allocation10 [shape = 's32[1]{0}', space=sflag, size = 0x4, scoped, tag = 'scoped memory for _lambda_.22']
    #allocation11 [shape = 'u8[512]{0}', space=vmem, size = 0x400, scoped, tag = 'input window, operand 4, single buffered']
    #allocation12 [shape = 'u8[4096]{0}', space=vmem, size = 0x1000, scoped, tag = 'output window, operand 0, single buffered']
    %10 = vsyncpa [#allocation4], 0
    %11 = vsyncpa [#allocation7], 0
    %12 = vsyncpa [#allocation10], 0
    %13 = vsyncpa [#allocation5], 0
    // Predicated region
    $region2: #{_lambda_.22} parent=1 // pred_check
      _
    $region3: #{_lambda_.22} parent=1 // pred_check_branch
      %15 = sbr.rel (0) target = $region5
    $region4: #{_lambda_.22} parent=1 // pred_region
      %s17 = ssub.s32 256, 256
      %18 = vsyncadd [#allocation4], %s17
      %s19 = sshll.u32 [#allocation3], 4
      %s20 = int_to_ptr.vmem [resolvable:$true] %s19
      %25 = dma.hbm_to_vmem [thread:$0]  %s0, 256, %s20, [#allocation4], 128, 128, 8
    $region5: #{_lambda_.22} parent=1 // pred_fallthru
      _
    // Predicated region
    $region6: #{_lambda_.22} parent=1 // pred_check
      _
    $region7: #{_lambda_.22} parent=1 // pred_check_branch
      %27 = sbr.rel (0) target = $region9
    $region8: #{_lambda_.22} parent=1 // pred_region
      %s29 = ssub.s32 16, 16
      %30 = vsyncadd [#allocation7], %s29
      %s32 = sshll.u32 [#allocation6], 4
      %s33 = int_to_ptr.vmem [resolvable:$true] %s32
      %35 = dma.hbm_to_vmem [thread:$0]  %s1, 16, %s33, [#allocation7]
    $region9: #{_lambda_.22} parent=1 // pred_fallthru
      _
    // Predicated region
    $region10: #{_lambda_.22} parent=1 // pred_check
      _
    $region11: #{_lambda_.22} parent=1 // pred_check_branch
      %37 = sbr.rel (0) target = $region13
    $region12: #{_lambda_.22} parent=1 // pred_region
      %s39 = ssub.s32 16, 16
      %40 = vsyncadd [#allocation7], %s39
      %s42 = sshll.u32 [#allocation8], 4
      %s43 = int_to_ptr.vmem [resolvable:$true] %s42
      %45 = dma.hbm_to_vmem [thread:$0]  %s2, 16, %s43, [#allocation7]
    $region13: #{_lambda_.22} parent=1 // pred_fallthru
      _
    // Predicated region
    $region14: #{_lambda_.22} parent=1 // pred_check
      _
    $region15: #{_lambda_.22} parent=1 // pred_check_branch
      %47 = sbr.rel (0) target = $region17
    $region16: #{_lambda_.22} parent=1 // pred_region
      %s49 = ssub.s32 256, 256
      %50 = vsyncadd [#allocation10], %s49
      %s51 = sshll.u32 [#allocation9], 4
      %s52 = int_to_ptr.vmem [resolvable:$true] %s51
      %57 = dma.hbm_to_vmem [thread:$0]  %s3, 256, %s52, [#allocation10], 64, 64, 4
    $region17: #{_lambda_.22} parent=1 // pred_fallthru
      _
    // Predicated region
    $region18: #{_lambda_.22} parent=1 // pred_check
      _
    $region19: #{_lambda_.22} parent=1 // pred_check_branch
      %59 = sbr.rel (0) target = $region21
    $region20: #{_lambda_.22} parent=1 // pred_region
      %s61 = ssub.s32 16, 16
      %62 = vsyncadd [#allocation10], %s61
      %s64 = sshll.u32 [#allocation11], 4
      %s65 = int_to_ptr.vmem [resolvable:$true] %s64
      %67 = dma.hbm_to_vmem [thread:$0]  %s4, 16, %s65, [#allocation10]
    $region21: #{_lambda_.22} parent=1 // pred_fallthru
      _
    // Predicated region
    $region22: #{_lambda_.22} parent=1 // pred_check
      _
    $region23: #{_lambda_.22} parent=1 // pred_check_branch
      %69 = sbr.rel (0) target = $region25
    $region24: #{_lambda_.22} parent=1 // pred_region
      %70 = dma.done [#allocation4], 256
    $region25: #{_lambda_.22} parent=1 // pred_fallthru
      _
    // Predicated region
    $region26: #{_lambda_.22} parent=1 // pred_check
      _
    $region27: #{_lambda_.22} parent=1 // pred_check_branch
      %72 = sbr.rel (0) target = $region29
    $region28: #{_lambda_.22} parent=1 // pred_region
      %73 = dma.done [#allocation7], 16
    $region29: #{_lambda_.22} parent=1 // pred_fallthru
      _
    // Predicated region
    $region30: #{_lambda_.22} parent=1 // pred_check
      _
    $region31: #{_lambda_.22} parent=1 // pred_check_branch
      %75 = sbr.rel (0) target = $region33
    $region32: #{_lambda_.22} parent=1 // pred_region
      %76 = dma.done [#allocation7], 16
    $region33: #{_lambda_.22} parent=1 // pred_fallthru
      _
    // Predicated region
    $region34: #{_lambda_.22} parent=1 // pred_check
      _
    $region35: #{_lambda_.22} parent=1 // pred_check_branch
      %78 = sbr.rel (0) target = $region37
    $region36: #{_lambda_.22} parent=1 // pred_region
      %79 = dma.done [#allocation10], 256
    $region37: #{_lambda_.22} parent=1 // pred_fallthru
      _
    // Predicated region
    $region38: #{_lambda_.22} parent=1 // pred_check
      _
    $region39: #{_lambda_.22} parent=1 // pred_check_branch
      %81 = sbr.rel (0) target = $region41
    $region40: #{_lambda_.22} parent=1 // pred_region
      %82 = dma.done [#allocation10], 16
    $region41: #{_lambda_.22} parent=1 // pred_fallthru
      _
    %p84 = scmp.eq.s32.totalorder 0, 0
    // Predicated region
    $region42: #{_lambda_.22} parent=1 // pred_check
      %p85 = pneg %p84
    $region43: #{_lambda_.22} parent=1 // pred_check_branch
      %87 = sbr.rel (%p85) target = $region45
    $region44: #{_lambda_.22} parent=1 // pred_region
      %v88 = vld [vmem:[#allocation3] sm:$0xff]
      %v89 = vld [vmem:[#allocation3 + $0x8] sm:$0xff]
      %vm90 = vcmask 261120
      %v91 = vsel %vm90, %v88, 0.0
      %92 = vadd.xlane.f32.xlu0 %v91
      %v93 = vpop.xlane.xlu0 %92
      %v94 = vsel %vm90, %v89, 0.0
      %95 = vadd.xlane.f32.xlu0 %v94
      %v96 = vpop.xlane.xlu0 %95
      %v97 = vrcp.pop 32.0
      %v98 = vmul.f32 %v93, %v97
      %v99 = vmul.f32 %v96, %v97
      %v100 = vsub.f32 %v88, %v98
      %v101 = vsub.f32 %v89, %v99
      %v102 = vmul.f32 %v100, %v100
      %v103 = vmul.f32 %v101, %v101
      %v104 = vsel %vm90, %v102, 0.0
      %105 = vadd.xlane.f32.xlu0 %v104
      %v106 = vpop.xlane.xlu0 %105
      %v107 = vsel %vm90, %v103, 0.0
      %108 = vadd.xlane.f32.xlu0 %v107
      %v109 = vpop.xlane.xlu0 %108
      %v110 = vmul.f32 %v106, %v97
      %v111 = vmul.f32 %v109, %v97
      %v112 = vadd.f32 %v110, 1e-12
      %v113 = vadd.f32 %v111, 1e-12
      %v114 = vrsqrt.pop %v112
      %v115 = vrsqrt.pop %v113
      %v116 = vmul.f32 %v100, %v114
      %v117 = vmul.f32 %v101, %v115
      %v118 = vld [vmem:[#allocation6] sm:$0x1]
      %v120 = vlaneseq
      %v121 = vshrl.u32 %v120, 7
      %v122 = vsub.s32 0, %v121
      %v123 = vrot.slane %v118, %v122
      %v125 = vmul.f32 %v116, %v123
      %v126 = vmul.f32 %v117, %v123
      %v127 = vld [vmem:[#allocation8] sm:$0x1]
      %v129 = vlaneseq
      %v130 = vshrl.u32 %v129, 7
      %v131 = vsub.s32 0, %v130
      %v132 = vrot.slane %v127, %v131
      %v134 = vadd.f32 %v125, %v132
      %v135 = vadd.f32 %v126, %v132
      %v136 = vpack.c.bf16 %v135, %v134
      %137 = vst.msk [vmem:[#allocation2] sm:$0xff] %vm90, %v136
    $region45: #{_lambda_.22} parent=1 // pred_fallthru
      _
    %v138 = vld [vmem:[#allocation2] sm:$0xff]
    %v139 = vld [vmem:[#allocation9] sm:$0xf]
    %v140 = vld [vmem:[#allocation9 + $0x4] sm:$0xf]
    %v141 = vld [vmem:[#allocation9 + $0x8] sm:$0xf]
    %v142 = vld [vmem:[#allocation9 + $0xc] sm:$0xf]
    %v143 = vld [vmem:[#allocation11] sm:$0x1]
    %v145 = vlaneseq
    %v146 = vshrl.u32 %v145, 7
    %v147 = vsub.s32 0, %v146
    %v148 = vrot.slane %v143, %v147
    %v154 = vunpack.c.l.b16 %v139
    %v155 = vunpack.c.l.b16 %v140
    %v156 = vunpack.c.l.b16 %v141
    %v157 = vunpack.c.l.b16 %v142
    %v158 = vpack.c.b16 %v155, %v154
    %v159 = vpack.c.b16 %v157, %v156
    %vm162 = vcmask 261120
    %v164 = vsel %vm162, %v138, 0
    %166 = vmatprep.subr.bf16.mxu0 0
    %167 = vmatpush1.bf16.msra.mxu0 %v158
    %168 = vmatprep.subr.bf16.mxu0 0
    %169 = vmatpush1.bf16.msra.mxu0 %v159
    %170 = vmatprep.subr.bf16.mxu0 0
    %171 = vmatpush1.bf16.msra.mxu0 0
    %172 = vmatprep.subr.bf16.mxu0 0
    %173 = vmatpush1.bf16.msra.mxu0 0
    %174 = vmatprep.subr.bf16.mxu0 0
    %175 = vmatpush1.bf16.msra.mxu0 0
    %176 = vmatprep.subr.bf16.mxu0 0
    %177 = vmatpush1.bf16.msra.mxu0 0
    %178 = vmatprep.subr.bf16.mxu0 0
    %179 = vmatpush1.bf16.msra.mxu0 0
    %180 = vmatprep.subr.bf16.mxu0 0
    %181 = vmatpush1.bf16.msra.mxu0 0
    %182 = vmatprep.subr.bf16.mxu0 0
    %183 = vmatpush1.bf16.msra.mxu0 0
    %184 = vmatprep.subr.bf16.mxu0 0
    %185 = vmatpush1.bf16.msra.mxu0 0
    %186 = vmatprep.subr.bf16.mxu0 0
    %187 = vmatpush1.bf16.msra.mxu0 0
    %188 = vmatprep.subr.bf16.mxu0 0
    %189 = vmatpush1.bf16.msra.mxu0 0
    %190 = vmatprep.subr.bf16.mxu0 0
    %191 = vmatpush1.bf16.msra.mxu0 0
    %192 = vmatprep.subr.bf16.mxu0 0
    %193 = vmatpush1.bf16.msra.mxu0 0
    %194 = vmatprep.subr.bf16.mxu0 0
    %195 = vmatpush1.bf16.msra.mxu0 0
    %196 = vmatprep.subr.bf16.mxu0 0
    %197 = vmatpush1.bf16.msra.mxu0 0
    %198 = vmatprep.mubr.bf16.mxu0 0
    %199 = vmatmul.mubr.bf16.gmra.mrb[0].mxu0 %v164
    %v200 = vpop.f32.mrb[0].mxu0
    %v201 = vadd.f32 %v148, %v200
    %v202 = vpop.f32.mrb[0].mxu0
    %v203 = vpop.f32.mrb[0].mxu0
    %v204 = vadd.f32 %v148, %v203
    %v205 = vpop.f32.mrb[0].mxu0
    %206 = vdwg.mxu0
    %v207 = vmul.f32 %v201, 0.5
    %v208 = vmul.f32 %v204, 0.5
    %v209 = vmul.f32 %v201, 0.70710677
    %v210 = vmul.f32 %v204, 0.70710677
    %v211 = verf.f32.pop %v209
    %v212 = verf.f32.pop %v210
    %v213 = vadd.f32 %v211, 1.0
    %v214 = vadd.f32 %v212, 1.0
    %v215 = vmul.f32 %v207, %v213
    %v216 = vmul.f32 %v208, %v214
    %v217 = vpack.c.bf16 %v216, %v215
    %v219 = vunpack.c.l.b16 %v217
    %v220 = vunpack.c.h.b16 %v217
    %v221 = vpack.c.b16 %v219, %v219
    %v222 = vpack.c.b16 %v220, %v220
    %vm225 = vcmask 257024
    %226 = vst.msk [vmem:[#allocation12] sm:$0xf] %vm225, %v221
    %227 = vst.msk [vmem:[#allocation12 + $0x4] sm:$0xf] %vm225, %v222
    // Predicated region
    $region46: #{_lambda_.22} parent=1 // pred_check
      _
    $region47: #{_lambda_.22} parent=1 // pred_check_branch
      %229 = sbr.rel (0) target = $region49
    $region48: #{_lambda_.22} parent=1 // pred_region
      %s231 = ssub.s32 128, 128
      %232 = vsyncadd [#allocation5], %s231
      %s233 = sshll.u32 [#allocation12], 4
      %s234 = int_to_ptr.vmem [resolvable:$true] %s233
      %239 = dma.vmem_to_hbm [thread:$0]  %s234, 128, %s5, [#allocation5], 64, 64, 4
    $region49: #{_lambda_.22} parent=1 // pred_fallthru
      _
    // Predicated region
    $region50: #{_lambda_.22} parent=1 // pred_check
      _
    $region51: #{_lambda_.22} parent=1 // pred_check_branch
      %241 = sbr.rel (0) target = $region53
    $region52: #{_lambda_.22} parent=1 // pred_region
      %242 = dma.done [#allocation5], 128
    $region53: #{_lambda_.22} parent=1 // pred_fallthru
      _
    %243 = vsyncpa [#allocation4], 1
    %244 = vsyncpa [#allocation7], 1
    %245 = vsyncpa [#allocation10], 1
    %246 = vsyncpa [#allocation5], 1

</llo_original>
